<compile_context>
chip_gen: v5e
topology: v5e:2x2
jax: 0.10.0
libtpu: 0.0.40
codegen_flags: <defaults>
</compile_context>

<pallas_src>
import functools
import math

import jax
import jax.numpy as jnp
from jax import lax
from jax.experimental import pallas as pl
from jax.experimental.pallas import tpu as pltpu


# --------------------------------------------------------------------------
# helpers
# --------------------------------------------------------------------------
def _round_up(x, m):
    return (x + m - 1) // m * m


@functools.lru_cache(maxsize=None)
def _vmem_limits():
    """(scoped vmem limit, tile-selection budget) derived from the chip."""
    cap = 64 * 1024 * 1024
    try:
        info = pltpu.get_tpu_info()
        cap_attr = getattr(info, "vmem_capacity_bytes", None)
        if cap_attr:
            cap = int(cap_attr)
    except Exception:
        pass
    cap = max(cap, 32 * 1024 * 1024)
    limit = min(cap * 3 // 4, 100 * 1024 * 1024)   # 48MB on v7x, 96MB on v5e/v6e
    budget = limit * 5 // 8                        # leave pipeline headroom
    return int(limit), int(budget)


# --------------------------------------------------------------------------
# Matmul (single K step) with fused bias (+ optional residual) + ReLU.
# Used for every 1x1 conv and the im2col fallbacks.  Weight-stationary: the
# whole (K, N) weight is one block; M sweeps under it with big tiles.
# --------------------------------------------------------------------------
def _mm_kernel(x_ref, w_ref, b_ref, o_ref, *, relu):
    acc = jnp.dot(x_ref[...], w_ref[...], preferred_element_type=jnp.float32)
    acc = acc + b_ref[...]
    if relu:
        acc = jnp.maximum(acc, 0.0)
    o_ref[...] = acc.astype(o_ref.dtype)


def _mm_res_kernel(x_ref, w_ref, b_ref, id_ref, o_ref):
    acc = jnp.dot(x_ref[...], w_ref[...], preferred_element_type=jnp.float32)
    acc = acc + b_ref[...] + id_ref[...].astype(jnp.float32)
    o_ref[...] = jnp.maximum(acc, 0.0).astype(o_ref.dtype)


def _choose_tm(m, k, n, has_id, budget):
    fixed = 2 * k * n * 2 + 8 * n * 4 + (1 << 20)           # dbl-buffered W + slack
    per_row = 2 * k * 2 + 2 * n * 2 + n * 4
    if has_id:
        per_row += 2 * n * 2
    cap = max((budget - fixed) // per_row, 256)
    if m <= cap:
        return m                                            # one full-M block
    return max((int(cap) // 8) * 8, 8)


def _matmul_bn(x, w, bias, *, relu, identity=None):
    """bf16 matmul, f32 accumulate, fused bias (+identity) + optional ReLU."""
    m, k = x.shape
    k2, n = w.shape
    assert k == k2
    limit, budget = _vmem_limits()
    tm = _choose_tm(m, k, n, identity is not None, budget)
    gm = pl.cdiv(m, tm)                                     # partial last block OK

    x_spec = pl.BlockSpec((tm, k), lambda i: (i, 0))
    w_spec = pl.BlockSpec((k, n), lambda i: (0, 0))
    b_spec = pl.BlockSpec((1, n), lambda i: (0, 0))
    o_spec = pl.BlockSpec((tm, n), lambda i: (i, 0))
    cparams = pltpu.CompilerParams(
        dimension_semantics=("parallel",), vmem_limit_bytes=limit)
    out_shape = jax.ShapeDtypeStruct((m, n), jnp.bfloat16)

    if identity is None:
        return pl.pallas_call(
            functools.partial(_mm_kernel, relu=relu),
            out_shape=out_shape,
            grid_spec=pltpu.PrefetchScalarGridSpec(
                num_scalar_prefetch=0, grid=(gm,),
                in_specs=[x_spec, w_spec, b_spec], out_specs=o_spec),
            compiler_params=cparams,
        )(x, w, bias)

    id_spec = pl.BlockSpec((tm, n), lambda i: (i, 0))
    return pl.pallas_call(
        _mm_res_kernel,
        out_shape=out_shape,
        grid_spec=pltpu.PrefetchScalarGridSpec(
            num_scalar_prefetch=0, grid=(gm,),
            in_specs=[x_spec, w_spec, b_spec, id_spec], out_specs=o_spec),
        compiler_params=cparams,
    )(x, w, bias, identity)


# --------------------------------------------------------------------------
# Direct 3x3 / stride-1 conv (+folded FrozenBN bias +ReLU) Pallas kernel.
# Input is zero-padded spatially (wp = round_up(w+2d, 8) columns) and
# flattened to (B, rows*wp, Cin) in HBM.  Each grid step DMAs one halo
# extended row slab into a double-buffered VMEM scratch, concatenates the 9
# shifted tap views into one (rb*wp, 9*Cin) operand and runs a single MXU
# matmul against the (9*Cin, Cout) weight.
# --------------------------------------------------------------------------
def _conv3x3_kernel(x_hbm, w_ref, b_ref, o_ref, xslab, sem,
                    *, rb, wp, wo, d, slab_len):
    bi = pl.program_id(0)
    ri = pl.program_id(1)
    nr = pl.num_programs(1)
    rbwp = rb * wp
    slot = ri % 2

    def _copy(block_idx, s):
        start = pl.multiple_of(block_idx * rbwp, 8)
        return pltpu.make_async_copy(
            x_hbm.at[bi, pl.ds(start, slab_len)], xslab.at[s], sem.at[s])

    # Prime the chain at the start of every batch element.
    @pl.when(ri == 0)
    def _():
        _copy(ri, slot).start()

    # Wait for the slab of the current row block (started here or prefetched
    # by the previous step).
    _copy(ri, slot).wait()

    # Prefetch the next row block's slab into the other buffer.
    @pl.when(ri + 1 < nr)
    def _():
        _copy(ri + 1, 1 - slot).start()

    taps = []
    for ky in range(3):
        for kx in range(3):
            off = (ky * wp + kx) * d                        # static offset
            taps.append(xslab[slot, pl.ds(off, rbwp), :])
    lhs = jnp.concatenate(taps, axis=-1)                    # (rb*wp, 9*Cin) bf16
    acc = jnp.dot(lhs, w_ref[...], preferred_element_type=jnp.float32)
    out = jnp.maximum(acc + b_ref[...], 0.0).astype(o_ref.dtype)
    o_ref[0] = out.reshape(rb, wp, -1)[:, :wo, :]           # drop pad columns


def _pick_row_block(h, d, wp, wo, cin, cout, budget):
    """Largest rb (<= h) whose VMEM footprint stays under `budget`."""
    fixed = 2 * (9 * cin * cout * 2) + cout * 4 + (1 << 20)   # dbl-buffered W
    best = 1
    for rb in range(1, min(h, 128) + 1):
        slab = 2 * ((rb + 2 * d) * wp + 8) * cin * 2          # 2 slab buffers
        lhs = rb * wp * 9 * cin * 2
        acc = rb * wp * cout * 4
        outv = rb * wp * cout * 2
        outb = 2 * rb * wo * cout * 2                         # dbl-buffered out
        if fixed + slab + lhs + acc + outv + outb <= budget:
            best = rb
        else:
            break
    return best


def _conv3x3_direct(x, p, *, dilation):
    bsz, h, w, cin = x.shape
    cout = p["b"].shape[-1]
    d = dilation
    wp = _round_up(w + 2 * d, 8)                  # sublane-aligned padded width
    limit, budget = _vmem_limits()
    rb = _pick_row_block(h, d, wp, w, cin, cout, budget)
    nr = pl.cdiv(h, rb)                           # partial last block allowed
    slab_len = (rb + 2 * d) * wp + 8
    rows_total = nr * rb + 2 * d + 1              # DMA slack for the last slab

    xp = jnp.pad(x, ((0, 0),
                     (d, rows_total - d - h),
                     (d, wp - w - d),
                     (0, 0)))
    xf = xp.reshape(bsz, rows_total * wp, cin)

    kern = functools.partial(_conv3x3_kernel, rb=rb, wp=wp, wo=w, d=d,
                             slab_len=slab_len)
    return pl.pallas_call(
        kern,
        out_shape=jax.ShapeDtypeStruct((bsz, h, w, cout), jnp.bfloat16),
        grid_spec=pltpu.PrefetchScalarGridSpec(
            num_scalar_prefetch=0,
            grid=(bsz, nr),
            in_specs=[
                pl.BlockSpec(memory_space=pl.ANY),               # padded x (HBM)
                pl.BlockSpec((9 * cin, cout), lambda bi, ri: (0, 0)),
                pl.BlockSpec((1, cout), lambda bi, ri: (0, 0)),
            ],
            out_specs=pl.BlockSpec((1, rb, w, cout),
                                   lambda bi, ri: (bi, ri, 0, 0)),
            scratch_shapes=[
                pltpu.VMEM((2, slab_len, cin), jnp.bfloat16),
                pltpu.SemaphoreType.DMA((2,)),
            ],
        ),
        compiler_params=pltpu.CompilerParams(
            dimension_semantics=("parallel", "arbitrary"),
            vmem_limit_bytes=limit),
    )(xf, p["w"], p["b"])


# --------------------------------------------------------------------------
# Remaining conv flavours (im2col fallback for stem / stride-2 3x3; 1x1)
# --------------------------------------------------------------------------
def _conv_im2col(x, p, *, kh, kw, stride, dilation, relu):
    pad = dilation * (kh - 1) // 2
    b, h, w, c = x.shape
    ho = (h + 2 * pad - dilation * (kh - 1) - 1) // stride + 1
    wo = (w + 2 * pad - dilation * (kw - 1) - 1) // stride + 1
    xp = jnp.pad(x, ((0, 0), (pad, pad), (pad, pad), (0, 0)))
    cols = []
    for ky in range(kh):
        for kx in range(kw):
            cols.append(
                xp[:, ky * dilation: ky * dilation + (ho - 1) * stride + 1: stride,
                      kx * dilation: kx * dilation + (wo - 1) * stride + 1: stride, :])
    patches = jnp.concatenate(cols, axis=-1).reshape(b * ho * wo, kh * kw * c)
    y = _matmul_bn(patches, p["w"], p["b"], relu=relu)
    return y.reshape(b, ho, wo, -1)


def _conv1x1(x, p, *, stride, relu):
    if stride != 1:
        x = x[:, ::stride, ::stride, :]
    b, h, w, c = x.shape
    y = _matmul_bn(x.reshape(b * h * w, c), p["w"], p["b"], relu=relu)
    return y.reshape(b, h, w, -1)


def _maxpool_3x3_s2(x):
    # TODO(synk): windowed max handled by XLA's reduce_window, not a Pallas kernel.
    return lax.reduce_window(
        x, jnp.array(-jnp.inf, x.dtype), lax.max,
        window_dimensions=(1, 3, 3, 1),
        window_strides=(1, 2, 2, 1),
        padding=((0, 0), (1, 1), (1, 1), (0, 0)))


# --------------------------------------------------------------------------
# ResNet-101 forward (per-bottleneck jit; static block config)
# --------------------------------------------------------------------------
@functools.partial(jax.jit, static_argnames=("stride", "dilation", "has_ds"))
def _bottleneck(x, p, *, stride, dilation, has_ds):
    out = _conv1x1(x, p["conv1"], stride=1, relu=True)
    if stride == 1:
        out = _conv3x3_direct(out, p["conv2"], dilation=dilation)
    else:
        out = _conv_im2col(out, p["conv2"], kh=3, kw=3, stride=stride,
                           dilation=dilation, relu=True)
    if has_ds:
        identity = _conv1x1(x, p["downsample"], stride=stride, relu=False)
    else:
        identity = x
    b, h, w, _ = out.shape
    n_out = p["conv3"]["w"].shape[-1]
    # conv3 + FrozenBN + residual add + ReLU fused into one matmul epilogue
    y = _matmul_bn(out.reshape(b * h * w, -1), p["conv3"]["w"], p["conv3"]["b"],
                   identity=identity.reshape(b * h * w, n_out), relu=True)
    return y.reshape(b, h, w, n_out)


@jax.jit
def _stem_and_pool(tensors_nchw, stem_p):
    x = jnp.transpose(tensors_nchw, (0, 2, 3, 1)).astype(jnp.bfloat16)  # NHWC
    x = _conv_im2col(x, stem_p, kh=7, kw=7, stride=2, dilation=1, relu=True)
    return _maxpool_3x3_s2(x)


@jax.jit
def _head(x, mask):
    feat = jnp.transpose(x.astype(jnp.float32), (0, 3, 1, 2))   # NCHW f32
    _, hm, wm = mask.shape
    ho, wo = feat.shape[-2], feat.shape[-1]
    # F.interpolate(m[None].float(), size=feat.shape[-2:]).to(bool)[0]  (nearest)
    rows = jnp.floor(jnp.arange(ho) * (hm / ho)).astype(jnp.int32)
    cols = jnp.floor(jnp.arange(wo) * (wm / wo)).astype(jnp.int32)
    mask_out = mask[:, rows][:, :, cols].astype(jnp.bool_)
    return feat, mask_out


def encoder_forward(params, arch, tensors_nchw, mask):
    x = _stem_and_pool(tensors_nchw, params["stem"])
    for a, bp in zip(arch, params["blocks"]):
        x = _bottleneck(x, bp, stride=a["stride"], dilation=a["dilation"],
                        has_ds=a["has_ds"])
    feat, mask_out = _head(x, mask)
    return {"0": (feat, mask_out)}


# --------------------------------------------------------------------------
# Deterministic parameter init (conv weights with folded FrozenBatchNorm2d)
# --------------------------------------------------------------------------
def _init_conv(key, kh, kw, cin, cout):
    std = math.sqrt(2.0 / (kh * kw * cin))
    w = jax.random.normal(key, (kh, kw, cin, cout), jnp.float32) * std
    # FrozenBatchNorm2d buffers at their __init__ values:
    gamma = jnp.ones((cout,), jnp.float32)
    beta = jnp.zeros((cout,), jnp.float32)
    rmean = jnp.zeros((cout,), jnp.float32)
    rvar = jnp.ones((cout,), jnp.float32)
    scale = gamma * jax.lax.rsqrt(rvar + 1e-5)
    bias = beta - rmean * scale
    w = w * scale                            # fold: (x*W)*s + b == x*(W*s) + b
    w = w.reshape(kh * kw * cin, cout)       # (ky,kx,cin) row order == im2col/taps
    return {"w": w.astype(jnp.bfloat16), "b": bias.reshape(1, cout)}


def init_resnet101(key):
    keys = iter(jax.random.split(key, 256))
    params = {"stem": _init_conv(next(keys), 7, 7, 3, 64)}
    blocks, arch = [], []
    inplanes, dilation = 64, 1
    # (planes, blocks, stride, dilate) — resnet101, dilation replaces stride in layer4
    cfg = [(64, 3, 1, False), (128, 4, 2, False), (256, 23, 2, False), (512, 3, 2, True)]
    for planes, nblocks, stride, dilate in cfg:
        prev_dilation = dilation
        if dilate:
            dilation *= stride
            stride = 1
        for bidx in range(nblocks):
            s = stride if bidx == 0 else 1
            d = prev_dilation if bidx == 0 else dilation
            has_ds = bidx == 0 and (stride != 1 or inplanes != planes * 4)
            bp = {
                "conv1": _init_conv(next(keys), 1, 1, inplanes, planes),
                "conv2": _init_conv(next(keys), 3, 3, planes, planes),
                "conv3": _init_conv(next(keys), 1, 1, planes, planes * 4),
            }
            if has_ds:
                bp["downsample"] = _init_conv(next(keys), 1, 1, inplanes, planes * 4)
            blocks.append(bp)
            arch.append({"stride": s, "dilation": d, "has_ds": has_ds})
            inplanes = planes * 4
    params["blocks"] = blocks
    return params, tuple(arch)


# --------------------------------------------------------------------------
if __name__ == "__main__":
    key = jax.random.PRNGKey(0)
    pkey, xkey = jax.random.split(key)
    params, arch = init_resnet101(pkey)

    B, H, W = 2, 64, 64
    tensors = jax.random.normal(xkey, (B, 3, H, W), jnp.float32)
    mask = jnp.zeros((B, H, W), dtype=jnp.bool_)
    mask = mask.at[1, :, 3 * W // 4:].set(True)   # image 1 padded on the right

    out = encoder_forward(params, arch, tensors, mask)
    feat, m = out["0"]
    feat = jax.block_until_ready(feat)
    m = jax.block_until_ready(m)

    assert feat.shape == (B, 2048, H // 16, W // 16), feat.shape
    assert feat.dtype == jnp.float32
    assert m.shape == (B, H // 16, W // 16) and m.dtype == jnp.bool_
    assert bool(jnp.isfinite(feat).all())
    print("KERNEL_OK")
</pallas_src>

<mosaic_0001>
module attributes {stable_mosaic.version = 11 : i64} {
  func.func @_mm_kernel(%arg0: i32, %arg1: memref<2048x147xbf16, #tpu.memory_space<vmem>>, %arg2: memref<147x64xbf16, #tpu.memory_space<vmem>>, %arg3: memref<1x64xf32, #tpu.memory_space<vmem>>, %arg4: memref<2048x64xbf16, #tpu.memory_space<vmem>>) attributes {dimension_semantics = [#tpu.dimension_semantics<parallel>], iteration_bounds = array<i64: 1>, scalar_prefetch = 0 : i64, scratch_operands = 0 : i64, tpu.core_type = #tpu.core_type<tc>, window_params = [{transform_indices = @transform_0, window_bounds = array<i64: 2048, 147>}, {pipeline_mode = #tpu.pipeline_mode<synchronous>, transform_indices = @transform_1, window_bounds = array<i64: 147, 64>}, {pipeline_mode = #tpu.pipeline_mode<synchronous>, transform_indices = @transform_2, window_bounds = array<i64: 1, 64>}, {transform_indices = @transform_3, window_bounds = array<i64: 2048, 64>}]} {
    %c0 = arith.constant 0 : index
    %c0_0 = arith.constant 0 : index
    %0 = vector.load %arg1[%c0, %c0_0] : memref<2048x147xbf16, #tpu.memory_space<vmem>>, vector<2048x147xbf16>
    %c0_1 = arith.constant 0 : index
    %c0_2 = arith.constant 0 : index
    %1 = vector.load %arg2[%c0_1, %c0_2] : memref<147x64xbf16, #tpu.memory_space<vmem>>, vector<147x64xbf16>
    %cst = arith.constant dense<0.000000e+00> : vector<2048x64xf32>
    %2 = tpu.matmul %0, %1, %cst {dimension_numbers = #tpu.dot_dimension_numbers<[1], [0], [0], [1], [0, 0, 1, 1], [], []>} : vector<2048x147xbf16>, vector<147x64xbf16>, vector<2048x64xf32> -> vector<2048x64xf32>
    %c0_3 = arith.constant 0 : index
    %c0_4 = arith.constant 0 : index
    %3 = vector.load %arg3[%c0_3, %c0_4] : memref<1x64xf32, #tpu.memory_space<vmem>>, vector<1x64xf32>
    %4 = vector.broadcast %3 : vector<1x64xf32> to vector<2048x64xf32>
    %5 = arith.addf %2, %4 : vector<2048x64xf32>
    %cst_5 = arith.constant 0.000000e+00 : f32
    %6 = vector.broadcast %cst_5 : f32 to vector<2048x64xf32>
    %7 = arith.maximumf %5, %6 : vector<2048x64xf32>
    %8 = arith.truncf %7 : vector<2048x64xf32> to vector<2048x64xbf16>
    %c0_6 = arith.constant 0 : index
    %c0_7 = arith.constant 0 : index
    %9 = vector.load %arg4[%c0_6, %c0_7] : memref<2048x64xbf16, #tpu.memory_space<vmem>>, vector<2048x64xbf16>
    tpu.vector_store %arg4[%c0_6, %c0_7], %8 {strides = array<i32>} : memref<2048x64xbf16, #tpu.memory_space<vmem>>, vector<2048x64xbf16>,
    return
  }
  func.func @transform_0(%arg0: i32) -> (i32, i32) {
    %c0_i32 = arith.constant 0 : i32
    %c0_i32_0 = arith.constant 0 : i32
    return %arg0, %c0_i32 : i32, i32
  }
  func.func @transform_1(%arg0: i32) -> (i32, i32) {
    %c0_i32 = arith.constant 0 : i32
    %c0_i32_0 = arith.constant 0 : i32
    %c0_i32_1 = arith.constant 0 : i32
    return %c0_i32, %c0_i32_0 : i32, i32
  }
  func.func @transform_2(%arg0: i32) -> (i32, i32) {
    %c0_i32 = arith.constant 0 : i32
    %c0_i32_0 = arith.constant 0 : i32
    %c0_i32_1 = arith.constant 0 : i32
    return %c0_i32, %c0_i32_0 : i32, i32
  }
  func.func @transform_3(%arg0: i32) -> (i32, i32) {
    %c0_i32 = arith.constant 0 : i32
    %c0_i32_0 = arith.constant 0 : i32
    return %arg0, %c0_i32 : i32, i32
  }
}

</mosaic_0001>

<llo_original>
// kernel: _stem_and_pool.1
$region0: #{_stem_and_pool.1}
  #allocation0 [shape = 'u32[]', space=smem, size = 0x4, offset = 0x4, fixed_abs, tag = 'smem constant byte address 0x4 - core index']
  #allocation1 [shape = 'u32[72,128]{1,0:T(1,128)}', space=vmem, size = 0x9000, scoped, tag = 'internal scratch']
  %s0 = inlined_call_operand.vmem [shape: bf16[2048,147], index: 0, kind: input, shape index: {}]
  %s1 = inlined_call_operand.vmem [shape: bf16[147,64], index: 1, kind: input, shape index: {}]
  %s2 = inlined_call_operand.vmem [shape: f32[1,64], index: 2, kind: input, shape index: {}]
  %s3 = inlined_call_operand.vmem [shape: bf16[2048,64], index: 3, kind: output, shape index: {}]
  %s4 = sld [smem:[#allocation0]]
  $region22: #{_stem_and_pool.1} parent=0
    _
  %s6 = ssub.s32 1, %s4
  %s7 = scalar_select 0, %s6, %s4
  // Predicated region
  $region2: #{_stem_and_pool.1} parent=0 // pred_check
    _
  $region3: #{_stem_and_pool.1} parent=0 // pred_check_branch
    %9 = sbr.rel (0) target = $region5
  $region4: #{_stem_and_pool.1} parent=0 // pred_region
    _
  $region5: #{_stem_and_pool.1} parent=0 // pred_fallthru
    _
  // Predicated region
  $region6: #{_stem_and_pool.1} parent=0 // pred_check
    _
  $region7: #{_stem_and_pool.1} parent=0 // pred_check_branch
    %11 = sbr.rel (0) target = $region9
  $region8: #{_stem_and_pool.1} parent=0 // pred_region
    _
  $region9: #{_stem_and_pool.1} parent=0 // pred_fallthru
    _
  // Predicated region
  $region10: #{_stem_and_pool.1} parent=0 // pred_check
    _
  $region11: #{_stem_and_pool.1} parent=0 // pred_check_branch
    %13 = sbr.rel (0) target = $region13
  $region12: #{_stem_and_pool.1} parent=0 // pred_region
    _
  $region13: #{_stem_and_pool.1} parent=0 // pred_fallthru
    _
  %v15 = vld [vmem:[%s0] sm:$0xff]
  %v16 = vld [vmem:[%s0 + $0x8] sm:$0xff]
  %v17 = vld [vmem:[%s0 + $0x10] sm:$0xff]
  %v18 = vld [vmem:[%s0 + $0x18] sm:$0xff]
  %v19 = vld [vmem:[%s0 + $0x20] sm:$0xff]
  %v20 = vld [vmem:[%s0 + $0x28] sm:$0xff]
  %v21 = vld [vmem:[%s0 + $0x30] sm:$0xff]
  %v22 = vld [vmem:[%s0 + $0x38] sm:$0xff]
  %v23 = vld [vmem:[%s0 + $0x40] sm:$0xff]
  %v24 = vld [vmem:[%s0 + $0x48] sm:$0xff]
  %v25 = vld [vmem:[%s0 + $0x50] sm:$0xff]
  %v26 = vld [vmem:[%s0 + $0x58] sm:$0xff]
  %v27 = vld [vmem:[%s0 + $0x60] sm:$0xff]
  %v28 = vld [vmem:[%s0 + $0x68] sm:$0xff]
  %v29 = vld [vmem:[%s0 + $0x70] sm:$0xff]
  %v30 = vld [vmem:[%s0 + $0x78] sm:$0xff]
  %v31 = vld [vmem:[%s0 + $0x80] sm:$0xff]
  %v32 = vld [vmem:[%s0 + $0x88] sm:$0xff]
  %v33 = vld [vmem:[%s0 + $0x90] sm:$0xff]
  %v34 = vld [vmem:[%s0 + $0x98] sm:$0xff]
  %v35 = vld [vmem:[%s0 + $0xa0] sm:$0xff]
  %v36 = vld [vmem:[%s0 + $0xa8] sm:$0xff]
  %v37 = vld [vmem:[%s0 + $0xb0] sm:$0xff]
  %v38 = vld [vmem:[%s0 + $0xb8] sm:$0xff]
  %v39 = vld [vmem:[%s0 + $0xc0] sm:$0xff]
  %v40 = vld [vmem:[%s0 + $0xc8] sm:$0xff]
  %v41 = vld [vmem:[%s0 + $0xd0] sm:$0xff]
  %v42 = vld [vmem:[%s0 + $0xd8] sm:$0xff]
  %v43 = vld [vmem:[%s0 + $0xe0] sm:$0xff]
  %v44 = vld [vmem:[%s0 + $0xe8] sm:$0xff]
  %v45 = vld [vmem:[%s0 + $0xf0] sm:$0xff]
  %v46 = vld [vmem:[%s0 + $0xf8] sm:$0xff]
  %v47 = vld [vmem:[%s0 + $0x100] sm:$0xff]
  %v48 = vld [vmem:[%s0 + $0x108] sm:$0xff]
  %v49 = vld [vmem:[%s0 + $0x110] sm:$0xff]
  %v50 = vld [vmem:[%s0 + $0x118] sm:$0xff]
  %v51 = vld [vmem:[%s0 + $0x120] sm:$0xff]
  %v52 = vld [vmem:[%s0 + $0x128] sm:$0xff]
  %v53 = vld [vmem:[%s0 + $0x130] sm:$0xff]
  %v54 = vld [vmem:[%s0 + $0x138] sm:$0xff]
  %v55 = vld [vmem:[%s0 + $0x140] sm:$0xff]
  %v56 = vld [vmem:[%s0 + $0x148] sm:$0xff]
  %v57 = vld [vmem:[%s0 + $0x150] sm:$0xff]
  %v58 = vld [vmem:[%s0 + $0x158] sm:$0xff]
  %v59 = vld [vmem:[%s0 + $0x160] sm:$0xff]
  %v60 = vld [vmem:[%s0 + $0x168] sm:$0xff]
  %v61 = vld [vmem:[%s0 + $0x170] sm:$0xff]
  %v62 = vld [vmem:[%s0 + $0x178] sm:$0xff]
  %v63 = vld [vmem:[%s0 + $0x180] sm:$0xff]
  %v64 = vld [vmem:[%s0 + $0x188] sm:$0xff]
  %v65 = vld [vmem:[%s0 + $0x190] sm:$0xff]
  %v66 = vld [vmem:[%s0 + $0x198] sm:$0xff]
  %v67 = vld [vmem:[%s0 + $0x1a0] sm:$0xff]
  %v68 = vld [vmem:[%s0 + $0x1a8] sm:$0xff]
  %v69 = vld [vmem:[%s0 + $0x1b0] sm:$0xff]
  %v70 = vld [vmem:[%s0 + $0x1b8] sm:$0xff]
  %v71 = vld [vmem:[%s0 + $0x1c0] sm:$0xff]
  %v72 = vld [vmem:[%s0 + $0x1c8] sm:$0xff]
  %v73 = vld [vmem:[%s0 + $0x1d0] sm:$0xff]
  %v74 = vld [vmem:[%s0 + $0x1d8] sm:$0xff]
  %v75 = vld [vmem:[%s0 + $0x1e0] sm:$0xff]
  %v76 = vld [vmem:[%s0 + $0x1e8] sm:$0xff]
  %v77 = vld [vmem:[%s0 + $0x1f0] sm:$0xff]
  %v78 = vld [vmem:[%s0 + $0x1f8] sm:$0xff]
  %v79 = vld [vmem:[%s0 + $0x200] sm:$0xff]
  %v80 = vld [vmem:[%s0 + $0x208] sm:$0xff]
  %v81 = vld [vmem:[%s0 + $0x210] sm:$0xff]
  %v82 = vld [vmem:[%s0 + $0x218] sm:$0xff]
  %v83 = vld [vmem:[%s0 + $0x220] sm:$0xff]
  %v84 = vld [vmem:[%s0 + $0x228] sm:$0xff]
  %v85 = vld [vmem:[%s0 + $0x230] sm:$0xff]
  %v86 = vld [vmem:[%s0 + $0x238] sm:$0xff]
  %v87 = vld [vmem:[%s0 + $0x240] sm:$0xff]
  %v88 = vld [vmem:[%s0 + $0x248] sm:$0xff]
  %v89 = vld [vmem:[%s0 + $0x250] sm:$0xff]
  %v90 = vld [vmem:[%s0 + $0x258] sm:$0xff]
  %v91 = vld [vmem:[%s0 + $0x260] sm:$0xff]
  %v92 = vld [vmem:[%s0 + $0x268] sm:$0xff]
  %v93 = vld [vmem:[%s0 + $0x270] sm:$0xff]
  %v94 = vld [vmem:[%s0 + $0x278] sm:$0xff]
  %v95 = vld [vmem:[%s0 + $0x280] sm:$0xff]
  %v96 = vld [vmem:[%s0 + $0x288] sm:$0xff]
  %v97 = vld [vmem:[%s0 + $0x290] sm:$0xff]
  %v98 = vld [vmem:[%s0 + $0x298] sm:$0xff]
  %v99 = vld [vmem:[%s0 + $0x2a0] sm:$0xff]
  %v100 = vld [vmem:[%s0 + $0x2a8] sm:$0xff]
  %v101 = vld [vmem:[%s0 + $0x2b0] sm:$0xff]
  %v102 = vld [vmem:[%s0 + $0x2b8] sm:$0xff]
  %v103 = vld [vmem:[%s0 + $0x2c0] sm:$0xff]
  %v104 = vld [vmem:[%s0 + $0x2c8] sm:$0xff]
  %v105 = vld [vmem:[%s0 + $0x2d0] sm:$0xff]
  %v106 = vld [vmem:[%s0 + $0x2d8] sm:$0xff]
  %v107 = vld [vmem:[%s0 + $0x2e0] sm:$0xff]
  %v108 = vld [vmem:[%s0 + $0x2e8] sm:$0xff]
  %v109 = vld [vmem:[%s0 + $0x2f0] sm:$0xff]
  %v110 = vld [vmem:[%s0 + $0x2f8] sm:$0xff]
  %v111 = vld [vmem:[%s0 + $0x300] sm:$0xff]
  %v112 = vld [vmem:[%s0 + $0x308] sm:$0xff]
  %v113 = vld [vmem:[%s0 + $0x310] sm:$0xff]
  %v114 = vld [vmem:[%s0 + $0x318] sm:$0xff]
  %v115 = vld [vmem:[%s0 + $0x320] sm:$0xff]
  %v116 = vld [vmem:[%s0 + $0x328] sm:$0xff]
  %v117 = vld [vmem:[%s0 + $0x330] sm:$0xff]
  %v118 = vld [vmem:[%s0 + $0x338] sm:$0xff]
  %v119 = vld [vmem:[%s0 + $0x340] sm:$0xff]
  %v120 = vld [vmem:[%s0 + $0x348] sm:$0xff]
  %v121 = vld [vmem:[%s0 + $0x350] sm:$0xff]
  %v122 = vld [vmem:[%s0 + $0x358] sm:$0xff]
  %v123 = vld [vmem:[%s0 + $0x360] sm:$0xff]
  %v124 = vld [vmem:[%s0 + $0x368] sm:$0xff]
  %v125 = vld [vmem:[%s0 + $0x370] sm:$0xff]
  %v126 = vld [vmem:[%s0 + $0x378] sm:$0xff]
  %v127 = vld [vmem:[%s0 + $0x380] sm:$0xff]
  %v128 = vld [vmem:[%s0 + $0x388] sm:$0xff]
  %v129 = vld [vmem:[%s0 + $0x390] sm:$0xff]
  %v130 = vld [vmem:[%s0 + $0x398] sm:$0xff]
  %v131 = vld [vmem:[%s0 + $0x3a0] sm:$0xff]
  %v132 = vld [vmem:[%s0 + $0x3a8] sm:$0xff]
  %v133 = vld [vmem:[%s0 + $0x3b0] sm:$0xff]
  %v134 = vld [vmem:[%s0 + $0x3b8] sm:$0xff]
  %v135 = vld [vmem:[%s0 + $0x3c0] sm:$0xff]
  %v136 = vld [vmem:[%s0 + $0x3c8] sm:$0xff]
  %v137 = vld [vmem:[%s0 + $0x3d0] sm:$0xff]
  %v138 = vld [vmem:[%s0 + $0x3d8] sm:$0xff]
  %v139 = vld [vmem:[%s0 + $0x3e0] sm:$0xff]
  %v140 = vld [vmem:[%s0 + $0x3e8] sm:$0xff]
  %v141 = vld [vmem:[%s0 + $0x3f0] sm:$0xff]
  %v142 = vld [vmem:[%s0 + $0x3f8] sm:$0xff]
  %v143 = vld [vmem:[%s0 + $0x400] sm:$0xff]
  %v144 = vld [vmem:[%s0 + $0x408] sm:$0xff]
  %v145 = vld [vmem:[%s0 + $0x410] sm:$0xff]
  %v146 = vld [vmem:[%s0 + $0x418] sm:$0xff]
  %v147 = vld [vmem:[%s0 + $0x420] sm:$0xff]
  %v148 = vld [vmem:[%s0 + $0x428] sm:$0xff]
  %v149 = vld [vmem:[%s0 + $0x430] sm:$0xff]
  %v150 = vld [vmem:[%s0 + $0x438] sm:$0xff]
  %v151 = vld [vmem:[%s0 + $0x440] sm:$0xff]
  %v152 = vld [vmem:[%s0 + $0x448] sm:$0xff]
  %v153 = vld [vmem:[%s0 + $0x450] sm:$0xff]
  %v154 = vld [vmem:[%s0 + $0x458] sm:$0xff]
  %v155 = vld [vmem:[%s0 + $0x460] sm:$0xff]
  %v156 = vld [vmem:[%s0 + $0x468] sm:$0xff]
  %v157 = vld [vmem:[%s0 + $0x470] sm:$0xff]
  %v158 = vld [vmem:[%s0 + $0x478] sm:$0xff]
  %v159 = vld [vmem:[%s0 + $0x480] sm:$0xff]
  %v160 = vld [vmem:[%s0 + $0x488] sm:$0xff]
  %v161 = vld [vmem:[%s0 + $0x490] sm:$0xff]
  %v162 = vld [vmem:[%s0 + $0x498] sm:$0xff]
  %v163 = vld [vmem:[%s0 + $0x4a0] sm:$0xff]
  %v164 = vld [vmem:[%s0 + $0x4a8] sm:$0xff]
  %v165 = vld [vmem:[%s0 + $0x4b0] sm:$0xff]
  %v166 = vld [vmem:[%s0 + $0x4b8] sm:$0xff]
  %v167 = vld [vmem:[%s0 + $0x4c0] sm:$0xff]
  %v168 = vld [vmem:[%s0 + $0x4c8] sm:$0xff]
  %v169 = vld [vmem:[%s0 + $0x4d0] sm:$0xff]
  %v170 = vld [vmem:[%s0 + $0x4d8] sm:$0xff]
  %v171 = vld [vmem:[%s0 + $0x4e0] sm:$0xff]
  %v172 = vld [vmem:[%s0 + $0x4e8] sm:$0xff]
  %v173 = vld [vmem:[%s0 + $0x4f0] sm:$0xff]
  %v174 = vld [vmem:[%s0 + $0x4f8] sm:$0xff]
  %v175 = vld [vmem:[%s0 + $0x500] sm:$0xff]
  %v176 = vld [vmem:[%s0 + $0x508] sm:$0xff]
  %v177 = vld [vmem:[%s0 + $0x510] sm:$0xff]
  %v178 = vld [vmem:[%s0 + $0x518] sm:$0xff]
  %v179 = vld [vmem:[%s0 + $0x520] sm:$0xff]
  %v180 = vld [vmem:[%s0 + $0x528] sm:$0xff]
  %v181 = vld [vmem:[%s0 + $0x530] sm:$0xff]
  %v182 = vld [vmem:[%s0 + $0x538] sm:$0xff]
  %v183 = vld [vmem:[%s0 + $0x540] sm:$0xff]
  %v184 = vld [vmem:[%s0 + $0x548] sm:$0xff]
  %v185 = vld [vmem:[%s0 + $0x550] sm:$0xff]
  %v186 = vld [vmem:[%s0 + $0x558] sm:$0xff]
  %v187 = vld [vmem:[%s0 + $0x560] sm:$0xff]
  %v188 = vld [vmem:[%s0 + $0x568] sm:$0xff]
  %v189 = vld [vmem:[%s0 + $0x570] sm:$0xff]
  %v190 = vld [vmem:[%s0 + $0x578] sm:$0xff]
  %v191 = vld [vmem:[%s0 + $0x580] sm:$0xff]
  %v192 = vld [vmem:[%s0 + $0x588] sm:$0xff]
  %v193 = vld [vmem:[%s0 + $0x590] sm:$0xff]
  %v194 = vld [vmem:[%s0 + $0x598] sm:$0xff]
  %v195 = vld [vmem:[%s0 + $0x5a0] sm:$0xff]
  %v196 = vld [vmem:[%s0 + $0x5a8] sm:$0xff]
  %v197 = vld [vmem:[%s0 + $0x5b0] sm:$0xff]
  %v198 = vld [vmem:[%s0 + $0x5b8] sm:$0xff]
  %v199 = vld [vmem:[%s0 + $0x5c0] sm:$0xff]
  %v200 = vld [vmem:[%s0 + $0x5c8] sm:$0xff]
  %v201 = vld [vmem:[%s0 + $0x5d0] sm:$0xff]
  %v202 = vld [vmem:[%s0 + $0x5d8] sm:$0xff]
  %v203 = vld [vmem:[%s0 + $0x5e0] sm:$0xff]
  %v204 = vld [vmem:[%s0 + $0x5e8] sm:$0xff]
  %v205 = vld [vmem:[%s0 + $0x5f0] sm:$0xff]
  %v206 = vld [vmem:[%s0 + $0x5f8] sm:$0xff]
  %v207 = vld [vmem:[%s0 + $0x600] sm:$0xff]
  %v208 = vld [vmem:[%s0 + $0x608] sm:$0xff]
  %v209 = vld [vmem:[%s0 + $0x610] sm:$0xff]
  %v210 = vld [vmem:[%s0 + $0x618] sm:$0xff]
  %v211 = vld [vmem:[%s0 + $0x620] sm:$0xff]
  %v212 = vld [vmem:[%s0 + $0x628] sm:$0xff]
  %v213 = vld [vmem:[%s0 + $0x630] sm:$0xff]
  %v214 = vld [vmem:[%s0 + $0x638] sm:$0xff]
  %v215 = vld [vmem:[%s0 + $0x640] sm:$0xff]
  %v216 = vld [vmem:[%s0 + $0x648] sm:$0xff]
  %v217 = vld [vmem:[%s0 + $0x650] sm:$0xff]
  %v218 = vld [vmem:[%s0 + $0x658] sm:$0xff]
  %v219 = vld [vmem:[%s0 + $0x660] sm:$0xff]
  %v220 = vld [vmem:[%s0 + $0x668] sm:$0xff]
  %v221 = vld [vmem:[%s0 + $0x670] sm:$0xff]
  %v222 = vld [vmem:[%s0 + $0x678] sm:$0xff]
  %v223 = vld [vmem:[%s0 + $0x680] sm:$0xff]
  %v224 = vld [vmem:[%s0 + $0x688] sm:$0xff]
  %v225 = vld [vmem:[%s0 + $0x690] sm:$0xff]
  %v226 = vld [vmem:[%s0 + $0x698] sm:$0xff]
  %v227 = vld [vmem:[%s0 + $0x6a0] sm:$0xff]
  %v228 = vld [vmem:[%s0 + $0x6a8] sm:$0xff]
  %v229 = vld [vmem:[%s0 + $0x6b0] sm:$0xff]
  %v230 = vld [vmem:[%s0 + $0x6b8] sm:$0xff]
  %v231 = vld [vmem:[%s0 + $0x6c0] sm:$0xff]
  %v232 = vld [vmem:[%s0 + $0x6c8] sm:$0xff]
  %v233 = vld [vmem:[%s0 + $0x6d0] sm:$0xff]
  %v234 = vld [vmem:[%s0 + $0x6d8] sm:$0xff]
  %v235 = vld [vmem:[%s0 + $0x6e0] sm:$0xff]
  %v236 = vld [vmem:[%s0 + $0x6e8] sm:$0xff]
  %v237 = vld [vmem:[%s0 + $0x6f0] sm:$0xff]
  %v238 = vld [vmem:[%s0 + $0x6f8] sm:$0xff]
  %v239 = vld [vmem:[%s0 + $0x700] sm:$0xff]
  %v240 = vld [vmem:[%s0 + $0x708] sm:$0xff]
  %v241 = vld [vmem:[%s0 + $0x710] sm:$0xff]
  %v242 = vld [vmem:[%s0 + $0x718] sm:$0xff]
  %v243 = vld [vmem:[%s0 + $0x720] sm:$0xff]
  %v244 = vld [vmem:[%s0 + $0x728] sm:$0xff]
  %v245 = vld [vmem:[%s0 + $0x730] sm:$0xff]
  %v246 = vld [vmem:[%s0 + $0x738] sm:$0xff]
  %v247 = vld [vmem:[%s0 + $0x740] sm:$0xff]
  %v248 = vld [vmem:[%s0 + $0x748] sm:$0xff]
  %v249 = vld [vmem:[%s0 + $0x750] sm:$0xff]
  %v250 = vld [vmem:[%s0 + $0x758] sm:$0xff]
  %v251 = vld [vmem:[%s0 + $0x760] sm:$0xff]
  %v252 = vld [vmem:[%s0 + $0x768] sm:$0xff]
  %v253 = vld [vmem:[%s0 + $0x770] sm:$0xff]
  %v254 = vld [vmem:[%s0 + $0x778] sm:$0xff]
  %v255 = vld [vmem:[%s0 + $0x780] sm:$0xff]
  %v256 = vld [vmem:[%s0 + $0x788] sm:$0xff]
  %v257 = vld [vmem:[%s0 + $0x790] sm:$0xff]
  %v258 = vld [vmem:[%s0 + $0x798] sm:$0xff]
  %v259 = vld [vmem:[%s0 + $0x7a0] sm:$0xff]
  %v260 = vld [vmem:[%s0 + $0x7a8] sm:$0xff]
  %v261 = vld [vmem:[%s0 + $0x7b0] sm:$0xff]
  %v262 = vld [vmem:[%s0 + $0x7b8] sm:$0xff]
  %v263 = vld [vmem:[%s0 + $0x7c0] sm:$0xff]
  %v264 = vld [vmem:[%s0 + $0x7c8] sm:$0xff]
  %v265 = vld [vmem:[%s0 + $0x7d0] sm:$0xff]
  %v266 = vld [vmem:[%s0 + $0x7d8] sm:$0xff]
  %v267 = vld [vmem:[%s0 + $0x7e0] sm:$0xff]
  %v268 = vld [vmem:[%s0 + $0x7e8] sm:$0xff]
  %v269 = vld [vmem:[%s0 + $0x7f0] sm:$0xff]
  %v270 = vld [vmem:[%s0 + $0x7f8] sm:$0xff]
  %v271 = vld [vmem:[%s1] sm:$0xf]
  %v272 = vld [vmem:[%s1 + $0x4] sm:$0xf]
  %v273 = vld [vmem:[%s1 + $0x8] sm:$0xf]
  %v274 = vld [vmem:[%s1 + $0xc] sm:$0xf]
  %v275 = vld [vmem:[%s1 + $0x10] sm:$0xf]
  %v276 = vld [vmem:[%s1 + $0x14] sm:$0xf]
  %v277 = vld [vmem:[%s1 + $0x18] sm:$0xf]
  %v278 = vld [vmem:[%s1 + $0x1c] sm:$0xf]
  %v279 = vld [vmem:[%s1 + $0x20] sm:$0xf]
  %v280 = vld [vmem:[%s1 + $0x24] sm:$0xf]
  %v281 = vld [vmem:[%s1 + $0x28] sm:$0xf]
  %v282 = vld [vmem:[%s1 + $0x2c] sm:$0xf]
  %v283 = vld [vmem:[%s1 + $0x30] sm:$0xf]
  %v284 = vld [vmem:[%s1 + $0x34] sm:$0xf]
  %v285 = vld [vmem:[%s1 + $0x38] sm:$0xf]
  %v286 = vld [vmem:[%s1 + $0x3c] sm:$0xf]
  %v287 = vld [vmem:[%s1 + $0x40] sm:$0xf]
  %v288 = vld [vmem:[%s1 + $0x44] sm:$0xf]
  %v289 = vld [vmem:[%s1 + $0x48] sm:$0x3]
  %v290 = vld [vmem:[%s2] sm:$0x1]
  %v292 = vperm.slane %v290, 0
  %v550 = vunpack.c.l.b16 %v15
  %v551 = vunpack.c.h.b16 %v15
  %v552 = vunpack.c.l.b16 %v16
  %v553 = vunpack.c.h.b16 %v16
  %v554 = vunpack.c.l.b16 %v17
  %v555 = vunpack.c.h.b16 %v17
  %v556 = vunpack.c.l.b16 %v18
  %v557 = vunpack.c.h.b16 %v18
  %v558 = vunpack.c.l.b16 %v19
  %v559 = vunpack.c.h.b16 %v19
  %v560 = vunpack.c.l.b16 %v20
  %v561 = vunpack.c.h.b16 %v20
  %v562 = vunpack.c.l.b16 %v21
  %v563 = vunpack.c.h.b16 %v21
  %v564 = vunpack.c.l.b16 %v22
  %v565 = vunpack.c.h.b16 %v22
  %v566 = vunpack.c.l.b16 %v23
  %v567 = vunpack.c.h.b16 %v23
  %v568 = vunpack.c.l.b16 %v24
  %v569 = vunpack.c.h.b16 %v24
  %v570 = vunpack.c.l.b16 %v25
  %v571 = vunpack.c.h.b16 %v25
  %v572 = vunpack.c.l.b16 %v26
  %v573 = vunpack.c.h.b16 %v26
  %v574 = vunpack.c.l.b16 %v27
  %v575 = vunpack.c.h.b16 %v27
  %v576 = vunpack.c.l.b16 %v28
  %v577 = vunpack.c.h.b16 %v28
  %v578 = vunpack.c.l.b16 %v29
  %v579 = vunpack.c.h.b16 %v29
  %v580 = vunpack.c.l.b16 %v30
  %v581 = vunpack.c.h.b16 %v30
  %v582 = vunpack.c.l.b16 %v31
  %v583 = vunpack.c.h.b16 %v31
  %v584 = vunpack.c.l.b16 %v32
  %v585 = vunpack.c.h.b16 %v32
  %v586 = vunpack.c.l.b16 %v33
  %v587 = vunpack.c.h.b16 %v33
  %v588 = vunpack.c.l.b16 %v34
  %v589 = vunpack.c.h.b16 %v34
  %v590 = vunpack.c.l.b16 %v35
  %v591 = vunpack.c.h.b16 %v35
  %v592 = vunpack.c.l.b16 %v36
  %v593 = vunpack.c.h.b16 %v36
  %v594 = vunpack.c.l.b16 %v37
  %v595 = vunpack.c.h.b16 %v37
  %v596 = vunpack.c.l.b16 %v38
  %v597 = vunpack.c.h.b16 %v38
  %v598 = vunpack.c.l.b16 %v39
  %v599 = vunpack.c.h.b16 %v39
  %v600 = vunpack.c.l.b16 %v40
  %v601 = vunpack.c.h.b16 %v40
  %v602 = vunpack.c.l.b16 %v41
  %v603 = vunpack.c.h.b16 %v41
  %v604 = vunpack.c.l.b16 %v42
  %v605 = vunpack.c.h.b16 %v42
  %v606 = vunpack.c.l.b16 %v43
  %v607 = vunpack.c.h.b16 %v43
  %v608 = vunpack.c.l.b16 %v44
  %v609 = vunpack.c.h.b16 %v44
  %v610 = vunpack.c.l.b16 %v45
  %v611 = vunpack.c.h.b16 %v45
  %v612 = vunpack.c.l.b16 %v46
  %v613 = vunpack.c.h.b16 %v46
  %v614 = vunpack.c.l.b16 %v47
  %v615 = vunpack.c.h.b16 %v47
  %v616 = vunpack.c.l.b16 %v48
  %v617 = vunpack.c.h.b16 %v48
  %v618 = vunpack.c.l.b16 %v49
  %v619 = vunpack.c.h.b16 %v49
  %v620 = vunpack.c.l.b16 %v50
  %v621 = vunpack.c.h.b16 %v50
  %v622 = vunpack.c.l.b16 %v51
  %v623 = vunpack.c.h.b16 %v51
  %v624 = vunpack.c.l.b16 %v52
  %v625 = vunpack.c.h.b16 %v52
  %v626 = vunpack.c.l.b16 %v53
  %v627 = vunpack.c.h.b16 %v53
  %v628 = vunpack.c.l.b16 %v54
  %v629 = vunpack.c.h.b16 %v54
  %v630 = vunpack.c.l.b16 %v55
  %v631 = vunpack.c.h.b16 %v55
  %v632 = vunpack.c.l.b16 %v56
  %v633 = vunpack.c.h.b16 %v56
  %v634 = vunpack.c.l.b16 %v57
  %v635 = vunpack.c.h.b16 %v57
  %v636 = vunpack.c.l.b16 %v58
  %v637 = vunpack.c.h.b16 %v58
  %v638 = vunpack.c.l.b16 %v59
  %v639 = vunpack.c.h.b16 %v59
  %v640 = vunpack.c.l.b16 %v60
  %v641 = vunpack.c.h.b16 %v60
  %v642 = vunpack.c.l.b16 %v61
  %v643 = vunpack.c.h.b16 %v61
  %v644 = vunpack.c.l.b16 %v62
  %v645 = vunpack.c.h.b16 %v62
  %v646 = vunpack.c.l.b16 %v63
  %v647 = vunpack.c.h.b16 %v63
  %v648 = vunpack.c.l.b16 %v64
  %v649 = vunpack.c.h.b16 %v64
  %v650 = vunpack.c.l.b16 %v65
  %v651 = vunpack.c.h.b16 %v65
  %v652 = vunpack.c.l.b16 %v66
  %v653 = vunpack.c.h.b16 %v66
  %v654 = vunpack.c.l.b16 %v67
  %v655 = vunpack.c.h.b16 %v67
  %v656 = vunpack.c.l.b16 %v68
  %v657 = vunpack.c.h.b16 %v68
  %v658 = vunpack.c.l.b16 %v69
  %v659 = vunpack.c.h.b16 %v69
  %v660 = vunpack.c.l.b16 %v70
  %v661 = vunpack.c.h.b16 %v70
  %v662 = vunpack.c.l.b16 %v71
  %v663 = vunpack.c.h.b16 %v71
  %v664 = vunpack.c.l.b16 %v72
  %v665 = vunpack.c.h.b16 %v72
  %v666 = vunpack.c.l.b16 %v73
  %v667 = vunpack.c.h.b16 %v73
  %v668 = vunpack.c.l.b16 %v74
  %v669 = vunpack.c.h.b16 %v74
  %v670 = vunpack.c.l.b16 %v75
  %v671 = vunpack.c.h.b16 %v75
  %v672 = vunpack.c.l.b16 %v76
  %v673 = vunpack.c.h.b16 %v76
  %v674 = vunpack.c.l.b16 %v77
  %v675 = vunpack.c.h.b16 %v77
  %v676 = vunpack.c.l.b16 %v78
  %v677 = vunpack.c.h.b16 %v78
  %v678 = vunpack.c.l.b16 %v79
  %v679 = vunpack.c.h.b16 %v79
  %v680 = vunpack.c.l.b16 %v80
  %v681 = vunpack.c.h.b16 %v80
  %v682 = vunpack.c.l.b16 %v81
  %v683 = vunpack.c.h.b16 %v81
  %v684 = vunpack.c.l.b16 %v82
  %v685 = vunpack.c.h.b16 %v82
  %v686 = vunpack.c.l.b16 %v83
  %v687 = vunpack.c.h.b16 %v83
  %v688 = vunpack.c.l.b16 %v84
  %v689 = vunpack.c.h.b16 %v84
  %v690 = vunpack.c.l.b16 %v85
  %v691 = vunpack.c.h.b16 %v85
  %v692 = vunpack.c.l.b16 %v86
  %v693 = vunpack.c.h.b16 %v86
  %v694 = vunpack.c.l.b16 %v87
  %v695 = vunpack.c.h.b16 %v87
  %v696 = vunpack.c.l.b16 %v88
  %v697 = vunpack.c.h.b16 %v88
  %v698 = vunpack.c.l.b16 %v89
  %v699 = vunpack.c.h.b16 %v89
  %v700 = vunpack.c.l.b16 %v90
  %v701 = vunpack.c.h.b16 %v90
  %v702 = vunpack.c.l.b16 %v91
  %v703 = vunpack.c.h.b16 %v91
  %v704 = vunpack.c.l.b16 %v92
  %v705 = vunpack.c.h.b16 %v92
  %v706 = vunpack.c.l.b16 %v93
  %v707 = vunpack.c.h.b16 %v93
  %v708 = vunpack.c.l.b16 %v94
  %v709 = vunpack.c.h.b16 %v94
  %v710 = vunpack.c.l.b16 %v95
  %v711 = vunpack.c.h.b16 %v95
  %v712 = vunpack.c.l.b16 %v96
  %v713 = vunpack.c.h.b16 %v96
  %v714 = vunpack.c.l.b16 %v97
  %v715 = vunpack.c.h.b16 %v97
  %v716 = vunpack.c.l.b16 %v98
  %v717 = vunpack.c.h.b16 %v98
  %v718 = vunpack.c.l.b16 %v99
  %v719 = vunpack.c.h.b16 %v99
  %v720 = vunpack.c.l.b16 %v100
  %v721 = vunpack.c.h.b16 %v100
  %v722 = vunpack.c.l.b16 %v101
  %v723 = vunpack.c.h.b16 %v101
  %v724 = vunpack.c.l.b16 %v102
  %v725 = vunpack.c.h.b16 %v102
  %v726 = vunpack.c.l.b16 %v103
  %v727 = vunpack.c.h.b16 %v103
  %v728 = vunpack.c.l.b16 %v104
  %v729 = vunpack.c.h.b16 %v104
  %v730 = vunpack.c.l.b16 %v105
  %v731 = vunpack.c.h.b16 %v105
  %v732 = vunpack.c.l.b16 %v106
  %v733 = vunpack.c.h.b16 %v106
  %v734 = vunpack.c.l.b16 %v107
  %v735 = vunpack.c.h.b16 %v107
  %v736 = vunpack.c.l.b16 %v108
  %v737 = vunpack.c.h.b16 %v108
  %v738 = vunpack.c.l.b16 %v109
  %v739 = vunpack.c.h.b16 %v109
  %v740 = vunpack.c.l.b16 %v110
  %v741 = vunpack.c.h.b16 %v110
  %v742 = vunpack.c.l.b16 %v111
  %v743 = vunpack.c.h.b16 %v111
  %v744 = vunpack.c.l.b16 %v112
  %v745 = vunpack.c.h.b16 %v112
  %v746 = vunpack.c.l.b16 %v113
  %v747 = vunpack.c.h.b16 %v113
  %v748 = vunpack.c.l.b16 %v114
  %v749 = vunpack.c.h.b16 %v114
  %v750 = vunpack.c.l.b16 %v115
  %v751 = vunpack.c.h.b16 %v115
  %v752 = vunpack.c.l.b16 %v116
  %v753 = vunpack.c.h.b16 %v116
  %v754 = vunpack.c.l.b16 %v117
  %v755 = vunpack.c.h.b16 %v117
  %v756 = vunpack.c.l.b16 %v118
  %v757 = vunpack.c.h.b16 %v118
  %v758 = vunpack.c.l.b16 %v119
  %v759 = vunpack.c.h.b16 %v119
  %v760 = vunpack.c.l.b16 %v120
  %v761 = vunpack.c.h.b16 %v120
  %v762 = vunpack.c.l.b16 %v121
  %v763 = vunpack.c.h.b16 %v121
  %v764 = vunpack.c.l.b16 %v122
  %v765 = vunpack.c.h.b16 %v122
  %v766 = vunpack.c.l.b16 %v123
  %v767 = vunpack.c.h.b16 %v123
  %v768 = vunpack.c.l.b16 %v124
  %v769 = vunpack.c.h.b16 %v124
  %v770 = vunpack.c.l.b16 %v125
  %v771 = vunpack.c.h.b16 %v125
  %v772 = vunpack.c.l.b16 %v126
  %v773 = vunpack.c.h.b16 %v126
  %v774 = vunpack.c.l.b16 %v127
  %v775 = vunpack.c.h.b16 %v127
  %v776 = vunpack.c.l.b16 %v128
  %v777 = vunpack.c.h.b16 %v128
  %v778 = vunpack.c.l.b16 %v129
  %v779 = vunpack.c.h.b16 %v129
  %v780 = vunpack.c.l.b16 %v130
  %v781 = vunpack.c.h.b16 %v130
  %v782 = vunpack.c.l.b16 %v131
  %v783 = vunpack.c.h.b16 %v131
  %v784 = vunpack.c.l.b16 %v132
  %v785 = vunpack.c.h.b16 %v132
  %v786 = vunpack.c.l.b16 %v133
  %v787 = vunpack.c.h.b16 %v133
  %v788 = vunpack.c.l.b16 %v134
  %v789 = vunpack.c.h.b16 %v134
  %v790 = vunpack.c.l.b16 %v135
  %v791 = vunpack.c.h.b16 %v135
  %v792 = vunpack.c.l.b16 %v136
  %v793 = vunpack.c.h.b16 %v136
  %v794 = vunpack.c.l.b16 %v137
  %v795 = vunpack.c.h.b16 %v137
  %v796 = vunpack.c.l.b16 %v138
  %v797 = vunpack.c.h.b16 %v138
  %v798 = vunpack.c.l.b16 %v139
  %v799 = vunpack.c.h.b16 %v139
  %v800 = vunpack.c.l.b16 %v140
  %v801 = vunpack.c.h.b16 %v140
  %v802 = vunpack.c.l.b16 %v141
  %v803 = vunpack.c.h.b16 %v141
  %v804 = vunpack.c.l.b16 %v142
  %v805 = vunpack.c.h.b16 %v142
  %v806 = vunpack.c.l.b16 %v143
  %v807 = vunpack.c.h.b16 %v143
  %v808 = vunpack.c.l.b16 %v144
  %v809 = vunpack.c.h.b16 %v144
  %v810 = vunpack.c.l.b16 %v145
  %v811 = vunpack.c.h.b16 %v145
  %v812 = vunpack.c.l.b16 %v146
  %v813 = vunpack.c.h.b16 %v146
  %v814 = vunpack.c.l.b16 %v147
  %v815 = vunpack.c.h.b16 %v147
  %v816 = vunpack.c.l.b16 %v148
  %v817 = vunpack.c.h.b16 %v148
  %v818 = vunpack.c.l.b16 %v149
  %v819 = vunpack.c.h.b16 %v149
  %v820 = vunpack.c.l.b16 %v150
  %v821 = vunpack.c.h.b16 %v150
  %v822 = vunpack.c.l.b16 %v151
  %v823 = vunpack.c.h.b16 %v151
  %v824 = vunpack.c.l.b16 %v152
  %v825 = vunpack.c.h.b16 %v152
  %v826 = vunpack.c.l.b16 %v153
  %v827 = vunpack.c.h.b16 %v153
  %v828 = vunpack.c.l.b16 %v154
  %v829 = vunpack.c.h.b16 %v154
  %v830 = vunpack.c.l.b16 %v155
  %v831 = vunpack.c.h.b16 %v155
  %v832 = vunpack.c.l.b16 %v156
  %v833 = vunpack.c.h.b16 %v156
  %v834 = vunpack.c.l.b16 %v157
  %v835 = vunpack.c.h.b16 %v157
  %v836 = vunpack.c.l.b16 %v158
  %v837 = vunpack.c.h.b16 %v158
  %v838 = vunpack.c.l.b16 %v159
  %v839 = vunpack.c.h.b16 %v159
  %v840 = vunpack.c.l.b16 %v160
  %v841 = vunpack.c.h.b16 %v160
  %v842 = vunpack.c.l.b16 %v161
  %v843 = vunpack.c.h.b16 %v161
  %v844 = vunpack.c.l.b16 %v162
  %v845 = vunpack.c.h.b16 %v162
  %v846 = vunpack.c.l.b16 %v163
  %v847 = vunpack.c.h.b16 %v163
  %v848 = vunpack.c.l.b16 %v164
  %v849 = vunpack.c.h.b16 %v164
  %v850 = vunpack.c.l.b16 %v165
  %v851 = vunpack.c.h.b16 %v165
  %v852 = vunpack.c.l.b16 %v166
  %v853 = vunpack.c.h.b16 %v166
  %v854 = vunpack.c.l.b16 %v167
  %v855 = vunpack.c.h.b16 %v167
  %v856 = vunpack.c.l.b16 %v168
  %v857 = vunpack.c.h.b16 %v168
  %v858 = vunpack.c.l.b16 %v169
  %v859 = vunpack.c.h.b16 %v169
  %v860 = vunpack.c.l.b16 %v170
  %v861 = vunpack.c.h.b16 %v170
  %v862 = vunpack.c.l.b16 %v171
  %v863 = vunpack.c.h.b16 %v171
  %v864 = vunpack.c.l.b16 %v172
  %v865 = vunpack.c.h.b16 %v172
  %v866 = vunpack.c.l.b16 %v173
  %v867 = vunpack.c.h.b16 %v173
  %v868 = vunpack.c.l.b16 %v174
  %v869 = vunpack.c.h.b16 %v174
  %v870 = vunpack.c.l.b16 %v175
  %v871 = vunpack.c.h.b16 %v175
  %v872 = vunpack.c.l.b16 %v176
  %v873 = vunpack.c.h.b16 %v176
  %v874 = vunpack.c.l.b16 %v177
  %v875 = vunpack.c.h.b16 %v177
  %v876 = vunpack.c.l.b16 %v178
  %v877 = vunpack.c.h.b16 %v178
  %v878 = vunpack.c.l.b16 %v179
  %v879 = vunpack.c.h.b16 %v179
  %v880 = vunpack.c.l.b16 %v180
  %v881 = vunpack.c.h.b16 %v180
  %v882 = vunpack.c.l.b16 %v181
  %v883 = vunpack.c.h.b16 %v181
  %v884 = vunpack.c.l.b16 %v182
  %v885 = vunpack.c.h.b16 %v182
  %v886 = vunpack.c.l.b16 %v183
  %v887 = vunpack.c.h.b16 %v183
  %v888 = vunpack.c.l.b16 %v184
  %v889 = vunpack.c.h.b16 %v184
  %v890 = vunpack.c.l.b16 %v185
  %v891 = vunpack.c.h.b16 %v185
  %v892 = vunpack.c.l.b16 %v186
  %v893 = vunpack.c.h.b16 %v186
  %v894 = vunpack.c.l.b16 %v187
  %v895 = vunpack.c.h.b16 %v187
  %v896 = vunpack.c.l.b16 %v188
  %v897 = vunpack.c.h.b16 %v188
  %v898 = vunpack.c.l.b16 %v189
  %v899 = vunpack.c.h.b16 %v189
  %v900 = vunpack.c.l.b16 %v190
  %v901 = vunpack.c.h.b16 %v190
  %v902 = vunpack.c.l.b16 %v191
  %v903 = vunpack.c.h.b16 %v191
  %v904 = vunpack.c.l.b16 %v192
  %v905 = vunpack.c.h.b16 %v192
  %v906 = vunpack.c.l.b16 %v193
  %v907 = vunpack.c.h.b16 %v193
  %v908 = vunpack.c.l.b16 %v194
  %v909 = vunpack.c.h.b16 %v194
  %v910 = vunpack.c.l.b16 %v195
  %v911 = vunpack.c.h.b16 %v195
  %v912 = vunpack.c.l.b16 %v196
  %v913 = vunpack.c.h.b16 %v196
  %v914 = vunpack.c.l.b16 %v197
  %v915 = vunpack.c.h.b16 %v197
  %v916 = vunpack.c.l.b16 %v198
  %v917 = vunpack.c.h.b16 %v198
  %v918 = vunpack.c.l.b16 %v199
  %v919 = vunpack.c.h.b16 %v199
  %v920 = vunpack.c.l.b16 %v200
  %v921 = vunpack.c.h.b16 %v200
  %v922 = vunpack.c.l.b16 %v201
  %v923 = vunpack.c.h.b16 %v201
  %v924 = vunpack.c.l.b16 %v202
  %v925 = vunpack.c.h.b16 %v202
  %v926 = vunpack.c.l.b16 %v203
  %v927 = vunpack.c.h.b16 %v203
  %v928 = vunpack.c.l.b16 %v204
  %v929 = vunpack.c.h.b16 %v204
  %v930 = vunpack.c.l.b16 %v205
  %v931 = vunpack.c.h.b16 %v205
  %v932 = vunpack.c.l.b16 %v206
  %v933 = vunpack.c.h.b16 %v206
  %v934 = vunpack.c.l.b16 %v207
  %v935 = vunpack.c.h.b16 %v207
  %v936 = vunpack.c.l.b16 %v208
  %v937 = vunpack.c.h.b16 %v208
  %v938 = vunpack.c.l.b16 %v209
  %v939 = vunpack.c.h.b16 %v209
  %v940 = vunpack.c.l.b16 %v210
  %v941 = vunpack.c.h.b16 %v210
  %v942 = vunpack.c.l.b16 %v211
  %v943 = vunpack.c.h.b16 %v211
  %v944 = vunpack.c.l.b16 %v212
  %v945 = vunpack.c.h.b16 %v212
  %v946 = vunpack.c.l.b16 %v213
  %v947 = vunpack.c.h.b16 %v213
  %v948 = vunpack.c.l.b16 %v214
  %v949 = vunpack.c.h.b16 %v214
  %v950 = vunpack.c.l.b16 %v215
  %v951 = vunpack.c.h.b16 %v215
  %v952 = vunpack.c.l.b16 %v216
  %v953 = vunpack.c.h.b16 %v216
  %v954 = vunpack.c.l.b16 %v217
  %v955 = vunpack.c.h.b16 %v217
  %v956 = vunpack.c.l.b16 %v218
  %v957 = vunpack.c.h.b16 %v218
  %v958 = vunpack.c.l.b16 %v219
  %v959 = vunpack.c.h.b16 %v219
  %v960 = vunpack.c.l.b16 %v220
  %v961 = vunpack.c.h.b16 %v220
  %v962 = vunpack.c.l.b16 %v221
  %v963 = vunpack.c.h.b16 %v221
  %v964 = vunpack.c.l.b16 %v222
  %v965 = vunpack.c.h.b16 %v222
  %v966 = vunpack.c.l.b16 %v223
  %v967 = vunpack.c.h.b16 %v223
  %v968 = vunpack.c.l.b16 %v224
  %v969 = vunpack.c.h.b16 %v224
  %v970 = vunpack.c.l.b16 %v225
  %v971 = vunpack.c.h.b16 %v225
  %v972 = vunpack.c.l.b16 %v226
  %v973 = vunpack.c.h.b16 %v226
  %v974 = vunpack.c.l.b16 %v227
  %v975 = vunpack.c.h.b16 %v227
  %v976 = vunpack.c.l.b16 %v228
  %v977 = vunpack.c.h.b16 %v228
  %v978 = vunpack.c.l.b16 %v229
  %v979 = vunpack.c.h.b16 %v229
  %v980 = vunpack.c.l.b16 %v230
  %v981 = vunpack.c.h.b16 %v230
  %v982 = vunpack.c.l.b16 %v231
  %v983 = vunpack.c.h.b16 %v231
  %v984 = vunpack.c.l.b16 %v232
  %v985 = vunpack.c.h.b16 %v232
  %v986 = vunpack.c.l.b16 %v233
  %v987 = vunpack.c.h.b16 %v233
  %v988 = vunpack.c.l.b16 %v234
  %v989 = vunpack.c.h.b16 %v234
  %v990 = vunpack.c.l.b16 %v235
  %v991 = vunpack.c.h.b16 %v235
  %v992 = vunpack.c.l.b16 %v236
  %v993 = vunpack.c.h.b16 %v236
  %v994 = vunpack.c.l.b16 %v237
  %v995 = vunpack.c.h.b16 %v237
  %v996 = vunpack.c.l.b16 %v238
  %v997 = vunpack.c.h.b16 %v238
  %v998 = vunpack.c.l.b16 %v239
  %v999 = vunpack.c.h.b16 %v239
  %v1000 = vunpack.c.l.b16 %v240
  %v1001 = vunpack.c.h.b16 %v240
  %v1002 = vunpack.c.l.b16 %v241
  %v1003 = vunpack.c.h.b16 %v241
  %v1004 = vunpack.c.l.b16 %v242
  %v1005 = vunpack.c.h.b16 %v242
  %v1006 = vunpack.c.l.b16 %v243
  %v1007 = vunpack.c.h.b16 %v243
  %v1008 = vunpack.c.l.b16 %v244
  %v1009 = vunpack.c.h.b16 %v244
  %v1010 = vunpack.c.l.b16 %v245
  %v1011 = vunpack.c.h.b16 %v245
  %v1012 = vunpack.c.l.b16 %v246
  %v1013 = vunpack.c.h.b16 %v246
  %v1014 = vunpack.c.l.b16 %v247
  %v1015 = vunpack.c.h.b16 %v247
  %v1016 = vunpack.c.l.b16 %v248
  %v1017 = vunpack.c.h.b16 %v248
  %v1018 = vunpack.c.l.b16 %v249
  %v1019 = vunpack.c.h.b16 %v249
  %v1020 = vunpack.c.l.b16 %v250
  %v1021 = vunpack.c.h.b16 %v250
  %v1022 = vunpack.c.l.b16 %v251
  %v1023 = vunpack.c.h.b16 %v251
  %v1024 = vunpack.c.l.b16 %v252
  %v1025 = vunpack.c.h.b16 %v252
  %v1026 = vunpack.c.l.b16 %v253
  %v1027 = vunpack.c.h.b16 %v253
  %v1028 = vunpack.c.l.b16 %v254
  %v1029 = vunpack.c.h.b16 %v254
  %v1030 = vunpack.c.l.b16 %v255
  %v1031 = vunpack.c.h.b16 %v255
  %v1032 = vunpack.c.l.b16 %v256
  %v1033 = vunpack.c.h.b16 %v256
  %v1034 = vunpack.c.l.b16 %v257
  %v1035 = vunpack.c.h.b16 %v257
  %v1036 = vunpack.c.l.b16 %v258
  %v1037 = vunpack.c.h.b16 %v258
  %v1038 = vunpack.c.l.b16 %v259
  %v1039 = vunpack.c.h.b16 %v259
  %v1040 = vunpack.c.l.b16 %v260
  %v1041 = vunpack.c.h.b16 %v260
  %v1042 = vunpack.c.l.b16 %v261
  %v1043 = vunpack.c.h.b16 %v261
  %v1044 = vunpack.c.l.b16 %v262
  %v1045 = vunpack.c.h.b16 %v262
  %v1046 = vunpack.c.l.b16 %v263
  %v1047 = vunpack.c.h.b16 %v263
  %v1048 = vunpack.c.l.b16 %v264
  %v1049 = vunpack.c.h.b16 %v264
  %v1050 = vunpack.c.l.b16 %v265
  %v1051 = vunpack.c.h.b16 %v265
  %v1052 = vunpack.c.l.b16 %v266
  %v1053 = vunpack.c.h.b16 %v266
  %v1054 = vunpack.c.l.b16 %v267
  %v1055 = vunpack.c.h.b16 %v267
  %v1056 = vunpack.c.l.b16 %v268
  %v1057 = vunpack.c.h.b16 %v268
  %v1058 = vunpack.c.l.b16 %v269
  %v1059 = vunpack.c.h.b16 %v269
  %v1060 = vunpack.c.l.b16 %v270
  %v1061 = vunpack.c.h.b16 %v270
  %v1062 = vpack.c.b16 %v552, %v550
  %v1063 = vpack.c.b16 %v553, %v551
  %v1064 = vpack.c.b16 %v556, %v554
  %v1065 = vpack.c.b16 %v557, %v555
  %v1066 = vpack.c.b16 %v560, %v558
  %v1067 = vpack.c.b16 %v561, %v559
  %v1068 = vpack.c.b16 %v564, %v562
  %v1069 = vpack.c.b16 %v565, %v563
  %v1070 = vpack.c.b16 %v568, %v566
  %v1071 = vpack.c.b16 %v569, %v567
  %v1072 = vpack.c.b16 %v572, %v570
  %v1073 = vpack.c.b16 %v573, %v571
  %v1074 = vpack.c.b16 %v576, %v574
  %v1075 = vpack.c.b16 %v577, %v575
  %v1076 = vpack.c.b16 %v580, %v578
  %v1077 = vpack.c.b16 %v581, %v579
  %v1078 = vpack.c.b16 %v584, %v582
  %v1079 = vpack.c.b16 %v585, %v583
  %v1080 = vpack.c.b16 %v588, %v586
  %v1081 = vpack.c.b16 %v589, %v587
  %v1082 = vpack.c.b16 %v592, %v590
  %v1083 = vpack.c.b16 %v593, %v591
  %v1084 = vpack.c.b16 %v596, %v594
  %v1085 = vpack.c.b16 %v597, %v595
  %v1086 = vpack.c.b16 %v600, %v598
  %v1087 = vpack.c.b16 %v601, %v599
  %v1088 = vpack.c.b16 %v604, %v602
  %v1089 = vpack.c.b16 %v605, %v603
  %v1090 = vpack.c.b16 %v608, %v606
  %v1091 = vpack.c.b16 %v609, %v607
  %v1092 = vpack.c.b16 %v612, %v610
  %v1093 = vpack.c.b16 %v613, %v611
  %v1094 = vpack.c.b16 %v616, %v614
  %v1095 = vpack.c.b16 %v617, %v615
  %v1096 = vpack.c.b16 %v620, %v618
  %v1097 = vpack.c.b16 %v621, %v619
  %v1098 = vpack.c.b16 %v624, %v622
  %v1099 = vpack.c.b16 %v625, %v623
  %v1100 = vpack.c.b16 %v628, %v626
  %v1101 = vpack.c.b16 %v629, %v627
  %v1102 = vpack.c.b16 %v632, %v630
  %v1103 = vpack.c.b16 %v633, %v631
  %v1104 = vpack.c.b16 %v636, %v634
  %v1105 = vpack.c.b16 %v637, %v635
  %v1106 = vpack.c.b16 %v640, %v638
  %v1107 = vpack.c.b16 %v641, %v639
  %v1108 = vpack.c.b16 %v644, %v642
  %v1109 = vpack.c.b16 %v645, %v643
  %v1110 = vpack.c.b16 %v648, %v646
  %v1111 = vpack.c.b16 %v649, %v647
  %v1112 = vpack.c.b16 %v652, %v650
  %v1113 = vpack.c.b16 %v653, %v651
  %v1114 = vpack.c.b16 %v656, %v654
  %v1115 = vpack.c.b16 %v657, %v655
  %v1116 = vpack.c.b16 %v660, %v658
  %v1117 = vpack.c.b16 %v661, %v659
  %v1118 = vpack.c.b16 %v664, %v662
  %v1119 = vpack.c.b16 %v665, %v663
  %v1120 = vpack.c.b16 %v668, %v666
  %v1121 = vpack.c.b16 %v669, %v667
  %v1122 = vpack.c.b16 %v672, %v670
  %v1123 = vpack.c.b16 %v673, %v671
  %v1124 = vpack.c.b16 %v676, %v674
  %v1125 = vpack.c.b16 %v677, %v675
  %v1126 = vpack.c.b16 %v680, %v678
  %v1127 = vpack.c.b16 %v681, %v679
  %v1128 = vpack.c.b16 %v684, %v682
  %v1129 = vpack.c.b16 %v685, %v683
  %v1130 = vpack.c.b16 %v688, %v686
  %v1131 = vpack.c.b16 %v689, %v687
  %v1132 = vpack.c.b16 %v692, %v690
  %v1133 = vpack.c.b16 %v693, %v691
  %v1134 = vpack.c.b16 %v696, %v694
  %v1135 = vpack.c.b16 %v697, %v695
  %v1136 = vpack.c.b16 %v700, %v698
  %v1137 = vpack.c.b16 %v701, %v699
  %v1138 = vpack.c.b16 %v704, %v702
  %v1139 = vpack.c.b16 %v705, %v703
  %v1140 = vpack.c.b16 %v708, %v706
  %v1141 = vpack.c.b16 %v709, %v707
  %v1142 = vpack.c.b16 %v712, %v710
  %v1143 = vpack.c.b16 %v713, %v711
  %v1144 = vpack.c.b16 %v716, %v714
  %v1145 = vpack.c.b16 %v717, %v715
  %v1146 = vpack.c.b16 %v720, %v718
  %v1147 = vpack.c.b16 %v721, %v719
  %v1148 = vpack.c.b16 %v724, %v722
  %v1149 = vpack.c.b16 %v725, %v723
  %v1150 = vpack.c.b16 %v728, %v726
  %v1151 = vpack.c.b16 %v729, %v727
  %v1152 = vpack.c.b16 %v732, %v730
  %v1153 = vpack.c.b16 %v733, %v731
  %v1154 = vpack.c.b16 %v736, %v734
  %v1155 = vpack.c.b16 %v737, %v735
  %v1156 = vpack.c.b16 %v740, %v738
  %v1157 = vpack.c.b16 %v741, %v739
  %v1158 = vpack.c.b16 %v744, %v742
  %v1159 = vpack.c.b16 %v745, %v743
  %v1160 = vpack.c.b16 %v748, %v746
  %v1161 = vpack.c.b16 %v749, %v747
  %v1162 = vpack.c.b16 %v752, %v750
  %v1163 = vpack.c.b16 %v753, %v751
  %v1164 = vpack.c.b16 %v756, %v754
  %v1165 = vpack.c.b16 %v757, %v755
  %v1166 = vpack.c.b16 %v760, %v758
  %v1167 = vpack.c.b16 %v761, %v759
  %v1168 = vpack.c.b16 %v764, %v762
  %v1169 = vpack.c.b16 %v765, %v763
  %v1170 = vpack.c.b16 %v768, %v766
  %v1171 = vpack.c.b16 %v769, %v767
  %v1172 = vpack.c.b16 %v772, %v770
  %v1173 = vpack.c.b16 %v773, %v771
  %v1174 = vpack.c.b16 %v776, %v774
  %v1175 = vpack.c.b16 %v777, %v775
  %v1176 = vpack.c.b16 %v780, %v778
  %v1177 = vpack.c.b16 %v781, %v779
  %v1178 = vpack.c.b16 %v784, %v782
  %v1179 = vpack.c.b16 %v785, %v783
  %v1180 = vpack.c.b16 %v788, %v786
  %v1181 = vpack.c.b16 %v789, %v787
  %v1182 = vpack.c.b16 %v792, %v790
  %v1183 = vpack.c.b16 %v793, %v791
  %v1184 = vpack.c.b16 %v796, %v794
  %v1185 = vpack.c.b16 %v797, %v795
  %v1186 = vpack.c.b16 %v800, %v798
  %v1187 = vpack.c.b16 %v801, %v799
  %v1188 = vpack.c.b16 %v804, %v802
  %v1189 = vpack.c.b16 %v805, %v803
  %v1190 = vpack.c.b16 %v808, %v806
  %v1191 = vpack.c.b16 %v809, %v807
  %v1192 = vpack.c.b16 %v812, %v810
  %v1193 = vpack.c.b16 %v813, %v811
  %v1194 = vpack.c.b16 %v816, %v814
  %v1195 = vpack.c.b16 %v817, %v815
  %v1196 = vpack.c.b16 %v820, %v818
  %v1197 = vpack.c.b16 %v821, %v819
  %v1198 = vpack.c.b16 %v824, %v822
  %v1199 = vpack.c.b16 %v825, %v823
  %v1200 = vpack.c.b16 %v828, %v826
  %v1201 = vpack.c.b16 %v829, %v827
  %v1202 = vpack.c.b16 %v832, %v830
  %v1203 = vpack.c.b16 %v833, %v831
  %v1204 = vpack.c.b16 %v836, %v834
  %v1205 = vpack.c.b16 %v837, %v835
  %v1206 = vpack.c.b16 %v840, %v838
  %v1207 = vpack.c.b16 %v841, %v839
  %v1208 = vpack.c.b16 %v844, %v842
  %v1209 = vpack.c.b16 %v845, %v843
  %v1210 = vpack.c.b16 %v848, %v846
  %v1211 = vpack.c.b16 %v849, %v847
  %v1212 = vpack.c.b16 %v852, %v850
  %v1213 = vpack.c.b16 %v853, %v851
  %v1214 = vpack.c.b16 %v856, %v854
  %v1215 = vpack.c.b16 %v857, %v855
  %v1216 = vpack.c.b16 %v860, %v858
  %v1217 = vpack.c.b16 %v861, %v859
  %v1218 = vpack.c.b16 %v864, %v862
  %v1219 = vpack.c.b16 %v865, %v863
  %v1220 = vpack.c.b16 %v868, %v866
  %v1221 = vpack.c.b16 %v869, %v867
  %v1222 = vpack.c.b16 %v872, %v870
  %v1223 = vpack.c.b16 %v873, %v871
  %v1224 = vpack.c.b16 %v876, %v874
  %v1225 = vpack.c.b16 %v877, %v875
  %v1226 = vpack.c.b16 %v880, %v878
  %v1227 = vpack.c.b16 %v881, %v879
  %v1228 = vpack.c.b16 %v884, %v882
  %v1229 = vpack.c.b16 %v885, %v883
  %v1230 = vpack.c.b16 %v888, %v886
  %v1231 = vpack.c.b16 %v889, %v887
  %v1232 = vpack.c.b16 %v892, %v890
  %v1233 = vpack.c.b16 %v893, %v891
  %v1234 = vpack.c.b16 %v896, %v894
  %v1235 = vpack.c.b16 %v897, %v895
  %v1236 = vpack.c.b16 %v900, %v898
  %v1237 = vpack.c.b16 %v901, %v899
  %v1238 = vpack.c.b16 %v904, %v902
  %v1239 = vpack.c.b16 %v905, %v903
  %v1240 = vpack.c.b16 %v908, %v906
  %v1241 = vpack.c.b16 %v909, %v907
  %v1242 = vpack.c.b16 %v912, %v910
  %v1243 = vpack.c.b16 %v913, %v911
  %v1244 = vpack.c.b16 %v916, %v914
  %v1245 = vpack.c.b16 %v917, %v915
  %v1246 = vpack.c.b16 %v920, %v918
  %v1247 = vpack.c.b16 %v921, %v919
  %v1248 = vpack.c.b16 %v924, %v922
  %v1249 = vpack.c.b16 %v925, %v923
  %v1250 = vpack.c.b16 %v928, %v926
  %v1251 = vpack.c.b16 %v929, %v927
  %v1252 = vpack.c.b16 %v932, %v930
  %v1253 = vpack.c.b16 %v933, %v931
  %v1254 = vpack.c.b16 %v936, %v934
  %v1255 = vpack.c.b16 %v937, %v935
  %v1256 = vpack.c.b16 %v940, %v938
  %v1257 = vpack.c.b16 %v941, %v939
  %v1258 = vpack.c.b16 %v944, %v942
  %v1259 = vpack.c.b16 %v945, %v943
  %v1260 = vpack.c.b16 %v948, %v946
  %v1261 = vpack.c.b16 %v949, %v947
  %v1262 = vpack.c.b16 %v952, %v950
  %v1263 = vpack.c.b16 %v953, %v951
  %v1264 = vpack.c.b16 %v956, %v954
  %v1265 = vpack.c.b16 %v957, %v955
  %v1266 = vpack.c.b16 %v960, %v958
  %v1267 = vpack.c.b16 %v961, %v959
  %v1268 = vpack.c.b16 %v964, %v962
  %v1269 = vpack.c.b16 %v965, %v963
  %v1270 = vpack.c.b16 %v968, %v966
  %v1271 = vpack.c.b16 %v969, %v967
  %v1272 = vpack.c.b16 %v972, %v970
  %v1273 = vpack.c.b16 %v973, %v971
  %v1274 = vpack.c.b16 %v976, %v974
  %v1275 = vpack.c.b16 %v977, %v975
  %v1276 = vpack.c.b16 %v980, %v978
  %v1277 = vpack.c.b16 %v981, %v979
  %v1278 = vpack.c.b16 %v984, %v982
  %v1279 = vpack.c.b16 %v985, %v983
  %v1280 = vpack.c.b16 %v988, %v986
  %v1281 = vpack.c.b16 %v989, %v987
  %v1282 = vpack.c.b16 %v992, %v990
  %v1283 = vpack.c.b16 %v993, %v991
  %v1284 = vpack.c.b16 %v996, %v994
  %v1285 = vpack.c.b16 %v997, %v995
  %v1286 = vpack.c.b16 %v1000, %v998
  %v1287 = vpack.c.b16 %v1001, %v999
  %v1288 = vpack.c.b16 %v1004, %v1002
  %v1289 = vpack.c.b16 %v1005, %v1003
  %v1290 = vpack.c.b16 %v1008, %v1006
  %v1291 = vpack.c.b16 %v1009, %v1007
  %v1292 = vpack.c.b16 %v1012, %v1010
  %v1293 = vpack.c.b16 %v1013, %v1011
  %v1294 = vpack.c.b16 %v1016, %v1014
  %v1295 = vpack.c.b16 %v1017, %v1015
  %v1296 = vpack.c.b16 %v1020, %v1018
  %v1297 = vpack.c.b16 %v1021, %v1019
  %v1298 = vpack.c.b16 %v1024, %v1022
  %v1299 = vpack.c.b16 %v1025, %v1023
  %v1300 = vpack.c.b16 %v1028, %v1026
  %v1301 = vpack.c.b16 %v1029, %v1027
  %v1302 = vpack.c.b16 %v1032, %v1030
  %v1303 = vpack.c.b16 %v1033, %v1031
  %v1304 = vpack.c.b16 %v1036, %v1034
  %v1305 = vpack.c.b16 %v1037, %v1035
  %v1306 = vpack.c.b16 %v1040, %v1038
  %v1307 = vpack.c.b16 %v1041, %v1039
  %v1308 = vpack.c.b16 %v1044, %v1042
  %v1309 = vpack.c.b16 %v1045, %v1043
  %v1310 = vpack.c.b16 %v1048, %v1046
  %v1311 = vpack.c.b16 %v1049, %v1047
  %v1312 = vpack.c.b16 %v1052, %v1050
  %v1313 = vpack.c.b16 %v1053, %v1051
  %v1314 = vpack.c.b16 %v1056, %v1054
  %v1315 = vpack.c.b16 %v1057, %v1055
  %v1316 = vpack.c.b16 %v1060, %v1058
  %v1317 = vpack.c.b16 %v1061, %v1059
  %v1465 = vunpack.c.l.b16 %v271
  %v1466 = vunpack.c.l.b16 %v272
  %v1467 = vunpack.c.l.b16 %v273
  %v1468 = vunpack.c.l.b16 %v274
  %v1469 = vunpack.c.l.b16 %v275
  %v1470 = vunpack.c.l.b16 %v276
  %v1471 = vunpack.c.l.b16 %v277
  %v1472 = vunpack.c.l.b16 %v278
  %v1473 = vunpack.c.l.b16 %v279
  %v1474 = vunpack.c.l.b16 %v280
  %v1475 = vunpack.c.l.b16 %v281
  %v1476 = vunpack.c.l.b16 %v282
  %v1477 = vunpack.c.l.b16 %v283
  %v1478 = vunpack.c.l.b16 %v284
  %v1479 = vunpack.c.l.b16 %v285
  %v1480 = vunpack.c.l.b16 %v286
  %v1481 = vunpack.c.l.b16 %v287
  %v1482 = vunpack.c.l.b16 %v288
  %v1483 = vunpack.c.l.b16 %v289
  %v1484 = vpack.c.b16 %v1466, %v1465
  %v1485 = vpack.c.b16 %v1468, %v1467
  %v1486 = vpack.c.b16 %v1470, %v1469
  %v1487 = vpack.c.b16 %v1472, %v1471
  %v1488 = vpack.c.b16 %v1474, %v1473
  %v1489 = vpack.c.b16 %v1476, %v1475
  %v1490 = vpack.c.b16 %v1478, %v1477
  %v1491 = vpack.c.b16 %v1480, %v1479
  %v1492 = vpack.c.b16 %v1482, %v1481
  %v1493 = vpack.c.b16 %v1483, %v1483
  %vm1503 = vcmask 154624
  %v1505 = vsel %vm1503, %v1063, 0
  %v1508 = vsel %vm1503, %v1065, 0
  %v1511 = vsel %vm1503, %v1067, 0
  %v1514 = vsel %vm1503, %v1069, 0
  %v1517 = vsel %vm1503, %v1071, 0
  %v1520 = vsel %vm1503, %v1073, 0
  %v1523 = vsel %vm1503, %v1075, 0
  %v1526 = vsel %vm1503, %v1077, 0
  %v1529 = vsel %vm1503, %v1079, 0
  %v1532 = vsel %vm1503, %v1081, 0
  %v1535 = vsel %vm1503, %v1083, 0
  %v1538 = vsel %vm1503, %v1085, 0
  %v1541 = vsel %vm1503, %v1087, 0
  %v1544 = vsel %vm1503, %v1089, 0
  %v1547 = vsel %vm1503, %v1091, 0
  %v1550 = vsel %vm1503, %v1093, 0
  %v1553 = vsel %vm1503, %v1095, 0
  %v1556 = vsel %vm1503, %v1097, 0
  %v1559 = vsel %vm1503, %v1099, 0
  %v1562 = vsel %vm1503, %v1101, 0
  %v1565 = vsel %vm1503, %v1103, 0
  %v1568 = vsel %vm1503, %v1105, 0
  %v1571 = vsel %vm1503, %v1107, 0
  %v1574 = vsel %vm1503, %v1109, 0
  %v1577 = vsel %vm1503, %v1111, 0
  %v1580 = vsel %vm1503, %v1113, 0
  %v1583 = vsel %vm1503, %v1115, 0
  %v1586 = vsel %vm1503, %v1117, 0
  %v1589 = vsel %vm1503, %v1119, 0
  %v1592 = vsel %vm1503, %v1121, 0
  %v1595 = vsel %vm1503, %v1123, 0
  %v1598 = vsel %vm1503, %v1125, 0
  %v1601 = vsel %vm1503, %v1127, 0
  %v1604 = vsel %vm1503, %v1129, 0
  %v1607 = vsel %vm1503, %v1131, 0
  %v1610 = vsel %vm1503, %v1133, 0
  %v1613 = vsel %vm1503, %v1135, 0
  %v1616 = vsel %vm1503, %v1137, 0
  %v1619 = vsel %vm1503, %v1139, 0
  %v1622 = vsel %vm1503, %v1141, 0
  %v1625 = vsel %vm1503, %v1143, 0
  %v1628 = vsel %vm1503, %v1145, 0
  %v1631 = vsel %vm1503, %v1147, 0
  %v1634 = vsel %vm1503, %v1149, 0
  %v1637 = vsel %vm1503, %v1151, 0
  %v1640 = vsel %vm1503, %v1153, 0
  %v1643 = vsel %vm1503, %v1155, 0
  %v1646 = vsel %vm1503, %v1157, 0
  %v1649 = vsel %vm1503, %v1159, 0
  %v1652 = vsel %vm1503, %v1161, 0
  %v1655 = vsel %vm1503, %v1163, 0
  %v1658 = vsel %vm1503, %v1165, 0
  %v1661 = vsel %vm1503, %v1167, 0
  %v1664 = vsel %vm1503, %v1169, 0
  %v1667 = vsel %vm1503, %v1171, 0
  %v1670 = vsel %vm1503, %v1173, 0
  %v1673 = vsel %vm1503, %v1175, 0
  %v1676 = vsel %vm1503, %v1177, 0
  %v1679 = vsel %vm1503, %v1179, 0
  %v1682 = vsel %vm1503, %v1181, 0
  %v1685 = vsel %vm1503, %v1183, 0
  %v1688 = vsel %vm1503, %v1185, 0
  %v1691 = vsel %vm1503, %v1187, 0
  %v1694 = vsel %vm1503, %v1189, 0
  %v1697 = vsel %vm1503, %v1191, 0
  %v1700 = vsel %vm1503, %v1193, 0
  %v1703 = vsel %vm1503, %v1195, 0
  %v1706 = vsel %vm1503, %v1197, 0
  %v1709 = vsel %vm1503, %v1199, 0
  %v1712 = vsel %vm1503, %v1201, 0
  %v1715 = vsel %vm1503, %v1203, 0
  %v1718 = vsel %vm1503, %v1205, 0
  %v1721 = vsel %vm1503, %v1207, 0
  %v1724 = vsel %vm1503, %v1209, 0
  %v1727 = vsel %vm1503, %v1211, 0
  %v1730 = vsel %vm1503, %v1213, 0
  %v1733 = vsel %vm1503, %v1215, 0
  %v1736 = vsel %vm1503, %v1217, 0
  %v1739 = vsel %vm1503, %v1219, 0
  %v1742 = vsel %vm1503, %v1221, 0
  %v1745 = vsel %vm1503, %v1223, 0
  %v1748 = vsel %vm1503, %v1225, 0
  %v1751 = vsel %vm1503, %v1227, 0
  %v1754 = vsel %vm1503, %v1229, 0
  %v1757 = vsel %vm1503, %v1231, 0
  %v1760 = vsel %vm1503, %v1233, 0
  %v1763 = vsel %vm1503, %v1235, 0
  %v1766 = vsel %vm1503, %v1237, 0
  %v1769 = vsel %vm1503, %v1239, 0
  %v1772 = vsel %vm1503, %v1241, 0
  %v1775 = vsel %vm1503, %v1243, 0
  %v1778 = vsel %vm1503, %v1245, 0
  %v1781 = vsel %vm1503, %v1247, 0
  %v1784 = vsel %vm1503, %v1249, 0
  %v1787 = vsel %vm1503, %v1251, 0
  %v1790 = vsel %vm1503, %v1253, 0
  %v1793 = vsel %vm1503, %v1255, 0
  %v1796 = vsel %vm1503, %v1257, 0
  %v1799 = vsel %vm1503, %v1259, 0
  %v1802 = vsel %vm1503, %v1261, 0
  %v1805 = vsel %vm1503, %v1263, 0
  %v1808 = vsel %vm1503, %v1265, 0
  %v1811 = vsel %vm1503, %v1267, 0
  %v1814 = vsel %vm1503, %v1269, 0
  %v1817 = vsel %vm1503, %v1271, 0
  %v1820 = vsel %vm1503, %v1273, 0
  %v1823 = vsel %vm1503, %v1275, 0
  %v1826 = vsel %vm1503, %v1277, 0
  %v1829 = vsel %vm1503, %v1279, 0
  %v1832 = vsel %vm1503, %v1281, 0
  %v1835 = vsel %vm1503, %v1283, 0
  %v1838 = vsel %vm1503, %v1285, 0
  %v1841 = vsel %vm1503, %v1287, 0
  %v1844 = vsel %vm1503, %v1289, 0
  %v1847 = vsel %vm1503, %v1291, 0
  %v1850 = vsel %vm1503, %v1293, 0
  %v1853 = vsel %vm1503, %v1295, 0
  %v1856 = vsel %vm1503, %v1297, 0
  %v1859 = vsel %vm1503, %v1299, 0
  %v1862 = vsel %vm1503, %v1301, 0
  %v1865 = vsel %vm1503, %v1303, 0
  %v1868 = vsel %vm1503, %v1305, 0
  %v1871 = vsel %vm1503, %v1307, 0
  %v1874 = vsel %vm1503, %v1309, 0
  %v1877 = vsel %vm1503, %v1311, 0
  %v1880 = vsel %vm1503, %v1313, 0
  %v1883 = vsel %vm1503, %v1315, 0
  %v1886 = vsel %vm1503, %v1317, 0
  %vm1888 = vcmask 1040384
  %vm1889 = vcmask 1041408
  %v1890 = vsel %vm1888, 4294967295, 65535
  %v1891 = vsel %vm1889, %v1890, 0
  %v1893 = vand.u32 %v1493, %v1891
  %1895 = vmatpush.bf16.msra.mxu0 %v1491
  %1896 = vmatpush.bf16.msra.mxu0 %v1490
  %1897 = vmatpush.bf16.msra.mxu0 %v1489
  %1898 = vmatpush.bf16.msra.mxu0 %v1488
  %1899 = vmatpush.bf16.msra.mxu0 %v1487
  %1900 = vmatpush.bf16.msra.mxu0 %v1486
  %1901 = vmatpush.bf16.msra.mxu0 %v1485
  %1902 = vmatpush.bf16.msra.mxu0 %v1484
  %1903 = vmatmul.bf16.gmra.mxu0 %v1062
  %v1904 = vpop.f32.mrf.mxu0
  %v1905 = vadd.f32 %v292, %v1904
  %v1906 = vpop.f32.mrf.mxu0
  %v1907 = vadd.f32 %v292, %v1906
  %1908 = vmatmul.bf16.gmra.mxu0 %v1064
  %v1909 = vpop.f32.mrf.mxu0
  %v1910 = vadd.f32 %v292, %v1909
  %v1911 = vpop.f32.mrf.mxu0
  %v1912 = vadd.f32 %v292, %v1911
  %1913 = vmatmul.bf16.gmra.mxu0 %v1066
  %v1914 = vpop.f32.mrf.mxu0
  %v1915 = vadd.f32 %v292, %v1914
  %v1916 = vpop.f32.mrf.mxu0
  %v1917 = vadd.f32 %v292, %v1916
  %1918 = vmatmul.bf16.gmra.mxu0 %v1068
  %v1919 = vpop.f32.mrf.mxu0
  %v1920 = vadd.f32 %v292, %v1919
  %v1921 = vpop.f32.mrf.mxu0
  %v1922 = vadd.f32 %v292, %v1921
  %1923 = vmatmul.bf16.gmra.mxu0 %v1070
  %v1924 = vpop.f32.mrf.mxu0
  %v1925 = vadd.f32 %v292, %v1924
  %v1926 = vpop.f32.mrf.mxu0
  %v1927 = vadd.f32 %v292, %v1926
  %1928 = vmatmul.bf16.gmra.mxu0 %v1072
  %v1929 = vpop.f32.mrf.mxu0
  %v1930 = vadd.f32 %v292, %v1929
  %v1931 = vpop.f32.mrf.mxu0
  %v1932 = vadd.f32 %v292, %v1931
  %1933 = vmatmul.bf16.gmra.mxu0 %v1074
  %v1934 = vpop.f32.mrf.mxu0
  %v1935 = vadd.f32 %v292, %v1934
  %v1936 = vpop.f32.mrf.mxu0
  %v1937 = vadd.f32 %v292, %v1936
  %1938 = vmatmul.bf16.gmra.mxu0 %v1076
  %v1939 = vpop.f32.mrf.mxu0
  %v1940 = vadd.f32 %v292, %v1939
  %v1941 = vpop.f32.mrf.mxu0
  %v1942 = vadd.f32 %v292, %v1941
  %1943 = vmatmul.bf16.gmra.mxu0 %v1078
  %v1944 = vpop.f32.mrf.mxu0
  %v1945 = vadd.f32 %v292, %v1944
  %v1946 = vpop.f32.mrf.mxu0
  %v1947 = vadd.f32 %v292, %v1946
  %1948 = vmatmul.bf16.gmra.mxu0 %v1080
  %v1949 = vpop.f32.mrf.mxu0
  %v1950 = vadd.f32 %v292, %v1949
  %v1951 = vpop.f32.mrf.mxu0
  %v1952 = vadd.f32 %v292, %v1951
  %1953 = vmatmul.bf16.gmra.mxu0 %v1082
  %v1954 = vpop.f32.mrf.mxu0
  %v1955 = vadd.f32 %v292, %v1954
  %v1956 = vpop.f32.mrf.mxu0
  %v1957 = vadd.f32 %v292, %v1956
  %1958 = vmatmul.bf16.gmra.mxu0 %v1084
  %v1959 = vpop.f32.mrf.mxu0
  %v1960 = vadd.f32 %v292, %v1959
  %v1961 = vpop.f32.mrf.mxu0
  %v1962 = vadd.f32 %v292, %v1961
  %1963 = vmatmul.bf16.gmra.mxu0 %v1086
  %v1964 = vpop.f32.mrf.mxu0
  %v1965 = vadd.f32 %v292, %v1964
  %v1966 = vpop.f32.mrf.mxu0
  %v1967 = vadd.f32 %v292, %v1966
  %1968 = vmatmul.bf16.gmra.mxu0 %v1088
  %v1969 = vpop.f32.mrf.mxu0
  %v1970 = vadd.f32 %v292, %v1969
  %v1971 = vpop.f32.mrf.mxu0
  %v1972 = vadd.f32 %v292, %v1971
  %1973 = vmatmul.bf16.gmra.mxu0 %v1090
  %v1974 = vpop.f32.mrf.mxu0
  %v1975 = vadd.f32 %v292, %v1974
  %v1976 = vpop.f32.mrf.mxu0
  %v1977 = vadd.f32 %v292, %v1976
  %1978 = vmatmul.bf16.gmra.mxu0 %v1092
  %v1979 = vpop.f32.mrf.mxu0
  %v1980 = vadd.f32 %v292, %v1979
  %v1981 = vpop.f32.mrf.mxu0
  %v1982 = vadd.f32 %v292, %v1981
  %1983 = vmatmul.bf16.gmra.mxu0 %v1094
  %v1984 = vpop.f32.mrf.mxu0
  %v1985 = vadd.f32 %v292, %v1984
  %v1986 = vpop.f32.mrf.mxu0
  %v1987 = vadd.f32 %v292, %v1986
  %1988 = vmatmul.bf16.gmra.mxu0 %v1096
  %v1989 = vpop.f32.mrf.mxu0
  %v1990 = vadd.f32 %v292, %v1989
  %v1991 = vpop.f32.mrf.mxu0
  %v1992 = vadd.f32 %v292, %v1991
  %1993 = vmatmul.bf16.gmra.mxu0 %v1098
  %v1994 = vpop.f32.mrf.mxu0
  %v1995 = vadd.f32 %v292, %v1994
  %v1996 = vpop.f32.mrf.mxu0
  %v1997 = vadd.f32 %v292, %v1996
  %1998 = vmatmul.bf16.gmra.mxu0 %v1100
  %v1999 = vpop.f32.mrf.mxu0
  %v2000 = vadd.f32 %v292, %v1999
  %v2001 = vpop.f32.mrf.mxu0
  %v2002 = vadd.f32 %v292, %v2001
  %2003 = vmatmul.bf16.gmra.mxu0 %v1102
  %v2004 = vpop.f32.mrf.mxu0
  %v2005 = vadd.f32 %v292, %v2004
  %v2006 = vpop.f32.mrf.mxu0
  %v2007 = vadd.f32 %v292, %v2006
  %2008 = vmatmul.bf16.gmra.mxu0 %v1104
  %v2009 = vpop.f32.mrf.mxu0
  %v2010 = vadd.f32 %v292, %v2009
  %v2011 = vpop.f32.mrf.mxu0
  %v2012 = vadd.f32 %v292, %v2011
  %2013 = vmatmul.bf16.gmra.mxu0 %v1106
  %v2014 = vpop.f32.mrf.mxu0
  %v2015 = vadd.f32 %v292, %v2014
  %v2016 = vpop.f32.mrf.mxu0
  %v2017 = vadd.f32 %v292, %v2016
  %2018 = vmatmul.bf16.gmra.mxu0 %v1108
  %v2019 = vpop.f32.mrf.mxu0
  %v2020 = vadd.f32 %v292, %v2019
  %v2021 = vpop.f32.mrf.mxu0
  %v2022 = vadd.f32 %v292, %v2021
  %2023 = vmatmul.bf16.gmra.mxu0 %v1110
  %v2024 = vpop.f32.mrf.mxu0
  %v2025 = vadd.f32 %v292, %v2024
  %v2026 = vpop.f32.mrf.mxu0
  %v2027 = vadd.f32 %v292, %v2026
  %2028 = vmatmul.bf16.gmra.mxu0 %v1112
  %v2029 = vpop.f32.mrf.mxu0
  %v2030 = vadd.f32 %v292, %v2029
  %v2031 = vpop.f32.mrf.mxu0
  %v2032 = vadd.f32 %v292, %v2031
  %2033 = vmatmul.bf16.gmra.mxu0 %v1114
  %v2034 = vpop.f32.mrf.mxu0
  %v2035 = vadd.f32 %v292, %v2034
  %v2036 = vpop.f32.mrf.mxu0
  %v2037 = vadd.f32 %v292, %v2036
  %2038 = vmatmul.bf16.gmra.mxu0 %v1116
  %v2039 = vpop.f32.mrf.mxu0
  %v2040 = vadd.f32 %v292, %v2039
  %v2041 = vpop.f32.mrf.mxu0
  %v2042 = vadd.f32 %v292, %v2041
  %2043 = vmatmul.bf16.gmra.mxu0 %v1118
  %v2044 = vpop.f32.mrf.mxu0
  %v2045 = vadd.f32 %v292, %v2044
  %v2046 = vpop.f32.mrf.mxu0
  %v2047 = vadd.f32 %v292, %v2046
  %2048 = vmatmul.bf16.gmra.mxu0 %v1120
  %v2049 = vpop.f32.mrf.mxu0
  %v2050 = vadd.f32 %v292, %v2049
  %v2051 = vpop.f32.mrf.mxu0
  %v2052 = vadd.f32 %v292, %v2051
  %2053 = vmatmul.bf16.gmra.mxu0 %v1122
  %v2054 = vpop.f32.mrf.mxu0
  %v2055 = vadd.f32 %v292, %v2054
  %v2056 = vpop.f32.mrf.mxu0
  %v2057 = vadd.f32 %v292, %v2056
  %2058 = vmatmul.bf16.gmra.mxu0 %v1124
  %v2059 = vpop.f32.mrf.mxu0
  %v2060 = vadd.f32 %v292, %v2059
  %v2061 = vpop.f32.mrf.mxu0
  %v2062 = vadd.f32 %v292, %v2061
  %2063 = vmatmul.bf16.gmra.mxu0 %v1126
  %v2064 = vpop.f32.mrf.mxu0
  %v2065 = vadd.f32 %v292, %v2064
  %v2066 = vpop.f32.mrf.mxu0
  %v2067 = vadd.f32 %v292, %v2066
  %2068 = vmatmul.bf16.gmra.mxu0 %v1128
  %v2069 = vpop.f32.mrf.mxu0
  %v2070 = vadd.f32 %v292, %v2069
  %v2071 = vpop.f32.mrf.mxu0
  %v2072 = vadd.f32 %v292, %v2071
  %2073 = vmatmul.bf16.gmra.mxu0 %v1130
  %v2074 = vpop.f32.mrf.mxu0
  %v2075 = vadd.f32 %v292, %v2074
  %v2076 = vpop.f32.mrf.mxu0
  %v2077 = vadd.f32 %v292, %v2076
  %2078 = vmatmul.bf16.gmra.mxu0 %v1132
  %v2079 = vpop.f32.mrf.mxu0
  %v2080 = vadd.f32 %v292, %v2079
  %v2081 = vpop.f32.mrf.mxu0
  %v2082 = vadd.f32 %v292, %v2081
  %2083 = vmatmul.bf16.gmra.mxu0 %v1134
  %v2084 = vpop.f32.mrf.mxu0
  %v2085 = vadd.f32 %v292, %v2084
  %v2086 = vpop.f32.mrf.mxu0
  %v2087 = vadd.f32 %v292, %v2086
  %2088 = vmatmul.bf16.gmra.mxu0 %v1136
  %v2089 = vpop.f32.mrf.mxu0
  %v2090 = vadd.f32 %v292, %v2089
  %v2091 = vpop.f32.mrf.mxu0
  %v2092 = vadd.f32 %v292, %v2091
  %2093 = vmatmul.bf16.gmra.mxu0 %v1138
  %v2094 = vpop.f32.mrf.mxu0
  %v2095 = vadd.f32 %v292, %v2094
  %v2096 = vpop.f32.mrf.mxu0
  %v2097 = vadd.f32 %v292, %v2096
  %2098 = vmatmul.bf16.gmra.mxu0 %v1140
  %v2099 = vpop.f32.mrf.mxu0
  %v2100 = vadd.f32 %v292, %v2099
  %v2101 = vpop.f32.mrf.mxu0
  %v2102 = vadd.f32 %v292, %v2101
  %2103 = vmatmul.bf16.gmra.mxu0 %v1142
  %v2104 = vpop.f32.mrf.mxu0
  %v2105 = vadd.f32 %v292, %v2104
  %v2106 = vpop.f32.mrf.mxu0
  %v2107 = vadd.f32 %v292, %v2106
  %2108 = vmatmul.bf16.gmra.mxu0 %v1144
  %v2109 = vpop.f32.mrf.mxu0
  %v2110 = vadd.f32 %v292, %v2109
  %v2111 = vpop.f32.mrf.mxu0
  %v2112 = vadd.f32 %v292, %v2111
  %2113 = vmatmul.bf16.gmra.mxu0 %v1146
  %v2114 = vpop.f32.mrf.mxu0
  %v2115 = vadd.f32 %v292, %v2114
  %v2116 = vpop.f32.mrf.mxu0
  %v2117 = vadd.f32 %v292, %v2116
  %2118 = vmatmul.bf16.gmra.mxu0 %v1148
  %v2119 = vpop.f32.mrf.mxu0
  %v2120 = vadd.f32 %v292, %v2119
  %v2121 = vpop.f32.mrf.mxu0
  %v2122 = vadd.f32 %v292, %v2121
  %2123 = vmatmul.bf16.gmra.mxu0 %v1150
  %v2124 = vpop.f32.mrf.mxu0
  %v2125 = vadd.f32 %v292, %v2124
  %v2126 = vpop.f32.mrf.mxu0
  %v2127 = vadd.f32 %v292, %v2126
  %2128 = vmatmul.bf16.gmra.mxu0 %v1152
  %v2129 = vpop.f32.mrf.mxu0
  %v2130 = vadd.f32 %v292, %v2129
  %v2131 = vpop.f32.mrf.mxu0
  %v2132 = vadd.f32 %v292, %v2131
  %2133 = vmatmul.bf16.gmra.mxu0 %v1154
  %v2134 = vpop.f32.mrf.mxu0
  %v2135 = vadd.f32 %v292, %v2134
  %v2136 = vpop.f32.mrf.mxu0
  %v2137 = vadd.f32 %v292, %v2136
  %2138 = vmatmul.bf16.gmra.mxu0 %v1156
  %v2139 = vpop.f32.mrf.mxu0
  %v2140 = vadd.f32 %v292, %v2139
  %v2141 = vpop.f32.mrf.mxu0
  %v2142 = vadd.f32 %v292, %v2141
  %2143 = vmatmul.bf16.gmra.mxu0 %v1158
  %v2144 = vpop.f32.mrf.mxu0
  %v2145 = vadd.f32 %v292, %v2144
  %v2146 = vpop.f32.mrf.mxu0
  %v2147 = vadd.f32 %v292, %v2146
  %2148 = vmatmul.bf16.gmra.mxu0 %v1160
  %v2149 = vpop.f32.mrf.mxu0
  %v2150 = vadd.f32 %v292, %v2149
  %v2151 = vpop.f32.mrf.mxu0
  %v2152 = vadd.f32 %v292, %v2151
  %2153 = vmatmul.bf16.gmra.mxu0 %v1162
  %v2154 = vpop.f32.mrf.mxu0
  %v2155 = vadd.f32 %v292, %v2154
  %v2156 = vpop.f32.mrf.mxu0
  %v2157 = vadd.f32 %v292, %v2156
  %2158 = vmatmul.bf16.gmra.mxu0 %v1164
  %v2159 = vpop.f32.mrf.mxu0
  %v2160 = vadd.f32 %v292, %v2159
  %v2161 = vpop.f32.mrf.mxu0
  %v2162 = vadd.f32 %v292, %v2161
  %2163 = vmatmul.bf16.gmra.mxu0 %v1166
  %v2164 = vpop.f32.mrf.mxu0
  %v2165 = vadd.f32 %v292, %v2164
  %v2166 = vpop.f32.mrf.mxu0
  %v2167 = vadd.f32 %v292, %v2166
  %2168 = vmatmul.bf16.gmra.mxu0 %v1168
  %v2169 = vpop.f32.mrf.mxu0
  %v2170 = vadd.f32 %v292, %v2169
  %v2171 = vpop.f32.mrf.mxu0
  %v2172 = vadd.f32 %v292, %v2171
  %2173 = vmatmul.bf16.gmra.mxu0 %v1170
  %v2174 = vpop.f32.mrf.mxu0
  %v2175 = vadd.f32 %v292, %v2174
  %v2176 = vpop.f32.mrf.mxu0
  %v2177 = vadd.f32 %v292, %v2176
  %2178 = vmatmul.bf16.gmra.mxu0 %v1172
  %v2179 = vpop.f32.mrf.mxu0
  %v2180 = vadd.f32 %v292, %v2179
  %v2181 = vpop.f32.mrf.mxu0
  %v2182 = vadd.f32 %v292, %v2181
  %2183 = vmatmul.bf16.gmra.mxu0 %v1174
  %v2184 = vpop.f32.mrf.mxu0
  %v2185 = vadd.f32 %v292, %v2184
  %v2186 = vpop.f32.mrf.mxu0
  %v2187 = vadd.f32 %v292, %v2186
  %2188 = vmatmul.bf16.gmra.mxu0 %v1176
  %v2189 = vpop.f32.mrf.mxu0
  %v2190 = vadd.f32 %v292, %v2189
  %v2191 = vpop.f32.mrf.mxu0
  %v2192 = vadd.f32 %v292, %v2191
  %2193 = vmatmul.bf16.gmra.mxu0 %v1178
  %v2194 = vpop.f32.mrf.mxu0
  %v2195 = vadd.f32 %v292, %v2194
  %v2196 = vpop.f32.mrf.mxu0
  %v2197 = vadd.f32 %v292, %v2196
  %2198 = vmatmul.bf16.gmra.mxu0 %v1180
  %v2199 = vpop.f32.mrf.mxu0
  %v2200 = vadd.f32 %v292, %v2199
  %v2201 = vpop.f32.mrf.mxu0
  %v2202 = vadd.f32 %v292, %v2201
  %2203 = vmatmul.bf16.gmra.mxu0 %v1182
  %v2204 = vpop.f32.mrf.mxu0
  %v2205 = vadd.f32 %v292, %v2204
  %v2206 = vpop.f32.mrf.mxu0
  %v2207 = vadd.f32 %v292, %v2206
  %2208 = vmatmul.bf16.gmra.mxu0 %v1184
  %v2209 = vpop.f32.mrf.mxu0
  %v2210 = vadd.f32 %v292, %v2209
  %v2211 = vpop.f32.mrf.mxu0
  %v2212 = vadd.f32 %v292, %v2211
  %2213 = vmatmul.bf16.gmra.mxu0 %v1186
  %v2214 = vpop.f32.mrf.mxu0
  %v2215 = vadd.f32 %v292, %v2214
  %v2216 = vpop.f32.mrf.mxu0
  %v2217 = vadd.f32 %v292, %v2216
  %2218 = vmatmul.bf16.gmra.mxu0 %v1188
  %v2219 = vpop.f32.mrf.mxu0
  %v2220 = vadd.f32 %v292, %v2219
  %v2221 = vpop.f32.mrf.mxu0
  %v2222 = vadd.f32 %v292, %v2221
  %2223 = vmatmul.bf16.gmra.mxu0 %v1190
  %v2224 = vpop.f32.mrf.mxu0
  %v2225 = vadd.f32 %v292, %v2224
  %v2226 = vpop.f32.mrf.mxu0
  %v2227 = vadd.f32 %v292, %v2226
  %2228 = vmatmul.bf16.gmra.mxu0 %v1192
  %v2229 = vpop.f32.mrf.mxu0
  %v2230 = vadd.f32 %v292, %v2229
  %v2231 = vpop.f32.mrf.mxu0
  %v2232 = vadd.f32 %v292, %v2231
  %2233 = vmatmul.bf16.gmra.mxu0 %v1194
  %v2234 = vpop.f32.mrf.mxu0
  %v2235 = vadd.f32 %v292, %v2234
  %v2236 = vpop.f32.mrf.mxu0
  %v2237 = vadd.f32 %v292, %v2236
  %2238 = vmatmul.bf16.gmra.mxu0 %v1196
  %v2239 = vpop.f32.mrf.mxu0
  %v2240 = vadd.f32 %v292, %v2239
  %v2241 = vpop.f32.mrf.mxu0
  %v2242 = vadd.f32 %v292, %v2241
  %2243 = vmatmul.bf16.gmra.mxu0 %v1198
  %v2244 = vpop.f32.mrf.mxu0
  %v2245 = vadd.f32 %v292, %v2244
  %v2246 = vpop.f32.mrf.mxu0
  %v2247 = vadd.f32 %v292, %v2246
  %2248 = vmatmul.bf16.gmra.mxu0 %v1200
  %v2249 = vpop.f32.mrf.mxu0
  %v2250 = vadd.f32 %v292, %v2249
  %v2251 = vpop.f32.mrf.mxu0
  %v2252 = vadd.f32 %v292, %v2251
  %2253 = vmatmul.bf16.gmra.mxu0 %v1202
  %v2254 = vpop.f32.mrf.mxu0
  %v2255 = vadd.f32 %v292, %v2254
  %v2256 = vpop.f32.mrf.mxu0
  %v2257 = vadd.f32 %v292, %v2256
  %2258 = vmatmul.bf16.gmra.mxu0 %v1204
  %v2259 = vpop.f32.mrf.mxu0
  %v2260 = vadd.f32 %v292, %v2259
  %v2261 = vpop.f32.mrf.mxu0
  %v2262 = vadd.f32 %v292, %v2261
  %2263 = vmatmul.bf16.gmra.mxu0 %v1206
  %v2264 = vpop.f32.mrf.mxu0
  %v2265 = vadd.f32 %v292, %v2264
  %v2266 = vpop.f32.mrf.mxu0
  %v2267 = vadd.f32 %v292, %v2266
  %2268 = vmatmul.bf16.gmra.mxu0 %v1208
  %v2269 = vpop.f32.mrf.mxu0
  %v2270 = vadd.f32 %v292, %v2269
  %v2271 = vpop.f32.mrf.mxu0
  %v2272 = vadd.f32 %v292, %v2271
  %2273 = vmatmul.bf16.gmra.mxu0 %v1210
  %v2274 = vpop.f32.mrf.mxu0
  %v2275 = vadd.f32 %v292, %v2274
  %v2276 = vpop.f32.mrf.mxu0
  %v2277 = vadd.f32 %v292, %v2276
  %2278 = vmatmul.bf16.gmra.mxu0 %v1212
  %v2279 = vpop.f32.mrf.mxu0
  %v2280 = vadd.f32 %v292, %v2279
  %v2281 = vpop.f32.mrf.mxu0
  %v2282 = vadd.f32 %v292, %v2281
  %2283 = vmatmul.bf16.gmra.mxu0 %v1214
  %v2284 = vpop.f32.mrf.mxu0
  %v2285 = vadd.f32 %v292, %v2284
  %v2286 = vpop.f32.mrf.mxu0
  %v2287 = vadd.f32 %v292, %v2286
  %2288 = vmatmul.bf16.gmra.mxu0 %v1216
  %v2289 = vpop.f32.mrf.mxu0
  %v2290 = vadd.f32 %v292, %v2289
  %v2291 = vpop.f32.mrf.mxu0
  %v2292 = vadd.f32 %v292, %v2291
  %2293 = vmatmul.bf16.gmra.mxu0 %v1218
  %v2294 = vpop.f32.mrf.mxu0
  %v2295 = vadd.f32 %v292, %v2294
  %v2296 = vpop.f32.mrf.mxu0
  %v2297 = vadd.f32 %v292, %v2296
  %2298 = vmatmul.bf16.gmra.mxu0 %v1220
  %v2299 = vpop.f32.mrf.mxu0
  %v2300 = vadd.f32 %v292, %v2299
  %v2301 = vpop.f32.mrf.mxu0
  %v2302 = vadd.f32 %v292, %v2301
  %2303 = vmatmul.bf16.gmra.mxu0 %v1222
  %v2304 = vpop.f32.mrf.mxu0
  %v2305 = vadd.f32 %v292, %v2304
  %v2306 = vpop.f32.mrf.mxu0
  %v2307 = vadd.f32 %v292, %v2306
  %2308 = vmatmul.bf16.gmra.mxu0 %v1224
  %v2309 = vpop.f32.mrf.mxu0
  %v2310 = vadd.f32 %v292, %v2309
  %v2311 = vpop.f32.mrf.mxu0
  %v2312 = vadd.f32 %v292, %v2311
  %2313 = vmatmul.bf16.gmra.mxu0 %v1226
  %v2314 = vpop.f32.mrf.mxu0
  %v2315 = vadd.f32 %v292, %v2314
  %v2316 = vpop.f32.mrf.mxu0
  %v2317 = vadd.f32 %v292, %v2316
  %2318 = vmatmul.bf16.gmra.mxu0 %v1228
  %v2319 = vpop.f32.mrf.mxu0
  %v2320 = vadd.f32 %v292, %v2319
  %v2321 = vpop.f32.mrf.mxu0
  %v2322 = vadd.f32 %v292, %v2321
  %2323 = vmatmul.bf16.gmra.mxu0 %v1230
  %v2324 = vpop.f32.mrf.mxu0
  %v2325 = vadd.f32 %v292, %v2324
  %v2326 = vpop.f32.mrf.mxu0
  %v2327 = vadd.f32 %v292, %v2326
  %2328 = vmatmul.bf16.gmra.mxu0 %v1232
  %v2329 = vpop.f32.mrf.mxu0
  %v2330 = vadd.f32 %v292, %v2329
  %v2331 = vpop.f32.mrf.mxu0
  %v2332 = vadd.f32 %v292, %v2331
  %2333 = vmatmul.bf16.gmra.mxu0 %v1234
  %v2334 = vpop.f32.mrf.mxu0
  %v2335 = vadd.f32 %v292, %v2334
  %v2336 = vpop.f32.mrf.mxu0
  %v2337 = vadd.f32 %v292, %v2336
  %2338 = vmatmul.bf16.gmra.mxu0 %v1236
  %v2339 = vpop.f32.mrf.mxu0
  %v2340 = vadd.f32 %v292, %v2339
  %v2341 = vpop.f32.mrf.mxu0
  %v2342 = vadd.f32 %v292, %v2341
  %2343 = vmatmul.bf16.gmra.mxu0 %v1238
  %v2344 = vpop.f32.mrf.mxu0
  %v2345 = vadd.f32 %v292, %v2344
  %v2346 = vpop.f32.mrf.mxu0
  %v2347 = vadd.f32 %v292, %v2346
  %2348 = vmatmul.bf16.gmra.mxu0 %v1240
  %v2349 = vpop.f32.mrf.mxu0
  %v2350 = vadd.f32 %v292, %v2349
  %v2351 = vpop.f32.mrf.mxu0
  %v2352 = vadd.f32 %v292, %v2351
  %2353 = vmatmul.bf16.gmra.mxu0 %v1242
  %v2354 = vpop.f32.mrf.mxu0
  %v2355 = vadd.f32 %v292, %v2354
  %v2356 = vpop.f32.mrf.mxu0
  %v2357 = vadd.f32 %v292, %v2356
  %2358 = vmatmul.bf16.gmra.mxu0 %v1244
  %v2359 = vpop.f32.mrf.mxu0
  %v2360 = vadd.f32 %v292, %v2359
  %v2361 = vpop.f32.mrf.mxu0
  %v2362 = vadd.f32 %v292, %v2361
  %2363 = vmatmul.bf16.gmra.mxu0 %v1246
  %v2364 = vpop.f32.mrf.mxu0
  %v2365 = vadd.f32 %v292, %v2364
  %v2366 = vpop.f32.mrf.mxu0
  %v2367 = vadd.f32 %v292, %v2366
  %2368 = vmatmul.bf16.gmra.mxu0 %v1248
  %v2369 = vpop.f32.mrf.mxu0
  %v2370 = vadd.f32 %v292, %v2369
  %v2371 = vpop.f32.mrf.mxu0
  %v2372 = vadd.f32 %v292, %v2371
  %2373 = vmatmul.bf16.gmra.mxu0 %v1250
  %v2374 = vpop.f32.mrf.mxu0
  %v2375 = vadd.f32 %v292, %v2374
  %v2376 = vpop.f32.mrf.mxu0
  %v2377 = vadd.f32 %v292, %v2376
  %2378 = vmatmul.bf16.gmra.mxu0 %v1252
  %v2379 = vpop.f32.mrf.mxu0
  %v2380 = vadd.f32 %v292, %v2379
  %v2381 = vpop.f32.mrf.mxu0
  %v2382 = vadd.f32 %v292, %v2381
  %2383 = vmatmul.bf16.gmra.mxu0 %v1254
  %v2384 = vpop.f32.mrf.mxu0
  %v2385 = vadd.f32 %v292, %v2384
  %v2386 = vpop.f32.mrf.mxu0
  %v2387 = vadd.f32 %v292, %v2386
  %2388 = vmatmul.bf16.gmra.mxu0 %v1256
  %v2389 = vpop.f32.mrf.mxu0
  %v2390 = vadd.f32 %v292, %v2389
  %v2391 = vpop.f32.mrf.mxu0
  %v2392 = vadd.f32 %v292, %v2391
  %2393 = vmatmul.bf16.gmra.mxu0 %v1258
  %v2394 = vpop.f32.mrf.mxu0
  %v2395 = vadd.f32 %v292, %v2394
  %v2396 = vpop.f32.mrf.mxu0
  %v2397 = vadd.f32 %v292, %v2396
  %2398 = vmatmul.bf16.gmra.mxu0 %v1260
  %v2399 = vpop.f32.mrf.mxu0
  %v2400 = vadd.f32 %v292, %v2399
  %v2401 = vpop.f32.mrf.mxu0
  %v2402 = vadd.f32 %v292, %v2401
  %2403 = vmatmul.bf16.gmra.mxu0 %v1262
  %v2404 = vpop.f32.mrf.mxu0
  %v2405 = vadd.f32 %v292, %v2404
  %v2406 = vpop.f32.mrf.mxu0
  %v2407 = vadd.f32 %v292, %v2406
  %2408 = vmatmul.bf16.gmra.mxu0 %v1264
  %v2409 = vpop.f32.mrf.mxu0
  %v2410 = vadd.f32 %v292, %v2409
  %v2411 = vpop.f32.mrf.mxu0
  %v2412 = vadd.f32 %v292, %v2411
  %2413 = vmatmul.bf16.gmra.mxu0 %v1266
  %v2414 = vpop.f32.mrf.mxu0
  %v2415 = vadd.f32 %v292, %v2414
  %v2416 = vpop.f32.mrf.mxu0
  %v2417 = vadd.f32 %v292, %v2416
  %2418 = vmatmul.bf16.gmra.mxu0 %v1268
  %v2419 = vpop.f32.mrf.mxu0
  %v2420 = vadd.f32 %v292, %v2419
  %v2421 = vpop.f32.mrf.mxu0
  %v2422 = vadd.f32 %v292, %v2421
  %2423 = vmatmul.bf16.gmra.mxu0 %v1270
  %v2424 = vpop.f32.mrf.mxu0
  %v2425 = vadd.f32 %v292, %v2424
  %v2426 = vpop.f32.mrf.mxu0
  %v2427 = vadd.f32 %v292, %v2426
  %2428 = vmatmul.bf16.gmra.mxu0 %v1272
  %v2429 = vpop.f32.mrf.mxu0
  %v2430 = vadd.f32 %v292, %v2429
  %v2431 = vpop.f32.mrf.mxu0
  %v2432 = vadd.f32 %v292, %v2431
  %2433 = vmatmul.bf16.gmra.mxu0 %v1274
  %v2434 = vpop.f32.mrf.mxu0
  %v2435 = vadd.f32 %v292, %v2434
  %v2436 = vpop.f32.mrf.mxu0
  %v2437 = vadd.f32 %v292, %v2436
  %2438 = vmatmul.bf16.gmra.mxu0 %v1276
  %v2439 = vpop.f32.mrf.mxu0
  %v2440 = vadd.f32 %v292, %v2439
  %v2441 = vpop.f32.mrf.mxu0
  %v2442 = vadd.f32 %v292, %v2441
  %2443 = vmatmul.bf16.gmra.mxu0 %v1278
  %v2444 = vpop.f32.mrf.mxu0
  %v2445 = vadd.f32 %v292, %v2444
  %v2446 = vpop.f32.mrf.mxu0
  %v2447 = vadd.f32 %v292, %v2446
  %2448 = vmatmul.bf16.gmra.mxu0 %v1280
  %v2449 = vpop.f32.mrf.mxu0
  %v2450 = vadd.f32 %v292, %v2449
  %v2451 = vpop.f32.mrf.mxu0
  %v2452 = vadd.f32 %v292, %v2451
  %2453 = vmatmul.bf16.gmra.mxu0 %v1282
  %v2454 = vpop.f32.mrf.mxu0
  %v2455 = vadd.f32 %v292, %v2454
  %v2456 = vpop.f32.mrf.mxu0
  %v2457 = vadd.f32 %v292, %v2456
  %2458 = vmatmul.bf16.gmra.mxu0 %v1284
  %v2459 = vpop.f32.mrf.mxu0
  %v2460 = vadd.f32 %v292, %v2459
  %v2461 = vpop.f32.mrf.mxu0
  %v2462 = vadd.f32 %v292, %v2461
  %2463 = vmatmul.bf16.gmra.mxu0 %v1286
  %v2464 = vpop.f32.mrf.mxu0
  %v2465 = vadd.f32 %v292, %v2464
  %v2466 = vpop.f32.mrf.mxu0
  %v2467 = vadd.f32 %v292, %v2466
  %2468 = vmatmul.bf16.gmra.mxu0 %v1288
  %v2469 = vpop.f32.mrf.mxu0
  %v2470 = vadd.f32 %v292, %v2469
  %v2471 = vpop.f32.mrf.mxu0
  %v2472 = vadd.f32 %v292, %v2471
  %2473 = vmatmul.bf16.gmra.mxu0 %v1290
  %v2474 = vpop.f32.mrf.mxu0
  %v2475 = vadd.f32 %v292, %v2474
  %v2476 = vpop.f32.mrf.mxu0
  %v2477 = vadd.f32 %v292, %v2476
  %2478 = vmatmul.bf16.gmra.mxu0 %v1292
  %v2479 = vpop.f32.mrf.mxu0
  %v2480 = vadd.f32 %v292, %v2479
  %v2481 = vpop.f32.mrf.mxu0
  %v2482 = vadd.f32 %v292, %v2481
  %2483 = vmatmul.bf16.gmra.mxu0 %v1294
  %v2484 = vpop.f32.mrf.mxu0
  %v2485 = vadd.f32 %v292, %v2484
  %v2486 = vpop.f32.mrf.mxu0
  %v2487 = vadd.f32 %v292, %v2486
  %2488 = vmatmul.bf16.gmra.mxu0 %v1296
  %v2489 = vpop.f32.mrf.mxu0
  %v2490 = vadd.f32 %v292, %v2489
  %v2491 = vpop.f32.mrf.mxu0
  %v2492 = vadd.f32 %v292, %v2491
  %2493 = vmatmul.bf16.gmra.mxu0 %v1298
  %v2494 = vpop.f32.mrf.mxu0
  %v2495 = vadd.f32 %v292, %v2494
  %v2496 = vpop.f32.mrf.mxu0
  %v2497 = vadd.f32 %v292, %v2496
  %2498 = vmatmul.bf16.gmra.mxu0 %v1300
  %v2499 = vpop.f32.mrf.mxu0
  %v2500 = vadd.f32 %v292, %v2499
  %v2501 = vpop.f32.mrf.mxu0
  %v2502 = vadd.f32 %v292, %v2501
  %2503 = vmatmul.bf16.gmra.mxu0 %v1302
  %v2504 = vpop.f32.mrf.mxu0
  %v2505 = vadd.f32 %v292, %v2504
  %v2506 = vpop.f32.mrf.mxu0
  %v2507 = vadd.f32 %v292, %v2506
  %2508 = vmatmul.bf16.gmra.mxu0 %v1304
  %v2509 = vpop.f32.mrf.mxu0
  %v2510 = vadd.f32 %v292, %v2509
  %v2511 = vpop.f32.mrf.mxu0
  %v2512 = vadd.f32 %v292, %v2511
  %2513 = vmatmul.bf16.gmra.mxu0 %v1306
  %v2514 = vpop.f32.mrf.mxu0
  %v2515 = vadd.f32 %v292, %v2514
  %v2516 = vpop.f32.mrf.mxu0
  %v2517 = vadd.f32 %v292, %v2516
  %2518 = vmatmul.bf16.gmra.mxu0 %v1308
  %v2519 = vpop.f32.mrf.mxu0
  %v2520 = vadd.f32 %v292, %v2519
  %v2521 = vpop.f32.mrf.mxu0
  %v2522 = vadd.f32 %v292, %v2521
  %2523 = vmatmul.bf16.gmra.mxu0 %v1310
  %v2524 = vpop.f32.mrf.mxu0
  %v2525 = vadd.f32 %v292, %v2524
  %v2526 = vpop.f32.mrf.mxu0
  %v2527 = vadd.f32 %v292, %v2526
  %2528 = vmatmul.bf16.gmra.mxu0 %v1312
  %v2529 = vpop.f32.mrf.mxu0
  %v2530 = vadd.f32 %v292, %v2529
  %v2531 = vpop.f32.mrf.mxu0
  %v2532 = vadd.f32 %v292, %v2531
  %2533 = vmatmul.bf16.gmra.mxu0 %v1314
  %v2534 = vpop.f32.mrf.mxu0
  %v2535 = vadd.f32 %v292, %v2534
  %v2536 = vpop.f32.mrf.mxu0
  %v2537 = vadd.f32 %v292, %v2536
  %2538 = vmatmul.bf16.gmra.mxu0 %v1316
  %v2539 = vpop.f32.mrf.mxu0
  %v2540 = vadd.f32 %v292, %v2539
  %v2541 = vpop.f32.mrf.mxu0
  %v2542 = vadd.f32 %v292, %v2541
  %2543 = vdwg.mxu0
  %2544 = vmatpush.bf16.msra.mxu0 0
  %2545 = vmatpush.bf16.msra.mxu0 0
  %2546 = vmatpush.bf16.msra.mxu0 0
  %2547 = vmatpush.bf16.msra.mxu0 0
  %2548 = vmatpush.bf16.msra.mxu0 0
  %2549 = vmatpush.bf16.msra.mxu0 0
  %2550 = vmatpush.bf16.msra.mxu0 %v1893
  %2551 = vmatpush.bf16.msra.mxu0 %v1492
  %2552 = vmatmul.bf16.gmra.mxu0 %v1505
  %v2553 = vpop.f32.mrf.mxu0
  %v2554 = vadd.f32 %v1905, %v2553
  %v2555 = vpop.f32.mrf.mxu0
  %v2556 = vadd.f32 %v1907, %v2555
  %2557 = vmatmul.bf16.gmra.mxu0 %v1508
  %v2558 = vpop.f32.mrf.mxu0
  %v2559 = vadd.f32 %v1910, %v2558
  %v2560 = vpop.f32.mrf.mxu0
  %v2561 = vadd.f32 %v1912, %v2560
  %2562 = vmatmul.bf16.gmra.mxu0 %v1511
  %v2563 = vpop.f32.mrf.mxu0
  %v2564 = vadd.f32 %v1915, %v2563
  %v2565 = vpop.f32.mrf.mxu0
  %v2566 = vadd.f32 %v1917, %v2565
  %2567 = vmatmul.bf16.gmra.mxu0 %v1514
  %v2568 = vpop.f32.mrf.mxu0
  %v2569 = vadd.f32 %v1920, %v2568
  %v2570 = vpop.f32.mrf.mxu0
  %v2571 = vadd.f32 %v1922, %v2570
  %2572 = vmatmul.bf16.gmra.mxu0 %v1517
  %v2573 = vpop.f32.mrf.mxu0
  %v2574 = vadd.f32 %v1925, %v2573
  %v2575 = vpop.f32.mrf.mxu0
  %v2576 = vadd.f32 %v1927, %v2575
  %2577 = vmatmul.bf16.gmra.mxu0 %v1520
  %v2578 = vpop.f32.mrf.mxu0
  %v2579 = vadd.f32 %v1930, %v2578
  %v2580 = vpop.f32.mrf.mxu0
  %v2581 = vadd.f32 %v1932, %v2580
  %2582 = vmatmul.bf16.gmra.mxu0 %v1523
  %v2583 = vpop.f32.mrf.mxu0
  %v2584 = vadd.f32 %v1935, %v2583
  %v2585 = vpop.f32.mrf.mxu0
  %v2586 = vadd.f32 %v1937, %v2585
  %2587 = vmatmul.bf16.gmra.mxu0 %v1526
  %v2588 = vpop.f32.mrf.mxu0
  %v2589 = vadd.f32 %v1940, %v2588
  %v2590 = vpop.f32.mrf.mxu0
  %v2591 = vadd.f32 %v1942, %v2590
  %2592 = vmatmul.bf16.gmra.mxu0 %v1529
  %v2593 = vpop.f32.mrf.mxu0
  %v2594 = vadd.f32 %v1945, %v2593
  %v2595 = vpop.f32.mrf.mxu0
  %v2596 = vadd.f32 %v1947, %v2595
  %2597 = vmatmul.bf16.gmra.mxu0 %v1532
  %v2598 = vpop.f32.mrf.mxu0
  %v2599 = vadd.f32 %v1950, %v2598
  %v2600 = vpop.f32.mrf.mxu0
  %v2601 = vadd.f32 %v1952, %v2600
  %2602 = vmatmul.bf16.gmra.mxu0 %v1535
  %v2603 = vpop.f32.mrf.mxu0
  %v2604 = vadd.f32 %v1955, %v2603
  %v2605 = vpop.f32.mrf.mxu0
  %v2606 = vadd.f32 %v1957, %v2605
  %2607 = vmatmul.bf16.gmra.mxu0 %v1538
  %v2608 = vpop.f32.mrf.mxu0
  %v2609 = vadd.f32 %v1960, %v2608
  %v2610 = vpop.f32.mrf.mxu0
  %v2611 = vadd.f32 %v1962, %v2610
  %2612 = vmatmul.bf16.gmra.mxu0 %v1541
  %v2613 = vpop.f32.mrf.mxu0
  %v2614 = vadd.f32 %v1965, %v2613
  %v2615 = vpop.f32.mrf.mxu0
  %v2616 = vadd.f32 %v1967, %v2615
  %2617 = vmatmul.bf16.gmra.mxu0 %v1544
  %v2618 = vpop.f32.mrf.mxu0
  %v2619 = vadd.f32 %v1970, %v2618
  %v2620 = vpop.f32.mrf.mxu0
  %v2621 = vadd.f32 %v1972, %v2620
  %2622 = vmatmul.bf16.gmra.mxu0 %v1547
  %v2623 = vpop.f32.mrf.mxu0
  %v2624 = vadd.f32 %v1975, %v2623
  %v2625 = vpop.f32.mrf.mxu0
  %v2626 = vadd.f32 %v1977, %v2625
  %2627 = vmatmul.bf16.gmra.mxu0 %v1550
  %v2628 = vpop.f32.mrf.mxu0
  %v2629 = vadd.f32 %v1980, %v2628
  %v2630 = vpop.f32.mrf.mxu0
  %v2631 = vadd.f32 %v1982, %v2630
  %2632 = vmatmul.bf16.gmra.mxu0 %v1553
  %v2633 = vpop.f32.mrf.mxu0
  %v2634 = vadd.f32 %v1985, %v2633
  %v2635 = vpop.f32.mrf.mxu0
  %v2636 = vadd.f32 %v1987, %v2635
  %2637 = vmatmul.bf16.gmra.mxu0 %v1556
  %v2638 = vpop.f32.mrf.mxu0
  %v2639 = vadd.f32 %v1990, %v2638
  %v2640 = vpop.f32.mrf.mxu0
  %v2641 = vadd.f32 %v1992, %v2640
  %2642 = vmatmul.bf16.gmra.mxu0 %v1559
  %v2643 = vpop.f32.mrf.mxu0
  %v2644 = vadd.f32 %v1995, %v2643
  %v2645 = vpop.f32.mrf.mxu0
  %v2646 = vadd.f32 %v1997, %v2645
  %2647 = vmatmul.bf16.gmra.mxu0 %v1562
  %v2648 = vpop.f32.mrf.mxu0
  %v2649 = vadd.f32 %v2000, %v2648
  %v2650 = vpop.f32.mrf.mxu0
  %v2651 = vadd.f32 %v2002, %v2650
  %2652 = vmatmul.bf16.gmra.mxu0 %v1565
  %v2653 = vpop.f32.mrf.mxu0
  %v2654 = vadd.f32 %v2005, %v2653
  %v2655 = vpop.f32.mrf.mxu0
  %v2656 = vadd.f32 %v2007, %v2655
  %2657 = vmatmul.bf16.gmra.mxu0 %v1568
  %v2658 = vpop.f32.mrf.mxu0
  %v2659 = vadd.f32 %v2010, %v2658
  %v2660 = vpop.f32.mrf.mxu0
  %v2661 = vadd.f32 %v2012, %v2660
  %2662 = vmatmul.bf16.gmra.mxu0 %v1571
  %v2663 = vpop.f32.mrf.mxu0
  %v2664 = vadd.f32 %v2015, %v2663
  %v2665 = vpop.f32.mrf.mxu0
  %v2666 = vadd.f32 %v2017, %v2665
  %2667 = vmatmul.bf16.gmra.mxu0 %v1574
  %v2668 = vpop.f32.mrf.mxu0
  %v2669 = vadd.f32 %v2020, %v2668
  %v2670 = vpop.f32.mrf.mxu0
  %v2671 = vadd.f32 %v2022, %v2670
  %2672 = vmatmul.bf16.gmra.mxu0 %v1577
  %v2673 = vpop.f32.mrf.mxu0
  %v2674 = vadd.f32 %v2025, %v2673
  %v2675 = vpop.f32.mrf.mxu0
  %v2676 = vadd.f32 %v2027, %v2675
  %2677 = vmatmul.bf16.gmra.mxu0 %v1580
  %v2678 = vpop.f32.mrf.mxu0
  %v2679 = vadd.f32 %v2030, %v2678
  %v2680 = vpop.f32.mrf.mxu0
  %v2681 = vadd.f32 %v2032, %v2680
  %2682 = vmatmul.bf16.gmra.mxu0 %v1583
  %v2683 = vpop.f32.mrf.mxu0
  %v2684 = vadd.f32 %v2035, %v2683
  %v2685 = vpop.f32.mrf.mxu0
  %v2686 = vadd.f32 %v2037, %v2685
  %2687 = vmatmul.bf16.gmra.mxu0 %v1586
  %v2688 = vpop.f32.mrf.mxu0
  %v2689 = vadd.f32 %v2040, %v2688
  %v2690 = vpop.f32.mrf.mxu0
  %v2691 = vadd.f32 %v2042, %v2690
  %2692 = vmatmul.bf16.gmra.mxu0 %v1589
  %v2693 = vpop.f32.mrf.mxu0
  %v2694 = vadd.f32 %v2045, %v2693
  %v2695 = vpop.f32.mrf.mxu0
  %v2696 = vadd.f32 %v2047, %v2695
  %2697 = vmatmul.bf16.gmra.mxu0 %v1592
  %v2698 = vpop.f32.mrf.mxu0
  %v2699 = vadd.f32 %v2050, %v2698
  %v2700 = vpop.f32.mrf.mxu0
  %v2701 = vadd.f32 %v2052, %v2700
  %2702 = vmatmul.bf16.gmra.mxu0 %v1595
  %v2703 = vpop.f32.mrf.mxu0
  %v2704 = vadd.f32 %v2055, %v2703
  %v2705 = vpop.f32.mrf.mxu0
  %v2706 = vadd.f32 %v2057, %v2705
  %2707 = vmatmul.bf16.gmra.mxu0 %v1598
  %v2708 = vpop.f32.mrf.mxu0
  %v2709 = vadd.f32 %v2060, %v2708
  %v2710 = vpop.f32.mrf.mxu0
  %v2711 = vadd.f32 %v2062, %v2710
  %2712 = vmatmul.bf16.gmra.mxu0 %v1601
  %v2713 = vpop.f32.mrf.mxu0
  %v2714 = vadd.f32 %v2065, %v2713
  %v2715 = vpop.f32.mrf.mxu0
  %v2716 = vadd.f32 %v2067, %v2715
  %2717 = vmatmul.bf16.gmra.mxu0 %v1604
  %v2718 = vpop.f32.mrf.mxu0
  %v2719 = vadd.f32 %v2070, %v2718
  %v2720 = vpop.f32.mrf.mxu0
  %v2721 = vadd.f32 %v2072, %v2720
  %2722 = vmatmul.bf16.gmra.mxu0 %v1607
  %v2723 = vpop.f32.mrf.mxu0
  %v2724 = vadd.f32 %v2075, %v2723
  %v2725 = vpop.f32.mrf.mxu0
  %v2726 = vadd.f32 %v2077, %v2725
  %2727 = vmatmul.bf16.gmra.mxu0 %v1610
  %v2728 = vpop.f32.mrf.mxu0
  %v2729 = vadd.f32 %v2080, %v2728
  %v2730 = vpop.f32.mrf.mxu0
  %v2731 = vadd.f32 %v2082, %v2730
  %2732 = vmatmul.bf16.gmra.mxu0 %v1613
  %v2733 = vpop.f32.mrf.mxu0
  %v2734 = vadd.f32 %v2085, %v2733
  %v2735 = vpop.f32.mrf.mxu0
  %v2736 = vadd.f32 %v2087, %v2735
  %2737 = vmatmul.bf16.gmra.mxu0 %v1616
  %v2738 = vpop.f32.mrf.mxu0
  %v2739 = vadd.f32 %v2090, %v2738
  %v2740 = vpop.f32.mrf.mxu0
  %v2741 = vadd.f32 %v2092, %v2740
  %2742 = vmatmul.bf16.gmra.mxu0 %v1619
  %v2743 = vpop.f32.mrf.mxu0
  %v2744 = vadd.f32 %v2095, %v2743
  %v2745 = vpop.f32.mrf.mxu0
  %v2746 = vadd.f32 %v2097, %v2745
  %2747 = vmatmul.bf16.gmra.mxu0 %v1622
  %v2748 = vpop.f32.mrf.mxu0
  %v2749 = vadd.f32 %v2100, %v2748
  %v2750 = vpop.f32.mrf.mxu0
  %v2751 = vadd.f32 %v2102, %v2750
  %2752 = vmatmul.bf16.gmra.mxu0 %v1625
  %v2753 = vpop.f32.mrf.mxu0
  %v2754 = vadd.f32 %v2105, %v2753
  %v2755 = vpop.f32.mrf.mxu0
  %v2756 = vadd.f32 %v2107, %v2755
  %2757 = vmatmul.bf16.gmra.mxu0 %v1628
  %v2758 = vpop.f32.mrf.mxu0
  %v2759 = vadd.f32 %v2110, %v2758
  %v2760 = vpop.f32.mrf.mxu0
  %v2761 = vadd.f32 %v2112, %v2760
  %2762 = vmatmul.bf16.gmra.mxu0 %v1631
  %v2763 = vpop.f32.mrf.mxu0
  %v2764 = vadd.f32 %v2115, %v2763
  %v2765 = vpop.f32.mrf.mxu0
  %v2766 = vadd.f32 %v2117, %v2765
  %2767 = vmatmul.bf16.gmra.mxu0 %v1634
  %v2768 = vpop.f32.mrf.mxu0
  %v2769 = vadd.f32 %v2120, %v2768
  %v2770 = vpop.f32.mrf.mxu0
  %v2771 = vadd.f32 %v2122, %v2770
  %2772 = vmatmul.bf16.gmra.mxu0 %v1637
  %v2773 = vpop.f32.mrf.mxu0
  %v2774 = vadd.f32 %v2125, %v2773
  %v2775 = vpop.f32.mrf.mxu0
  %v2776 = vadd.f32 %v2127, %v2775
  %2777 = vmatmul.bf16.gmra.mxu0 %v1640
  %v2778 = vpop.f32.mrf.mxu0
  %v2779 = vadd.f32 %v2130, %v2778
  %v2780 = vpop.f32.mrf.mxu0
  %v2781 = vadd.f32 %v2132, %v2780
  %2782 = vmatmul.bf16.gmra.mxu0 %v1643
  %v2783 = vpop.f32.mrf.mxu0
  %v2784 = vadd.f32 %v2135, %v2783
  %v2785 = vpop.f32.mrf.mxu0
  %v2786 = vadd.f32 %v2137, %v2785
  %2787 = vmatmul.bf16.gmra.mxu0 %v1646
  %v2788 = vpop.f32.mrf.mxu0
  %v2789 = vadd.f32 %v2140, %v2788
  %v2790 = vpop.f32.mrf.mxu0
  %v2791 = vadd.f32 %v2142, %v2790
  %2792 = vmatmul.bf16.gmra.mxu0 %v1649
  %v2793 = vpop.f32.mrf.mxu0
  %v2794 = vadd.f32 %v2145, %v2793
  %v2795 = vpop.f32.mrf.mxu0
  %v2796 = vadd.f32 %v2147, %v2795
  %2797 = vmatmul.bf16.gmra.mxu0 %v1652
  %v2798 = vpop.f32.mrf.mxu0
  %v2799 = vadd.f32 %v2150, %v2798
  %v2800 = vpop.f32.mrf.mxu0
  %v2801 = vadd.f32 %v2152, %v2800
  %2802 = vmatmul.bf16.gmra.mxu0 %v1655
  %v2803 = vpop.f32.mrf.mxu0
  %v2804 = vadd.f32 %v2155, %v2803
  %v2805 = vpop.f32.mrf.mxu0
  %v2806 = vadd.f32 %v2157, %v2805
  %2807 = vmatmul.bf16.gmra.mxu0 %v1658
  %v2808 = vpop.f32.mrf.mxu0
  %v2809 = vadd.f32 %v2160, %v2808
  %v2810 = vpop.f32.mrf.mxu0
  %v2811 = vadd.f32 %v2162, %v2810
  %2812 = vmatmul.bf16.gmra.mxu0 %v1661
  %v2813 = vpop.f32.mrf.mxu0
  %v2814 = vadd.f32 %v2165, %v2813
  %v2815 = vpop.f32.mrf.mxu0
  %v2816 = vadd.f32 %v2167, %v2815
  %2817 = vmatmul.bf16.gmra.mxu0 %v1664
  %v2818 = vpop.f32.mrf.mxu0
  %v2819 = vadd.f32 %v2170, %v2818
  %v2820 = vpop.f32.mrf.mxu0
  %v2821 = vadd.f32 %v2172, %v2820
  %2822 = vmatmul.bf16.gmra.mxu0 %v1667
  %v2823 = vpop.f32.mrf.mxu0
  %v2824 = vadd.f32 %v2175, %v2823
  %v2825 = vpop.f32.mrf.mxu0
  %v2826 = vadd.f32 %v2177, %v2825
  %2827 = vmatmul.bf16.gmra.mxu0 %v1670
  %v2828 = vpop.f32.mrf.mxu0
  %v2829 = vadd.f32 %v2180, %v2828
  %v2830 = vpop.f32.mrf.mxu0
  %v2831 = vadd.f32 %v2182, %v2830
  %2832 = vmatmul.bf16.gmra.mxu0 %v1673
  %v2833 = vpop.f32.mrf.mxu0
  %v2834 = vadd.f32 %v2185, %v2833
  %v2835 = vpop.f32.mrf.mxu0
  %v2836 = vadd.f32 %v2187, %v2835
  %2837 = vmatmul.bf16.gmra.mxu0 %v1676
  %v2838 = vpop.f32.mrf.mxu0
  %v2839 = vadd.f32 %v2190, %v2838
  %v2840 = vpop.f32.mrf.mxu0
  %v2841 = vadd.f32 %v2192, %v2840
  %2842 = vmatmul.bf16.gmra.mxu0 %v1679
  %v2843 = vpop.f32.mrf.mxu0
  %v2844 = vadd.f32 %v2195, %v2843
  %v2845 = vpop.f32.mrf.mxu0
  %v2846 = vadd.f32 %v2197, %v2845
  %2847 = vmatmul.bf16.gmra.mxu0 %v1682
  %v2848 = vpop.f32.mrf.mxu0
  %v2849 = vadd.f32 %v2200, %v2848
  %v2850 = vpop.f32.mrf.mxu0
  %v2851 = vadd.f32 %v2202, %v2850
  %2852 = vmatmul.bf16.gmra.mxu0 %v1685
  %v2853 = vpop.f32.mrf.mxu0
  %v2854 = vadd.f32 %v2205, %v2853
  %v2855 = vpop.f32.mrf.mxu0
  %v2856 = vadd.f32 %v2207, %v2855
  %2857 = vmatmul.bf16.gmra.mxu0 %v1688
  %v2858 = vpop.f32.mrf.mxu0
  %v2859 = vadd.f32 %v2210, %v2858
  %v2860 = vpop.f32.mrf.mxu0
  %v2861 = vadd.f32 %v2212, %v2860
  %2862 = vmatmul.bf16.gmra.mxu0 %v1691
  %v2863 = vpop.f32.mrf.mxu0
  %v2864 = vadd.f32 %v2215, %v2863
  %v2865 = vpop.f32.mrf.mxu0
  %v2866 = vadd.f32 %v2217, %v2865
  %2867 = vmatmul.bf16.gmra.mxu0 %v1694
  %v2868 = vpop.f32.mrf.mxu0
  %v2869 = vadd.f32 %v2220, %v2868
  %v2870 = vpop.f32.mrf.mxu0
  %v2871 = vadd.f32 %v2222, %v2870
  %2872 = vmatmul.bf16.gmra.mxu0 %v1697
  %v2873 = vpop.f32.mrf.mxu0
  %v2874 = vadd.f32 %v2225, %v2873
  %v2875 = vpop.f32.mrf.mxu0
  %v2876 = vadd.f32 %v2227, %v2875
  %2877 = vmatmul.bf16.gmra.mxu0 %v1700
  %v2878 = vpop.f32.mrf.mxu0
  %v2879 = vadd.f32 %v2230, %v2878
  %v2880 = vpop.f32.mrf.mxu0
  %v2881 = vadd.f32 %v2232, %v2880
  %2882 = vmatmul.bf16.gmra.mxu0 %v1703
  %v2883 = vpop.f32.mrf.mxu0
  %v2884 = vadd.f32 %v2235, %v2883
  %v2885 = vpop.f32.mrf.mxu0
  %v2886 = vadd.f32 %v2237, %v2885
  %2887 = vmatmul.bf16.gmra.mxu0 %v1706
  %v2888 = vpop.f32.mrf.mxu0
  %v2889 = vadd.f32 %v2240, %v2888
  %v2890 = vpop.f32.mrf.mxu0
  %v2891 = vadd.f32 %v2242, %v2890
  %2892 = vmatmul.bf16.gmra.mxu0 %v1709
  %v2893 = vpop.f32.mrf.mxu0
  %v2894 = vadd.f32 %v2245, %v2893
  %v2895 = vpop.f32.mrf.mxu0
  %v2896 = vadd.f32 %v2247, %v2895
  %2897 = vmatmul.bf16.gmra.mxu0 %v1712
  %v2898 = vpop.f32.mrf.mxu0
  %v2899 = vadd.f32 %v2250, %v2898
  %v2900 = vpop.f32.mrf.mxu0
  %v2901 = vadd.f32 %v2252, %v2900
  %2902 = vmatmul.bf16.gmra.mxu0 %v1715
  %v2903 = vpop.f32.mrf.mxu0
  %v2904 = vadd.f32 %v2255, %v2903
  %v2905 = vpop.f32.mrf.mxu0
  %v2906 = vadd.f32 %v2257, %v2905
  %2907 = vmatmul.bf16.gmra.mxu0 %v1718
  %v2908 = vpop.f32.mrf.mxu0
  %v2909 = vadd.f32 %v2260, %v2908
  %v2910 = vpop.f32.mrf.mxu0
  %v2911 = vadd.f32 %v2262, %v2910
  %2912 = vmatmul.bf16.gmra.mxu0 %v1721
  %v2913 = vpop.f32.mrf.mxu0
  %v2914 = vadd.f32 %v2265, %v2913
  %v2915 = vpop.f32.mrf.mxu0
  %v2916 = vadd.f32 %v2267, %v2915
  %2917 = vmatmul.bf16.gmra.mxu0 %v1724
  %v2918 = vpop.f32.mrf.mxu0
  %v2919 = vadd.f32 %v2270, %v2918
  %v2920 = vpop.f32.mrf.mxu0
  %v2921 = vadd.f32 %v2272, %v2920
  %2922 = vmatmul.bf16.gmra.mxu0 %v1727
  %v2923 = vpop.f32.mrf.mxu0
  %v2924 = vadd.f32 %v2275, %v2923
  %v2925 = vpop.f32.mrf.mxu0
  %v2926 = vadd.f32 %v2277, %v2925
  %2927 = vmatmul.bf16.gmra.mxu0 %v1730
  %v2928 = vpop.f32.mrf.mxu0
  %v2929 = vadd.f32 %v2280, %v2928
  %v2930 = vpop.f32.mrf.mxu0
  %v2931 = vadd.f32 %v2282, %v2930
  %2932 = vmatmul.bf16.gmra.mxu0 %v1733
  %v2933 = vpop.f32.mrf.mxu0
  %v2934 = vadd.f32 %v2285, %v2933
  %v2935 = vpop.f32.mrf.mxu0
  %v2936 = vadd.f32 %v2287, %v2935
  %2937 = vmatmul.bf16.gmra.mxu0 %v1736
  %v2938 = vpop.f32.mrf.mxu0
  %v2939 = vadd.f32 %v2290, %v2938
  %v2940 = vpop.f32.mrf.mxu0
  %v2941 = vadd.f32 %v2292, %v2940
  %2942 = vmatmul.bf16.gmra.mxu0 %v1739
  %v2943 = vpop.f32.mrf.mxu0
  %v2944 = vadd.f32 %v2295, %v2943
  %v2945 = vpop.f32.mrf.mxu0
  %v2946 = vadd.f32 %v2297, %v2945
  %2947 = vmatmul.bf16.gmra.mxu0 %v1742
  %v2948 = vpop.f32.mrf.mxu0
  %v2949 = vadd.f32 %v2300, %v2948
  %v2950 = vpop.f32.mrf.mxu0
  %v2951 = vadd.f32 %v2302, %v2950
  %2952 = vmatmul.bf16.gmra.mxu0 %v1745
  %v2953 = vpop.f32.mrf.mxu0
  %v2954 = vadd.f32 %v2305, %v2953
  %v2955 = vpop.f32.mrf.mxu0
  %v2956 = vadd.f32 %v2307, %v2955
  %2957 = vmatmul.bf16.gmra.mxu0 %v1748
  %v2958 = vpop.f32.mrf.mxu0
  %v2959 = vadd.f32 %v2310, %v2958
  %v2960 = vpop.f32.mrf.mxu0
  %v2961 = vadd.f32 %v2312, %v2960
  %2962 = vmatmul.bf16.gmra.mxu0 %v1751
  %v2963 = vpop.f32.mrf.mxu0
  %v2964 = vadd.f32 %v2315, %v2963
  %v2965 = vpop.f32.mrf.mxu0
  %v2966 = vadd.f32 %v2317, %v2965
  %2967 = vmatmul.bf16.gmra.mxu0 %v1754
  %v2968 = vpop.f32.mrf.mxu0
  %v2969 = vadd.f32 %v2320, %v2968
  %v2970 = vpop.f32.mrf.mxu0
  %v2971 = vadd.f32 %v2322, %v2970
  %2972 = vmatmul.bf16.gmra.mxu0 %v1757
  %v2973 = vpop.f32.mrf.mxu0
  %v2974 = vadd.f32 %v2325, %v2973
  %v2975 = vpop.f32.mrf.mxu0
  %v2976 = vadd.f32 %v2327, %v2975
  %2977 = vmatmul.bf16.gmra.mxu0 %v1760
  %v2978 = vpop.f32.mrf.mxu0
  %v2979 = vadd.f32 %v2330, %v2978
  %v2980 = vpop.f32.mrf.mxu0
  %v2981 = vadd.f32 %v2332, %v2980
  %2982 = vmatmul.bf16.gmra.mxu0 %v1763
  %v2983 = vpop.f32.mrf.mxu0
  %v2984 = vadd.f32 %v2335, %v2983
  %v2985 = vpop.f32.mrf.mxu0
  %v2986 = vadd.f32 %v2337, %v2985
  %2987 = vmatmul.bf16.gmra.mxu0 %v1766
  %v2988 = vpop.f32.mrf.mxu0
  %v2989 = vadd.f32 %v2340, %v2988
  %v2990 = vpop.f32.mrf.mxu0
  %v2991 = vadd.f32 %v2342, %v2990
  %2992 = vmatmul.bf16.gmra.mxu0 %v1769
  %v2993 = vpop.f32.mrf.mxu0
  %v2994 = vadd.f32 %v2345, %v2993
  %v2995 = vpop.f32.mrf.mxu0
  %v2996 = vadd.f32 %v2347, %v2995
  %2997 = vmatmul.bf16.gmra.mxu0 %v1772
  %v2998 = vpop.f32.mrf.mxu0
  %v2999 = vadd.f32 %v2350, %v2998
  %v3000 = vpop.f32.mrf.mxu0
  %v3001 = vadd.f32 %v2352, %v3000
  %3002 = vmatmul.bf16.gmra.mxu0 %v1775
  %v3003 = vpop.f32.mrf.mxu0
  %v3004 = vadd.f32 %v2355, %v3003
  %v3005 = vpop.f32.mrf.mxu0
  %v3006 = vadd.f32 %v2357, %v3005
  %3007 = vmatmul.bf16.gmra.mxu0 %v1778
  %v3008 = vpop.f32.mrf.mxu0
  %v3009 = vadd.f32 %v2360, %v3008
  %v3010 = vpop.f32.mrf.mxu0
  %v3011 = vadd.f32 %v2362, %v3010
  %3012 = vmatmul.bf16.gmra.mxu0 %v1781
  %v3013 = vpop.f32.mrf.mxu0
  %v3014 = vadd.f32 %v2365, %v3013
  %v3015 = vpop.f32.mrf.mxu0
  %v3016 = vadd.f32 %v2367, %v3015
  %3017 = vmatmul.bf16.gmra.mxu0 %v1784
  %v3018 = vpop.f32.mrf.mxu0
  %v3019 = vadd.f32 %v2370, %v3018
  %v3020 = vpop.f32.mrf.mxu0
  %v3021 = vadd.f32 %v2372, %v3020
  %3022 = vmatmul.bf16.gmra.mxu0 %v1787
  %v3023 = vpop.f32.mrf.mxu0
  %v3024 = vadd.f32 %v2375, %v3023
  %v3025 = vpop.f32.mrf.mxu0
  %v3026 = vadd.f32 %v2377, %v3025
  %3027 = vmatmul.bf16.gmra.mxu0 %v1790
  %v3028 = vpop.f32.mrf.mxu0
  %v3029 = vadd.f32 %v2380, %v3028
  %v3030 = vpop.f32.mrf.mxu0
  %v3031 = vadd.f32 %v2382, %v3030
  %3032 = vmatmul.bf16.gmra.mxu0 %v1793
  %v3033 = vpop.f32.mrf.mxu0
  %v3034 = vadd.f32 %v2385, %v3033
  %v3035 = vpop.f32.mrf.mxu0
  %v3036 = vadd.f32 %v2387, %v3035
  %3037 = vmatmul.bf16.gmra.mxu0 %v1796
  %v3038 = vpop.f32.mrf.mxu0
  %v3039 = vadd.f32 %v2390, %v3038
  %v3040 = vpop.f32.mrf.mxu0
  %v3041 = vadd.f32 %v2392, %v3040
  %3042 = vmatmul.bf16.gmra.mxu0 %v1799
  %v3043 = vpop.f32.mrf.mxu0
  %v3044 = vadd.f32 %v2395, %v3043
  %v3045 = vpop.f32.mrf.mxu0
  %v3046 = vadd.f32 %v2397, %v3045
  %3047 = vmatmul.bf16.gmra.mxu0 %v1802
  %v3048 = vpop.f32.mrf.mxu0
  %v3049 = vadd.f32 %v2400, %v3048
  %v3050 = vpop.f32.mrf.mxu0
  %v3051 = vadd.f32 %v2402, %v3050
  %3052 = vmatmul.bf16.gmra.mxu0 %v1805
  %v3053 = vpop.f32.mrf.mxu0
  %v3054 = vadd.f32 %v2405, %v3053
  %v3055 = vpop.f32.mrf.mxu0
  %v3056 = vadd.f32 %v2407, %v3055
  %3057 = vmatmul.bf16.gmra.mxu0 %v1808
  %v3058 = vpop.f32.mrf.mxu0
  %v3059 = vadd.f32 %v2410, %v3058
  %v3060 = vpop.f32.mrf.mxu0
  %v3061 = vadd.f32 %v2412, %v3060
  %3062 = vmatmul.bf16.gmra.mxu0 %v1811
  %v3063 = vpop.f32.mrf.mxu0
  %v3064 = vadd.f32 %v2415, %v3063
  %v3065 = vpop.f32.mrf.mxu0
  %v3066 = vadd.f32 %v2417, %v3065
  %3067 = vmatmul.bf16.gmra.mxu0 %v1814
  %v3068 = vpop.f32.mrf.mxu0
  %v3069 = vadd.f32 %v2420, %v3068
  %v3070 = vpop.f32.mrf.mxu0
  %v3071 = vadd.f32 %v2422, %v3070
  %3072 = vmatmul.bf16.gmra.mxu0 %v1817
  %v3073 = vpop.f32.mrf.mxu0
  %v3074 = vadd.f32 %v2425, %v3073
  %v3075 = vpop.f32.mrf.mxu0
  %v3076 = vadd.f32 %v2427, %v3075
  %3077 = vmatmul.bf16.gmra.mxu0 %v1820
  %v3078 = vpop.f32.mrf.mxu0
  %v3079 = vadd.f32 %v2430, %v3078
  %v3080 = vpop.f32.mrf.mxu0
  %v3081 = vadd.f32 %v2432, %v3080
  %3082 = vmatmul.bf16.gmra.mxu0 %v1823
  %v3083 = vpop.f32.mrf.mxu0
  %v3084 = vadd.f32 %v2435, %v3083
  %v3085 = vpop.f32.mrf.mxu0
  %v3086 = vadd.f32 %v2437, %v3085
  %3087 = vmatmul.bf16.gmra.mxu0 %v1826
  %v3088 = vpop.f32.mrf.mxu0
  %v3089 = vadd.f32 %v2440, %v3088
  %v3090 = vpop.f32.mrf.mxu0
  %v3091 = vadd.f32 %v2442, %v3090
  %3092 = vmatmul.bf16.gmra.mxu0 %v1829
  %v3093 = vpop.f32.mrf.mxu0
  %v3094 = vadd.f32 %v2445, %v3093
  %v3095 = vpop.f32.mrf.mxu0
  %v3096 = vadd.f32 %v2447, %v3095
  %3097 = vmatmul.bf16.gmra.mxu0 %v1832
  %v3098 = vpop.f32.mrf.mxu0
  %v3099 = vadd.f32 %v2450, %v3098
  %v3100 = vpop.f32.mrf.mxu0
  %v3101 = vadd.f32 %v2452, %v3100
  %3102 = vmatmul.bf16.gmra.mxu0 %v1835
  %v3103 = vpop.f32.mrf.mxu0
  %v3104 = vadd.f32 %v2455, %v3103
  %v3105 = vpop.f32.mrf.mxu0
  %v3106 = vadd.f32 %v2457, %v3105
  %3107 = vmatmul.bf16.gmra.mxu0 %v1838
  %v3108 = vpop.f32.mrf.mxu0
  %v3109 = vadd.f32 %v2460, %v3108
  %v3110 = vpop.f32.mrf.mxu0
  %v3111 = vadd.f32 %v2462, %v3110
  %3112 = vmatmul.bf16.gmra.mxu0 %v1841
  %v3113 = vpop.f32.mrf.mxu0
  %v3114 = vadd.f32 %v2465, %v3113
  %v3115 = vpop.f32.mrf.mxu0
  %v3116 = vadd.f32 %v2467, %v3115
  %3117 = vmatmul.bf16.gmra.mxu0 %v1844
  %v3118 = vpop.f32.mrf.mxu0
  %v3119 = vadd.f32 %v2470, %v3118
  %v3120 = vpop.f32.mrf.mxu0
  %v3121 = vadd.f32 %v2472, %v3120
  %3122 = vmatmul.bf16.gmra.mxu0 %v1847
  %v3123 = vpop.f32.mrf.mxu0
  %v3124 = vadd.f32 %v2475, %v3123
  %v3125 = vpop.f32.mrf.mxu0
  %v3126 = vadd.f32 %v2477, %v3125
  %3127 = vmatmul.bf16.gmra.mxu0 %v1850
  %v3128 = vpop.f32.mrf.mxu0
  %v3129 = vadd.f32 %v2480, %v3128
  %v3130 = vpop.f32.mrf.mxu0
  %v3131 = vadd.f32 %v2482, %v3130
  %3132 = vmatmul.bf16.gmra.mxu0 %v1853
  %v3133 = vpop.f32.mrf.mxu0
  %v3134 = vadd.f32 %v2485, %v3133
  %v3135 = vpop.f32.mrf.mxu0
  %v3136 = vadd.f32 %v2487, %v3135
  %3137 = vmatmul.bf16.gmra.mxu0 %v1856
  %v3138 = vpop.f32.mrf.mxu0
  %v3139 = vadd.f32 %v2490, %v3138
  %v3140 = vpop.f32.mrf.mxu0
  %v3141 = vadd.f32 %v2492, %v3140
  %3142 = vmatmul.bf16.gmra.mxu0 %v1859
  %v3143 = vpop.f32.mrf.mxu0
  %v3144 = vadd.f32 %v2495, %v3143
  %v3145 = vpop.f32.mrf.mxu0
  %v3146 = vadd.f32 %v2497, %v3145
  %3147 = vmatmul.bf16.gmra.mxu0 %v1862
  %v3148 = vpop.f32.mrf.mxu0
  %v3149 = vadd.f32 %v2500, %v3148
  %v3150 = vpop.f32.mrf.mxu0
  %v3151 = vadd.f32 %v2502, %v3150
  %3152 = vmatmul.bf16.gmra.mxu0 %v1865
  %v3153 = vpop.f32.mrf.mxu0
  %v3154 = vadd.f32 %v2505, %v3153
  %v3155 = vpop.f32.mrf.mxu0
  %v3156 = vadd.f32 %v2507, %v3155
  %3157 = vmatmul.bf16.gmra.mxu0 %v1868
  %v3158 = vpop.f32.mrf.mxu0
  %v3159 = vadd.f32 %v2510, %v3158
  %v3160 = vpop.f32.mrf.mxu0
  %v3161 = vadd.f32 %v2512, %v3160
  %3162 = vmatmul.bf16.gmra.mxu0 %v1871
  %v3163 = vpop.f32.mrf.mxu0
  %v3164 = vadd.f32 %v2515, %v3163
  %v3165 = vpop.f32.mrf.mxu0
  %v3166 = vadd.f32 %v2517, %v3165
  %3167 = vmatmul.bf16.gmra.mxu0 %v1874
  %v3168 = vpop.f32.mrf.mxu0
  %v3169 = vadd.f32 %v2520, %v3168
  %v3170 = vpop.f32.mrf.mxu0
  %v3171 = vadd.f32 %v2522, %v3170
  %3172 = vmatmul.bf16.gmra.mxu0 %v1877
  %v3173 = vpop.f32.mrf.mxu0
  %v3174 = vadd.f32 %v2525, %v3173
  %v3175 = vpop.f32.mrf.mxu0
  %v3176 = vadd.f32 %v2527, %v3175
  %3177 = vmatmul.bf16.gmra.mxu0 %v1880
  %v3178 = vpop.f32.mrf.mxu0
  %v3179 = vadd.f32 %v2530, %v3178
  %v3180 = vpop.f32.mrf.mxu0
  %v3181 = vadd.f32 %v2532, %v3180
  %3182 = vmatmul.bf16.gmra.mxu0 %v1883
  %v3183 = vpop.f32.mrf.mxu0
  %v3184 = vadd.f32 %v2535, %v3183
  %v3185 = vpop.f32.mrf.mxu0
  %v3186 = vadd.f32 %v2537, %v3185
  %3187 = vmatmul.bf16.gmra.mxu0 %v1886
  %v3188 = vpop.f32.mrf.mxu0
  %v3189 = vadd.f32 %v2540, %v3188
  %v3190 = vpop.f32.mrf.mxu0
  %v3191 = vadd.f32 %v2542, %v3190
  %3192 = vdwg.mxu0
  %v3193 = vmax.f32 %v2554, 0.0
  %v3194 = vmax.f32 %v2556, 0.0
  %v3195 = vmax.f32 %v2559, 0.0
  %v3196 = vmax.f32 %v2561, 0.0
  %v3197 = vmax.f32 %v2564, 0.0
  %v3198 = vmax.f32 %v2566, 0.0
  %v3199 = vmax.f32 %v2569, 0.0
  %v3200 = vmax.f32 %v2571, 0.0
  %v3201 = vmax.f32 %v2574, 0.0
  %v3202 = vmax.f32 %v2576, 0.0
  %v3203 = vmax.f32 %v2579, 0.0
  %v3204 = vmax.f32 %v2581, 0.0
  %v3205 = vmax.f32 %v2584, 0.0
  %v3206 = vmax.f32 %v2586, 0.0
  %v3207 = vmax.f32 %v2589, 0.0
  %v3208 = vmax.f32 %v2591, 0.0
  %v3209 = vmax.f32 %v2594, 0.0
  %v3210 = vmax.f32 %v2596, 0.0
  %v3211 = vmax.f32 %v2599, 0.0
  %v3212 = vmax.f32 %v2601, 0.0
  %v3213 = vmax.f32 %v2604, 0.0
  %v3214 = vmax.f32 %v2606, 0.0
  %v3215 = vmax.f32 %v2609, 0.0
  %v3216 = vmax.f32 %v2611, 0.0
  %v3217 = vmax.f32 %v2614, 0.0
  %v3218 = vmax.f32 %v2616, 0.0
  %v3219 = vmax.f32 %v2619, 0.0
  %v3220 = vmax.f32 %v2621, 0.0
  %v3221 = vmax.f32 %v2624, 0.0
  %v3222 = vmax.f32 %v2626, 0.0
  %v3223 = vmax.f32 %v2629, 0.0
  %v3224 = vmax.f32 %v2631, 0.0
  %v3225 = vmax.f32 %v2634, 0.0
  %v3226 = vmax.f32 %v2636, 0.0
  %v3227 = vmax.f32 %v2639, 0.0
  %v3228 = vmax.f32 %v2641, 0.0
  %v3229 = vmax.f32 %v2644, 0.0
  %v3230 = vmax.f32 %v2646, 0.0
  %v3231 = vmax.f32 %v2649, 0.0
  %v3232 = vmax.f32 %v2651, 0.0
  %v3233 = vmax.f32 %v2654, 0.0
  %v3234 = vmax.f32 %v2656, 0.0
  %v3235 = vmax.f32 %v2659, 0.0
  %v3236 = vmax.f32 %v2661, 0.0
  %v3237 = vmax.f32 %v2664, 0.0
  %v3238 = vmax.f32 %v2666, 0.0
  %v3239 = vmax.f32 %v2669, 0.0
  %v3240 = vmax.f32 %v2671, 0.0
  %v3241 = vmax.f32 %v2674, 0.0
  %v3242 = vmax.f32 %v2676, 0.0
  %v3243 = vmax.f32 %v2679, 0.0
  %v3244 = vmax.f32 %v2681, 0.0
  %v3245 = vmax.f32 %v2684, 0.0
  %v3246 = vmax.f32 %v2686, 0.0
  %v3247 = vmax.f32 %v2689, 0.0
  %v3248 = vmax.f32 %v2691, 0.0
  %v3249 = vmax.f32 %v2694, 0.0
  %v3250 = vmax.f32 %v2696, 0.0
  %v3251 = vmax.f32 %v2699, 0.0
  %v3252 = vmax.f32 %v2701, 0.0
  %v3253 = vmax.f32 %v2704, 0.0
  %v3254 = vmax.f32 %v2706, 0.0
  %v3255 = vmax.f32 %v2709, 0.0
  %v3256 = vmax.f32 %v2711, 0.0
  %v3257 = vmax.f32 %v2714, 0.0
  %v3258 = vmax.f32 %v2716, 0.0
  %v3259 = vmax.f32 %v2719, 0.0
  %v3260 = vmax.f32 %v2721, 0.0
  %v3261 = vmax.f32 %v2724, 0.0
  %v3262 = vmax.f32 %v2726, 0.0
  %v3263 = vmax.f32 %v2729, 0.0
  %v3264 = vmax.f32 %v2731, 0.0
  %v3265 = vmax.f32 %v2734, 0.0
  %v3266 = vmax.f32 %v2736, 0.0
  %v3267 = vmax.f32 %v2739, 0.0
  %v3268 = vmax.f32 %v2741, 0.0
  %v3269 = vmax.f32 %v2744, 0.0
  %v3270 = vmax.f32 %v2746, 0.0
  %v3271 = vmax.f32 %v2749, 0.0
  %v3272 = vmax.f32 %v2751, 0.0
  %v3273 = vmax.f32 %v2754, 0.0
  %v3274 = vmax.f32 %v2756, 0.0
  %v3275 = vmax.f32 %v2759, 0.0
  %v3276 = vmax.f32 %v2761, 0.0
  %v3277 = vmax.f32 %v2764, 0.0
  %v3278 = vmax.f32 %v2766, 0.0
  %v3279 = vmax.f32 %v2769, 0.0
  %v3280 = vmax.f32 %v2771, 0.0
  %v3281 = vmax.f32 %v2774, 0.0
  %v3282 = vmax.f32 %v2776, 0.0
  %v3283 = vmax.f32 %v2779, 0.0
  %v3284 = vmax.f32 %v2781, 0.0
  %v3285 = vmax.f32 %v2784, 0.0
  %v3286 = vmax.f32 %v2786, 0.0
  %v3287 = vmax.f32 %v2789, 0.0
  %v3288 = vmax.f32 %v2791, 0.0
  %v3289 = vmax.f32 %v2794, 0.0
  %v3290 = vmax.f32 %v2796, 0.0
  %v3291 = vmax.f32 %v2799, 0.0
  %v3292 = vmax.f32 %v2801, 0.0
  %v3293 = vmax.f32 %v2804, 0.0
  %v3294 = vmax.f32 %v2806, 0.0
  %v3295 = vmax.f32 %v2809, 0.0
  %v3296 = vmax.f32 %v2811, 0.0
  %v3297 = vmax.f32 %v2814, 0.0
  %v3298 = vmax.f32 %v2816, 0.0
  %v3299 = vmax.f32 %v2819, 0.0
  %v3300 = vmax.f32 %v2821, 0.0
  %v3301 = vmax.f32 %v2824, 0.0
  %v3302 = vmax.f32 %v2826, 0.0
  %v3303 = vmax.f32 %v2829, 0.0
  %v3304 = vmax.f32 %v2831, 0.0
  %v3305 = vmax.f32 %v2834, 0.0
  %v3306 = vmax.f32 %v2836, 0.0
  %v3307 = vmax.f32 %v2839, 0.0
  %v3308 = vmax.f32 %v2841, 0.0
  %v3309 = vmax.f32 %v2844, 0.0
  %v3310 = vmax.f32 %v2846, 0.0
  %v3311 = vmax.f32 %v2849, 0.0
  %v3312 = vmax.f32 %v2851, 0.0
  %v3313 = vmax.f32 %v2854, 0.0
  %v3314 = vmax.f32 %v2856, 0.0
  %v3315 = vmax.f32 %v2859, 0.0
  %v3316 = vmax.f32 %v2861, 0.0
  %v3317 = vmax.f32 %v2864, 0.0
  %v3318 = vmax.f32 %v2866, 0.0
  %v3319 = vmax.f32 %v2869, 0.0
  %v3320 = vmax.f32 %v2871, 0.0
  %v3321 = vmax.f32 %v2874, 0.0
  %v3322 = vmax.f32 %v2876, 0.0
  %v3323 = vmax.f32 %v2879, 0.0
  %v3324 = vmax.f32 %v2881, 0.0
  %v3325 = vmax.f32 %v2884, 0.0
  %v3326 = vmax.f32 %v2886, 0.0
  %v3327 = vmax.f32 %v2889, 0.0
  %v3328 = vmax.f32 %v2891, 0.0
  %v3329 = vmax.f32 %v2894, 0.0
  %v3330 = vmax.f32 %v2896, 0.0
  %v3331 = vmax.f32 %v2899, 0.0
  %v3332 = vmax.f32 %v2901, 0.0
  %v3333 = vmax.f32 %v2904, 0.0
  %v3334 = vmax.f32 %v2906, 0.0
  %v3335 = vmax.f32 %v2909, 0.0
  %v3336 = vmax.f32 %v2911, 0.0
  %v3337 = vmax.f32 %v2914, 0.0
  %v3338 = vmax.f32 %v2916, 0.0
  %v3339 = vmax.f32 %v2919, 0.0
  %v3340 = vmax.f32 %v2921, 0.0
  %v3341 = vmax.f32 %v2924, 0.0
  %v3342 = vmax.f32 %v2926, 0.0
  %v3343 = vmax.f32 %v2929, 0.0
  %v3344 = vmax.f32 %v2931, 0.0
  %v3345 = vmax.f32 %v2934, 0.0
  %v3346 = vmax.f32 %v2936, 0.0
  %v3347 = vmax.f32 %v2939, 0.0
  %v3348 = vmax.f32 %v2941, 0.0
  %v3349 = vmax.f32 %v2944, 0.0
  %v3350 = vmax.f32 %v2946, 0.0
  %v3351 = vmax.f32 %v2949, 0.0
  %v3352 = vmax.f32 %v2951, 0.0
  %v3353 = vmax.f32 %v2954, 0.0
  %v3354 = vmax.f32 %v2956, 0.0
  %v3355 = vmax.f32 %v2959, 0.0
  %v3356 = vmax.f32 %v2961, 0.0
  %v3357 = vmax.f32 %v2964, 0.0
  %v3358 = vmax.f32 %v2966, 0.0
  %v3359 = vmax.f32 %v2969, 0.0
  %v3360 = vmax.f32 %v2971, 0.0
  %v3361 = vmax.f32 %v2974, 0.0
  %v3362 = vmax.f32 %v2976, 0.0
  %v3363 = vmax.f32 %v2979, 0.0
  %v3364 = vmax.f32 %v2981, 0.0
  %v3365 = vmax.f32 %v2984, 0.0
  %v3366 = vmax.f32 %v2986, 0.0
  %v3367 = vmax.f32 %v2989, 0.0
  %v3368 = vmax.f32 %v2991, 0.0
  %v3369 = vmax.f32 %v2994, 0.0
  %v3370 = vmax.f32 %v2996, 0.0
  %v3371 = vmax.f32 %v2999, 0.0
  %v3372 = vmax.f32 %v3001, 0.0
  %v3373 = vmax.f32 %v3004, 0.0
  %v3374 = vmax.f32 %v3006, 0.0
  %v3375 = vmax.f32 %v3009, 0.0
  %v3376 = vmax.f32 %v3011, 0.0
  %v3377 = vmax.f32 %v3014, 0.0
  %v3378 = vmax.f32 %v3016, 0.0
  %v3379 = vmax.f32 %v3019, 0.0
  %v3380 = vmax.f32 %v3021, 0.0
  %v3381 = vmax.f32 %v3024, 0.0
  %v3382 = vmax.f32 %v3026, 0.0
  %v3383 = vmax.f32 %v3029, 0.0
  %v3384 = vmax.f32 %v3031, 0.0
  %v3385 = vmax.f32 %v3034, 0.0
  %v3386 = vmax.f32 %v3036, 0.0
  %v3387 = vmax.f32 %v3039, 0.0
  %v3388 = vmax.f32 %v3041, 0.0
  %v3389 = vmax.f32 %v3044, 0.0
  %v3390 = vmax.f32 %v3046, 0.0
  %v3391 = vmax.f32 %v3049, 0.0
  %v3392 = vmax.f32 %v3051, 0.0
  %v3393 = vmax.f32 %v3054, 0.0
  %v3394 = vmax.f32 %v3056, 0.0
  %v3395 = vmax.f32 %v3059, 0.0
  %v3396 = vmax.f32 %v3061, 0.0
  %v3397 = vmax.f32 %v3064, 0.0
  %v3398 = vmax.f32 %v3066, 0.0
  %v3399 = vmax.f32 %v3069, 0.0
  %v3400 = vmax.f32 %v3071, 0.0
  %v3401 = vmax.f32 %v3074, 0.0
  %v3402 = vmax.f32 %v3076, 0.0
  %v3403 = vmax.f32 %v3079, 0.0
  %v3404 = vmax.f32 %v3081, 0.0
  %v3405 = vmax.f32 %v3084, 0.0
  %v3406 = vmax.f32 %v3086, 0.0
  %v3407 = vmax.f32 %v3089, 0.0
  %v3408 = vmax.f32 %v3091, 0.0
  %v3409 = vmax.f32 %v3094, 0.0
  %v3410 = vmax.f32 %v3096, 0.0
  %v3411 = vmax.f32 %v3099, 0.0
  %v3412 = vmax.f32 %v3101, 0.0
  %v3413 = vmax.f32 %v3104, 0.0
  %v3414 = vmax.f32 %v3106, 0.0
  %v3415 = vmax.f32 %v3109, 0.0
  %v3416 = vmax.f32 %v3111, 0.0
  %v3417 = vmax.f32 %v3114, 0.0
  %v3418 = vmax.f32 %v3116, 0.0
  %v3419 = vmax.f32 %v3119, 0.0
  %v3420 = vmax.f32 %v3121, 0.0
  %v3421 = vmax.f32 %v3124, 0.0
  %v3422 = vmax.f32 %v3126, 0.0
  %v3423 = vmax.f32 %v3129, 0.0
  %v3424 = vmax.f32 %v3131, 0.0
  %v3425 = vmax.f32 %v3134, 0.0
  %v3426 = vmax.f32 %v3136, 0.0
  %v3427 = vmax.f32 %v3139, 0.0
  %v3428 = vmax.f32 %v3141, 0.0
  %v3429 = vmax.f32 %v3144, 0.0
  %v3430 = vmax.f32 %v3146, 0.0
  %v3431 = vmax.f32 %v3149, 0.0
  %v3432 = vmax.f32 %v3151, 0.0
  %v3433 = vmax.f32 %v3154, 0.0
  %v3434 = vmax.f32 %v3156, 0.0
  %v3435 = vmax.f32 %v3159, 0.0
  %v3436 = vmax.f32 %v3161, 0.0
  %v3437 = vmax.f32 %v3164, 0.0
  %v3438 = vmax.f32 %v3166, 0.0
  %v3439 = vmax.f32 %v3169, 0.0
  %v3440 = vmax.f32 %v3171, 0.0
  %v3441 = vmax.f32 %v3174, 0.0
  %v3442 = vmax.f32 %v3176, 0.0
  %v3443 = vmax.f32 %v3179, 0.0
  %v3444 = vmax.f32 %v3181, 0.0
  %v3445 = vmax.f32 %v3184, 0.0
  %v3446 = vmax.f32 %v3186, 0.0
  %v3447 = vmax.f32 %v3189, 0.0
  %v3448 = vmax.f32 %v3191, 0.0
  %v3449 = vpack.c.bf16 %v3193, %v3193
  %v3450 = vpack.c.bf16 %v3194, %v3194
  %v3451 = vpack.c.bf16 %v3195, %v3195
  %v3452 = vpack.c.bf16 %v3196, %v3196
  %v3453 = vpack.c.bf16 %v3197, %v3197
  %v3454 = vpack.c.bf16 %v3198, %v3198
  %v3455 = vpack.c.bf16 %v3199, %v3199
  %v3456 = vpack.c.bf16 %v3200, %v3200
  %v3457 = vpack.c.bf16 %v3201, %v3201
  %v3458 = vpack.c.bf16 %v3202, %v3202
  %v3459 = vpack.c.bf16 %v3203, %v3203
  %v3460 = vpack.c.bf16 %v3204, %v3204
  %v3461 = vpack.c.bf16 %v3205, %v3205
  %v3462 = vpack.c.bf16 %v3206, %v3206
  %v3463 = vpack.c.bf16 %v3207, %v3207
  %v3464 = vpack.c.bf16 %v3208, %v3208
  %v3465 = vpack.c.bf16 %v3209, %v3209
  %v3466 = vpack.c.bf16 %v3210, %v3210
  %v3467 = vpack.c.bf16 %v3211, %v3211
  %v3468 = vpack.c.bf16 %v3212, %v3212
  %v3469 = vpack.c.bf16 %v3213, %v3213
  %v3470 = vpack.c.bf16 %v3214, %v3214
  %v3471 = vpack.c.bf16 %v3215, %v3215
  %v3472 = vpack.c.bf16 %v3216, %v3216
  %v3473 = vpack.c.bf16 %v3217, %v3217
  %v3474 = vpack.c.bf16 %v3218, %v3218
  %v3475 = vpack.c.bf16 %v3219, %v3219
  %v3476 = vpack.c.bf16 %v3220, %v3220
  %v3477 = vpack.c.bf16 %v3221, %v3221
  %v3478 = vpack.c.bf16 %v3222, %v3222
  %v3479 = vpack.c.bf16 %v3223, %v3223
  %v3480 = vpack.c.bf16 %v3224, %v3224
  %v3481 = vpack.c.bf16 %v3225, %v3225
  %v3482 = vpack.c.bf16 %v3226, %v3226
  %v3483 = vpack.c.bf16 %v3227, %v3227
  %v3484 = vpack.c.bf16 %v3228, %v3228
  %v3485 = vpack.c.bf16 %v3229, %v3229
  %v3486 = vpack.c.bf16 %v3230, %v3230
  %v3487 = vpack.c.bf16 %v3231, %v3231
  %v3488 = vpack.c.bf16 %v3232, %v3232
  %v3489 = vpack.c.bf16 %v3233, %v3233
  %v3490 = vpack.c.bf16 %v3234, %v3234
  %v3491 = vpack.c.bf16 %v3235, %v3235
  %v3492 = vpack.c.bf16 %v3236, %v3236
  %v3493 = vpack.c.bf16 %v3237, %v3237
  %v3494 = vpack.c.bf16 %v3238, %v3238
  %v3495 = vpack.c.bf16 %v3239, %v3239
  %v3496 = vpack.c.bf16 %v3240, %v3240
  %v3497 = vpack.c.bf16 %v3241, %v3241
  %v3498 = vpack.c.bf16 %v3242, %v3242
  %v3499 = vpack.c.bf16 %v3243, %v3243
  %v3500 = vpack.c.bf16 %v3244, %v3244
  %v3501 = vpack.c.bf16 %v3245, %v3245
  %v3502 = vpack.c.bf16 %v3246, %v3246
  %v3503 = vpack.c.bf16 %v3247, %v3247
  %v3504 = vpack.c.bf16 %v3248, %v3248
  %v3505 = vpack.c.bf16 %v3249, %v3249
  %v3506 = vpack.c.bf16 %v3250, %v3250
  %v3507 = vpack.c.bf16 %v3251, %v3251
  %v3508 = vpack.c.bf16 %v3252, %v3252
  %v3509 = vpack.c.bf16 %v3253, %v3253
  %v3510 = vpack.c.bf16 %v3254, %v3254
  %v3511 = vpack.c.bf16 %v3255, %v3255
  %v3512 = vpack.c.bf16 %v3256, %v3256
  %v3513 = vpack.c.bf16 %v3257, %v3257
  %v3514 = vpack.c.bf16 %v3258, %v3258
  %v3515 = vpack.c.bf16 %v3259, %v3259
  %v3516 = vpack.c.bf16 %v3260, %v3260
  %v3517 = vpack.c.bf16 %v3261, %v3261
  %v3518 = vpack.c.bf16 %v3262, %v3262
  %v3519 = vpack.c.bf16 %v3263, %v3263
  %v3520 = vpack.c.bf16 %v3264, %v3264
  %v3521 = vpack.c.bf16 %v3265, %v3265
  %v3522 = vpack.c.bf16 %v3266, %v3266
  %v3523 = vpack.c.bf16 %v3267, %v3267
  %v3524 = vpack.c.bf16 %v3268, %v3268
  %v3525 = vpack.c.bf16 %v3269, %v3269
  %v3526 = vpack.c.bf16 %v3270, %v3270
  %v3527 = vpack.c.bf16 %v3271, %v3271
  %v3528 = vpack.c.bf16 %v3272, %v3272
  %v3529 = vpack.c.bf16 %v3273, %v3273
  %v3530 = vpack.c.bf16 %v3274, %v3274
  %v3531 = vpack.c.bf16 %v3275, %v3275
  %v3532 = vpack.c.bf16 %v3276, %v3276
  %v3533 = vpack.c.bf16 %v3277, %v3277
  %v3534 = vpack.c.bf16 %v3278, %v3278
  %v3535 = vpack.c.bf16 %v3279, %v3279
  %v3536 = vpack.c.bf16 %v3280, %v3280
  %v3537 = vpack.c.bf16 %v3281, %v3281
  %v3538 = vpack.c.bf16 %v3282, %v3282
  %v3539 = vpack.c.bf16 %v3283, %v3283
  %v3540 = vpack.c.bf16 %v3284, %v3284
  %v3541 = vpack.c.bf16 %v3285, %v3285
  %v3542 = vpack.c.bf16 %v3286, %v3286
  %v3543 = vpack.c.bf16 %v3287, %v3287
  %v3544 = vpack.c.bf16 %v3288, %v3288
  %v3545 = vpack.c.bf16 %v3289, %v3289
  %v3546 = vpack.c.bf16 %v3290, %v3290
  %v3547 = vpack.c.bf16 %v3291, %v3291
  %v3548 = vpack.c.bf16 %v3292, %v3292
  %v3549 = vpack.c.bf16 %v3293, %v3293
  %v3550 = vpack.c.bf16 %v3294, %v3294
  %v3551 = vpack.c.bf16 %v3295, %v3295
  %v3552 = vpack.c.bf16 %v3296, %v3296
  %v3553 = vpack.c.bf16 %v3297, %v3297
  %v3554 = vpack.c.bf16 %v3298, %v3298
  %v3555 = vpack.c.bf16 %v3299, %v3299
  %v3556 = vpack.c.bf16 %v3300, %v3300
  %v3557 = vpack.c.bf16 %v3301, %v3301
  %v3558 = vpack.c.bf16 %v3302, %v3302
  %v3559 = vpack.c.bf16 %v3303, %v3303
  %v3560 = vpack.c.bf16 %v3304, %v3304
  %v3561 = vpack.c.bf16 %v3305, %v3305
  %v3562 = vpack.c.bf16 %v3306, %v3306
  %v3563 = vpack.c.bf16 %v3307, %v3307
  %v3564 = vpack.c.bf16 %v3308, %v3308
  %v3565 = vpack.c.bf16 %v3309, %v3309
  %v3566 = vpack.c.bf16 %v3310, %v3310
  %v3567 = vpack.c.bf16 %v3311, %v3311
  %v3568 = vpack.c.bf16 %v3312, %v3312
  %v3569 = vpack.c.bf16 %v3313, %v3313
  %v3570 = vpack.c.bf16 %v3314, %v3314
  %v3571 = vpack.c.bf16 %v3315, %v3315
  %v3572 = vpack.c.bf16 %v3316, %v3316
  %v3573 = vpack.c.bf16 %v3317, %v3317
  %v3574 = vpack.c.bf16 %v3318, %v3318
  %v3575 = vpack.c.bf16 %v3319, %v3319
  %v3576 = vpack.c.bf16 %v3320, %v3320
  %v3577 = vpack.c.bf16 %v3321, %v3321
  %v3578 = vpack.c.bf16 %v3322, %v3322
  %v3579 = vpack.c.bf16 %v3323, %v3323
  %v3580 = vpack.c.bf16 %v3324, %v3324
  %v3581 = vpack.c.bf16 %v3325, %v3325
  %v3582 = vpack.c.bf16 %v3326, %v3326
  %v3583 = vpack.c.bf16 %v3327, %v3327
  %v3584 = vpack.c.bf16 %v3328, %v3328
  %v3585 = vpack.c.bf16 %v3329, %v3329
  %v3586 = vpack.c.bf16 %v3330, %v3330
  %v3587 = vpack.c.bf16 %v3331, %v3331
  %v3588 = vpack.c.bf16 %v3332, %v3332
  %v3589 = vpack.c.bf16 %v3333, %v3333
  %v3590 = vpack.c.bf16 %v3334, %v3334
  %v3591 = vpack.c.bf16 %v3335, %v3335
  %v3592 = vpack.c.bf16 %v3336, %v3336
  %v3593 = vpack.c.bf16 %v3337, %v3337
  %v3594 = vpack.c.bf16 %v3338, %v3338
  %v3595 = vpack.c.bf16 %v3339, %v3339
  %v3596 = vpack.c.bf16 %v3340, %v3340
  %v3597 = vpack.c.bf16 %v3341, %v3341
  %v3598 = vpack.c.bf16 %v3342, %v3342
  %v3599 = vpack.c.bf16 %v3343, %v3343
  %v3600 = vpack.c.bf16 %v3344, %v3344
  %v3601 = vpack.c.bf16 %v3345, %v3345
  %v3602 = vpack.c.bf16 %v3346, %v3346
  %v3603 = vpack.c.bf16 %v3347, %v3347
  %v3604 = vpack.c.bf16 %v3348, %v3348
  %v3605 = vpack.c.bf16 %v3349, %v3349
  %v3606 = vpack.c.bf16 %v3350, %v3350
  %v3607 = vpack.c.bf16 %v3351, %v3351
  %v3608 = vpack.c.bf16 %v3352, %v3352
  %v3609 = vpack.c.bf16 %v3353, %v3353
  %v3610 = vpack.c.bf16 %v3354, %v3354
  %v3611 = vpack.c.bf16 %v3355, %v3355
  %v3612 = vpack.c.bf16 %v3356, %v3356
  %v3613 = vpack.c.bf16 %v3357, %v3357
  %v3614 = vpack.c.bf16 %v3358, %v3358
  %v3615 = vpack.c.bf16 %v3359, %v3359
  %v3616 = vpack.c.bf16 %v3360, %v3360
  %v3617 = vpack.c.bf16 %v3361, %v3361
  %v3618 = vpack.c.bf16 %v3362, %v3362
  %v3619 = vpack.c.bf16 %v3363, %v3363
  %v3620 = vpack.c.bf16 %v3364, %v3364
  %v3621 = vpack.c.bf16 %v3365, %v3365
  %v3622 = vpack.c.bf16 %v3366, %v3366
  %v3623 = vpack.c.bf16 %v3367, %v3367
  %v3624 = vpack.c.bf16 %v3368, %v3368
  %v3625 = vpack.c.bf16 %v3369, %v3369
  %v3626 = vpack.c.bf16 %v3370, %v3370
  %v3627 = vpack.c.bf16 %v3371, %v3371
  %v3628 = vpack.c.bf16 %v3372, %v3372
  %v3629 = vpack.c.bf16 %v3373, %v3373
  %v3630 = vpack.c.bf16 %v3374, %v3374
  %v3631 = vpack.c.bf16 %v3375, %v3375
  %v3632 = vpack.c.bf16 %v3376, %v3376
  %v3633 = vpack.c.bf16 %v3377, %v3377
  %v3634 = vpack.c.bf16 %v3378, %v3378
  %v3635 = vpack.c.bf16 %v3379, %v3379
  %v3636 = vpack.c.bf16 %v3380, %v3380
  %v3637 = vpack.c.bf16 %v3381, %v3381
  %v3638 = vpack.c.bf16 %v3382, %v3382
  %v3639 = vpack.c.bf16 %v3383, %v3383
  %v3640 = vpack.c.bf16 %v3384, %v3384
  %v3641 = vpack.c.bf16 %v3385, %v3385
  %v3642 = vpack.c.bf16 %v3386, %v3386
  %v3643 = vpack.c.bf16 %v3387, %v3387
  %v3644 = vpack.c.bf16 %v3388, %v3388
  %v3645 = vpack.c.bf16 %v3389, %v3389
  %v3646 = vpack.c.bf16 %v3390, %v3390
  %v3647 = vpack.c.bf16 %v3391, %v3391
  %v3648 = vpack.c.bf16 %v3392, %v3392
  %v3649 = vpack.c.bf16 %v3393, %v3393
  %v3650 = vpack.c.bf16 %v3394, %v3394
  %v3651 = vpack.c.bf16 %v3395, %v3395
  %v3652 = vpack.c.bf16 %v3396, %v3396
  %v3653 = vpack.c.bf16 %v3397, %v3397
  %v3654 = vpack.c.bf16 %v3398, %v3398
  %v3655 = vpack.c.bf16 %v3399, %v3399
  %v3656 = vpack.c.bf16 %v3400, %v3400
  %v3657 = vpack.c.bf16 %v3401, %v3401
  %v3658 = vpack.c.bf16 %v3402, %v3402
  %v3659 = vpack.c.bf16 %v3403, %v3403
  %v3660 = vpack.c.bf16 %v3404, %v3404
  %v3661 = vpack.c.bf16 %v3405, %v3405
  %v3662 = vpack.c.bf16 %v3406, %v3406
  %v3663 = vpack.c.bf16 %v3407, %v3407
  %v3664 = vpack.c.bf16 %v3408, %v3408
  %v3665 = vpack.c.bf16 %v3409, %v3409
  %v3666 = vpack.c.bf16 %v3410, %v3410
  %v3667 = vpack.c.bf16 %v3411, %v3411
  %v3668 = vpack.c.bf16 %v3412, %v3412
  %v3669 = vpack.c.bf16 %v3413, %v3413
  %v3670 = vpack.c.bf16 %v3414, %v3414
  %v3671 = vpack.c.bf16 %v3415, %v3415
  %v3672 = vpack.c.bf16 %v3416, %v3416
  %v3673 = vpack.c.bf16 %v3417, %v3417
  %v3674 = vpack.c.bf16 %v3418, %v3418
  %v3675 = vpack.c.bf16 %v3419, %v3419
  %v3676 = vpack.c.bf16 %v3420, %v3420
  %v3677 = vpack.c.bf16 %v3421, %v3421
  %v3678 = vpack.c.bf16 %v3422, %v3422
  %v3679 = vpack.c.bf16 %v3423, %v3423
  %v3680 = vpack.c.bf16 %v3424, %v3424
  %v3681 = vpack.c.bf16 %v3425, %v3425
  %v3682 = vpack.c.bf16 %v3426, %v3426
  %v3683 = vpack.c.bf16 %v3427, %v3427
  %v3684 = vpack.c.bf16 %v3428, %v3428
  %v3685 = vpack.c.bf16 %v3429, %v3429
  %v3686 = vpack.c.bf16 %v3430, %v3430
  %v3687 = vpack.c.bf16 %v3431, %v3431
  %v3688 = vpack.c.bf16 %v3432, %v3432
  %v3689 = vpack.c.bf16 %v3433, %v3433
  %v3690 = vpack.c.bf16 %v3434, %v3434
  %v3691 = vpack.c.bf16 %v3435, %v3435
  %v3692 = vpack.c.bf16 %v3436, %v3436
  %v3693 = vpack.c.bf16 %v3437, %v3437
  %v3694 = vpack.c.bf16 %v3438, %v3438
  %v3695 = vpack.c.bf16 %v3439, %v3439
  %v3696 = vpack.c.bf16 %v3440, %v3440
  %v3697 = vpack.c.bf16 %v3441, %v3441
  %v3698 = vpack.c.bf16 %v3442, %v3442
  %v3699 = vpack.c.bf16 %v3443, %v3443
  %v3700 = vpack.c.bf16 %v3444, %v3444
  %v3701 = vpack.c.bf16 %v3445, %v3445
  %v3702 = vpack.c.bf16 %v3446, %v3446
  %v3703 = vpack.c.bf16 %v3447, %v3447
  %v3704 = vpack.c.bf16 %v3448, %v3448
  %vm3705 = vcmask 519168
  %3706 = vst.msk [vmem:[%s3] sm:$0xf] %vm3705, %v3449
  %3707 = vst.msk [vmem:[%s3 + $0x4] sm:$0xf] %vm3705, %v3450
  %3708 = vst.msk [vmem:[%s3 + $0x8] sm:$0xf] %vm3705, %v3451
  %3709 = vst.msk [vmem:[%s3 + $0xc] sm:$0xf] %vm3705, %v3452
  %3710 = vst.msk [vmem:[%s3 + $0x10] sm:$0xf] %vm3705, %v3453
  %3711 = vst.msk [vmem:[%s3 + $0x14] sm:$0xf] %vm3705, %v3454
  %3712 = vst.msk [vmem:[%s3 + $0x18] sm:$0xf] %vm3705, %v3455
  %3713 = vst.msk [vmem:[%s3 + $0x1c] sm:$0xf] %vm3705, %v3456
  %3714 = vst.msk [vmem:[%s3 + $0x20] sm:$0xf] %vm3705, %v3457
  %3715 = vst.msk [vmem:[%s3 + $0x24] sm:$0xf] %vm3705, %v3458
  %3716 = vst.msk [vmem:[%s3 + $0x28] sm:$0xf] %vm3705, %v3459
  %3717 = vst.msk [vmem:[%s3 + $0x2c] sm:$0xf] %vm3705, %v3460
  %3718 = vst.msk [vmem:[%s3 + $0x30] sm:$0xf] %vm3705, %v3461
  %3719 = vst.msk [vmem:[%s3 + $0x34] sm:$0xf] %vm3705, %v3462
  %3720 = vst.msk [vmem:[%s3 + $0x38] sm:$0xf] %vm3705, %v3463
  %3721 = vst.msk [vmem:[%s3 + $0x3c] sm:$0xf] %vm3705, %v3464
  %3722 = vst.msk [vmem:[%s3 + $0x40] sm:$0xf] %vm3705, %v3465
  %3723 = vst.msk [vmem:[%s3 + $0x44] sm:$0xf] %vm3705, %v3466
  %3724 = vst.msk [vmem:[%s3 + $0x48] sm:$0xf] %vm3705, %v3467
  %3725 = vst.msk [vmem:[%s3 + $0x4c] sm:$0xf] %vm3705, %v3468
  %3726 = vst.msk [vmem:[%s3 + $0x50] sm:$0xf] %vm3705, %v3469
  %3727 = vst.msk [vmem:[%s3 + $0x54] sm:$0xf] %vm3705, %v3470
  %3728 = vst.msk [vmem:[%s3 + $0x58] sm:$0xf] %vm3705, %v3471
  %3729 = vst.msk [vmem:[%s3 + $0x5c] sm:$0xf] %vm3705, %v3472
  %3730 = vst.msk [vmem:[%s3 + $0x60] sm:$0xf] %vm3705, %v3473
  %3731 = vst.msk [vmem:[%s3 + $0x64] sm:$0xf] %vm3705, %v3474
  %3732 = vst.msk [vmem:[%s3 + $0x68] sm:$0xf] %vm3705, %v3475
  %3733 = vst.msk [vmem:[%s3 + $0x6c] sm:$0xf] %vm3705, %v3476
  %3734 = vst.msk [vmem:[%s3 + $0x70] sm:$0xf] %vm3705, %v3477
  %3735 = vst.msk [vmem:[%s3 + $0x74] sm:$0xf] %vm3705, %v3478
  %3736 = vst.msk [vmem:[%s3 + $0x78] sm:$0xf] %vm3705, %v3479
  %3737 = vst.msk [vmem:[%s3 + $0x7c] sm:$0xf] %vm3705, %v3480
  %3738 = vst.msk [vmem:[%s3 + $0x80] sm:$0xf] %vm3705, %v3481
  %3739 = vst.msk [vmem:[%s3 + $0x84] sm:$0xf] %vm3705, %v3482
  %3740 = vst.msk [vmem:[%s3 + $0x88] sm:$0xf] %vm3705, %v3483
  %3741 = vst.msk [vmem:[%s3 + $0x8c] sm:$0xf] %vm3705, %v3484
  %3742 = vst.msk [vmem:[%s3 + $0x90] sm:$0xf] %vm3705, %v3485
  %3743 = vst.msk [vmem:[%s3 + $0x94] sm:$0xf] %vm3705, %v3486
  %3744 = vst.msk [vmem:[%s3 + $0x98] sm:$0xf] %vm3705, %v3487
  %3745 = vst.msk [vmem:[%s3 + $0x9c] sm:$0xf] %vm3705, %v3488
  %3746 = vst.msk [vmem:[%s3 + $0xa0] sm:$0xf] %vm3705, %v3489
  %3747 = vst.msk [vmem:[%s3 + $0xa4] sm:$0xf] %vm3705, %v3490
  %3748 = vst.msk [vmem:[%s3 + $0xa8] sm:$0xf] %vm3705, %v3491
  %3749 = vst.msk [vmem:[%s3 + $0xac] sm:$0xf] %vm3705, %v3492
  %3750 = vst.msk [vmem:[%s3 + $0xb0] sm:$0xf] %vm3705, %v3493
  %3751 = vst.msk [vmem:[%s3 + $0xb4] sm:$0xf] %vm3705, %v3494
  %3752 = vst.msk [vmem:[%s3 + $0xb8] sm:$0xf] %vm3705, %v3495
  %3753 = vst.msk [vmem:[%s3 + $0xbc] sm:$0xf] %vm3705, %v3496
  %3754 = vst.msk [vmem:[%s3 + $0xc0] sm:$0xf] %vm3705, %v3497
  %3755 = vst.msk [vmem:[%s3 + $0xc4] sm:$0xf] %vm3705, %v3498
  %3756 = vst.msk [vmem:[%s3 + $0xc8] sm:$0xf] %vm3705, %v3499
  %3757 = vst.msk [vmem:[%s3 + $0xcc] sm:$0xf] %vm3705, %v3500
  %3758 = vst.msk [vmem:[%s3 + $0xd0] sm:$0xf] %vm3705, %v3501
  %3759 = vst.msk [vmem:[%s3 + $0xd4] sm:$0xf] %vm3705, %v3502
  %3760 = vst.msk [vmem:[%s3 + $0xd8] sm:$0xf] %vm3705, %v3503
  %3761 = vst.msk [vmem:[%s3 + $0xdc] sm:$0xf] %vm3705, %v3504
  %3762 = vst.msk [vmem:[%s3 + $0xe0] sm:$0xf] %vm3705, %v3505
  %3763 = vst.msk [vmem:[%s3 + $0xe4] sm:$0xf] %vm3705, %v3506
  %3764 = vst.msk [vmem:[%s3 + $0xe8] sm:$0xf] %vm3705, %v3507
  %3765 = vst.msk [vmem:[%s3 + $0xec] sm:$0xf] %vm3705, %v3508
  %3766 = vst.msk [vmem:[%s3 + $0xf0] sm:$0xf] %vm3705, %v3509
  %3767 = vst.msk [vmem:[%s3 + $0xf4] sm:$0xf] %vm3705, %v3510
  %3768 = vst.msk [vmem:[%s3 + $0xf8] sm:$0xf] %vm3705, %v3511
  %3769 = vst.msk [vmem:[%s3 + $0xfc] sm:$0xf] %vm3705, %v3512
  %3770 = vst.msk [vmem:[%s3 + $0x100] sm:$0xf] %vm3705, %v3513
  %3771 = vst.msk [vmem:[%s3 + $0x104] sm:$0xf] %vm3705, %v3514
  %3772 = vst.msk [vmem:[%s3 + $0x108] sm:$0xf] %vm3705, %v3515
  %3773 = vst.msk [vmem:[%s3 + $0x10c] sm:$0xf] %vm3705, %v3516
  %3774 = vst.msk [vmem:[%s3 + $0x110] sm:$0xf] %vm3705, %v3517
  %3775 = vst.msk [vmem:[%s3 + $0x114] sm:$0xf] %vm3705, %v3518
  %3776 = vst.msk [vmem:[%s3 + $0x118] sm:$0xf] %vm3705, %v3519
  %3777 = vst.msk [vmem:[%s3 + $0x11c] sm:$0xf] %vm3705, %v3520
  %3778 = vst.msk [vmem:[%s3 + $0x120] sm:$0xf] %vm3705, %v3521
  %3779 = vst.msk [vmem:[%s3 + $0x124] sm:$0xf] %vm3705, %v3522
  %3780 = vst.msk [vmem:[%s3 + $0x128] sm:$0xf] %vm3705, %v3523
  %3781 = vst.msk [vmem:[%s3 + $0x12c] sm:$0xf] %vm3705, %v3524
  %3782 = vst.msk [vmem:[%s3 + $0x130] sm:$0xf] %vm3705, %v3525
  %3783 = vst.msk [vmem:[%s3 + $0x134] sm:$0xf] %vm3705, %v3526
  %3784 = vst.msk [vmem:[%s3 + $0x138] sm:$0xf] %vm3705, %v3527
  %3785 = vst.msk [vmem:[%s3 + $0x13c] sm:$0xf] %vm3705, %v3528
  %3786 = vst.msk [vmem:[%s3 + $0x140] sm:$0xf] %vm3705, %v3529
  %3787 = vst.msk [vmem:[%s3 + $0x144] sm:$0xf] %vm3705, %v3530
  %3788 = vst.msk [vmem:[%s3 + $0x148] sm:$0xf] %vm3705, %v3531
  %3789 = vst.msk [vmem:[%s3 + $0x14c] sm:$0xf] %vm3705, %v3532
  %3790 = vst.msk [vmem:[%s3 + $0x150] sm:$0xf] %vm3705, %v3533
  %3791 = vst.msk [vmem:[%s3 + $0x154] sm:$0xf] %vm3705, %v3534
  %3792 = vst.msk [vmem:[%s3 + $0x158] sm:$0xf] %vm3705, %v3535
  %3793 = vst.msk [vmem:[%s3 + $0x15c] sm:$0xf] %vm3705, %v3536
  %3794 = vst.msk [vmem:[%s3 + $0x160] sm:$0xf] %vm3705, %v3537
  %3795 = vst.msk [vmem:[%s3 + $0x164] sm:$0xf] %vm3705, %v3538
  %3796 = vst.msk [vmem:[%s3 + $0x168] sm:$0xf] %vm3705, %v3539
  %3797 = vst.msk [vmem:[%s3 + $0x16c] sm:$0xf] %vm3705, %v3540
  %3798 = vst.msk [vmem:[%s3 + $0x170] sm:$0xf] %vm3705, %v3541
  %3799 = vst.msk [vmem:[%s3 + $0x174] sm:$0xf] %vm3705, %v3542
  %3800 = vst.msk [vmem:[%s3 + $0x178] sm:$0xf] %vm3705, %v3543
  %3801 = vst.msk [vmem:[%s3 + $0x17c] sm:$0xf] %vm3705, %v3544
  %3802 = vst.msk [vmem:[%s3 + $0x180] sm:$0xf] %vm3705, %v3545
  %3803 = vst.msk [vmem:[%s3 + $0x184] sm:$0xf] %vm3705, %v3546
  %3804 = vst.msk [vmem:[%s3 + $0x188] sm:$0xf] %vm3705, %v3547
  %3805 = vst.msk [vmem:[%s3 + $0x18c] sm:$0xf] %vm3705, %v3548
  %3806 = vst.msk [vmem:[%s3 + $0x190] sm:$0xf] %vm3705, %v3549
  %3807 = vst.msk [vmem:[%s3 + $0x194] sm:$0xf] %vm3705, %v3550
  %3808 = vst.msk [vmem:[%s3 + $0x198] sm:$0xf] %vm3705, %v3551
  %3809 = vst.msk [vmem:[%s3 + $0x19c] sm:$0xf] %vm3705, %v3552
  %3810 = vst.msk [vmem:[%s3 + $0x1a0] sm:$0xf] %vm3705, %v3553
  %3811 = vst.msk [vmem:[%s3 + $0x1a4] sm:$0xf] %vm3705, %v3554
  %3812 = vst.msk [vmem:[%s3 + $0x1a8] sm:$0xf] %vm3705, %v3555
  %3813 = vst.msk [vmem:[%s3 + $0x1ac] sm:$0xf] %vm3705, %v3556
  %3814 = vst.msk [vmem:[%s3 + $0x1b0] sm:$0xf] %vm3705, %v3557
  %3815 = vst.msk [vmem:[%s3 + $0x1b4] sm:$0xf] %vm3705, %v3558
  %3816 = vst.msk [vmem:[%s3 + $0x1b8] sm:$0xf] %vm3705, %v3559
  %3817 = vst.msk [vmem:[%s3 + $0x1bc] sm:$0xf] %vm3705, %v3560
  %3818 = vst.msk [vmem:[%s3 + $0x1c0] sm:$0xf] %vm3705, %v3561
  %3819 = vst.msk [vmem:[%s3 + $0x1c4] sm:$0xf] %vm3705, %v3562
  %3820 = vst.msk [vmem:[%s3 + $0x1c8] sm:$0xf] %vm3705, %v3563
  %3821 = vst.msk [vmem:[%s3 + $0x1cc] sm:$0xf] %vm3705, %v3564
  %3822 = vst.msk [vmem:[%s3 + $0x1d0] sm:$0xf] %vm3705, %v3565
  %3823 = vst.msk [vmem:[%s3 + $0x1d4] sm:$0xf] %vm3705, %v3566
  %3824 = vst.msk [vmem:[%s3 + $0x1d8] sm:$0xf] %vm3705, %v3567
  %3825 = vst.msk [vmem:[%s3 + $0x1dc] sm:$0xf] %vm3705, %v3568
  %3826 = vst.msk [vmem:[%s3 + $0x1e0] sm:$0xf] %vm3705, %v3569
  %3827 = vst.msk [vmem:[%s3 + $0x1e4] sm:$0xf] %vm3705, %v3570
  %3828 = vst.msk [vmem:[%s3 + $0x1e8] sm:$0xf] %vm3705, %v3571
  %3829 = vst.msk [vmem:[%s3 + $0x1ec] sm:$0xf] %vm3705, %v3572
  %3830 = vst.msk [vmem:[%s3 + $0x1f0] sm:$0xf] %vm3705, %v3573
  %3831 = vst.msk [vmem:[%s3 + $0x1f4] sm:$0xf] %vm3705, %v3574
  %3832 = vst.msk [vmem:[%s3 + $0x1f8] sm:$0xf] %vm3705, %v3575
  %3833 = vst.msk [vmem:[%s3 + $0x1fc] sm:$0xf] %vm3705, %v3576
  %3834 = vst.msk [vmem:[%s3 + $0x200] sm:$0xf] %vm3705, %v3577
  %3835 = vst.msk [vmem:[%s3 + $0x204] sm:$0xf] %vm3705, %v3578
  %3836 = vst.msk [vmem:[%s3 + $0x208] sm:$0xf] %vm3705, %v3579
  %3837 = vst.msk [vmem:[%s3 + $0x20c] sm:$0xf] %vm3705, %v3580
  %3838 = vst.msk [vmem:[%s3 + $0x210] sm:$0xf] %vm3705, %v3581
  %3839 = vst.msk [vmem:[%s3 + $0x214] sm:$0xf] %vm3705, %v3582
  %3840 = vst.msk [vmem:[%s3 + $0x218] sm:$0xf] %vm3705, %v3583
  %3841 = vst.msk [vmem:[%s3 + $0x21c] sm:$0xf] %vm3705, %v3584
  %3842 = vst.msk [vmem:[%s3 + $0x220] sm:$0xf] %vm3705, %v3585
  %3843 = vst.msk [vmem:[%s3 + $0x224] sm:$0xf] %vm3705, %v3586
  %3844 = vst.msk [vmem:[%s3 + $0x228] sm:$0xf] %vm3705, %v3587
  %3845 = vst.msk [vmem:[%s3 + $0x22c] sm:$0xf] %vm3705, %v3588
  %3846 = vst.msk [vmem:[%s3 + $0x230] sm:$0xf] %vm3705, %v3589
  %3847 = vst.msk [vmem:[%s3 + $0x234] sm:$0xf] %vm3705, %v3590
  %3848 = vst.msk [vmem:[%s3 + $0x238] sm:$0xf] %vm3705, %v3591
  %3849 = vst.msk [vmem:[%s3 + $0x23c] sm:$0xf] %vm3705, %v3592
  %3850 = vst.msk [vmem:[%s3 + $0x240] sm:$0xf] %vm3705, %v3593
  %3851 = vst.msk [vmem:[%s3 + $0x244] sm:$0xf] %vm3705, %v3594
  %3852 = vst.msk [vmem:[%s3 + $0x248] sm:$0xf] %vm3705, %v3595
  %3853 = vst.msk [vmem:[%s3 + $0x24c] sm:$0xf] %vm3705, %v3596
  %3854 = vst.msk [vmem:[%s3 + $0x250] sm:$0xf] %vm3705, %v3597
  %3855 = vst.msk [vmem:[%s3 + $0x254] sm:$0xf] %vm3705, %v3598
  %3856 = vst.msk [vmem:[%s3 + $0x258] sm:$0xf] %vm3705, %v3599
  %3857 = vst.msk [vmem:[%s3 + $0x25c] sm:$0xf] %vm3705, %v3600
  %3858 = vst.msk [vmem:[%s3 + $0x260] sm:$0xf] %vm3705, %v3601
  %3859 = vst.msk [vmem:[%s3 + $0x264] sm:$0xf] %vm3705, %v3602
  %3860 = vst.msk [vmem:[%s3 + $0x268] sm:$0xf] %vm3705, %v3603
  %3861 = vst.msk [vmem:[%s3 + $0x26c] sm:$0xf] %vm3705, %v3604
  %3862 = vst.msk [vmem:[%s3 + $0x270] sm:$0xf] %vm3705, %v3605
  %3863 = vst.msk [vmem:[%s3 + $0x274] sm:$0xf] %vm3705, %v3606
  %3864 = vst.msk [vmem:[%s3 + $0x278] sm:$0xf] %vm3705, %v3607
  %3865 = vst.msk [vmem:[%s3 + $0x27c] sm:$0xf] %vm3705, %v3608
  %3866 = vst.msk [vmem:[%s3 + $0x280] sm:$0xf] %vm3705, %v3609
  %3867 = vst.msk [vmem:[%s3 + $0x284] sm:$0xf] %vm3705, %v3610
  %3868 = vst.msk [vmem:[%s3 + $0x288] sm:$0xf] %vm3705, %v3611
  %3869 = vst.msk [vmem:[%s3 + $0x28c] sm:$0xf] %vm3705, %v3612
  %3870 = vst.msk [vmem:[%s3 + $0x290] sm:$0xf] %vm3705, %v3613
  %3871 = vst.msk [vmem:[%s3 + $0x294] sm:$0xf] %vm3705, %v3614
  %3872 = vst.msk [vmem:[%s3 + $0x298] sm:$0xf] %vm3705, %v3615
  %3873 = vst.msk [vmem:[%s3 + $0x29c] sm:$0xf] %vm3705, %v3616
  %3874 = vst.msk [vmem:[%s3 + $0x2a0] sm:$0xf] %vm3705, %v3617
  %3875 = vst.msk [vmem:[%s3 + $0x2a4] sm:$0xf] %vm3705, %v3618
  %3876 = vst.msk [vmem:[%s3 + $0x2a8] sm:$0xf] %vm3705, %v3619
  %3877 = vst.msk [vmem:[%s3 + $0x2ac] sm:$0xf] %vm3705, %v3620
  %3878 = vst.msk [vmem:[%s3 + $0x2b0] sm:$0xf] %vm3705, %v3621
  %3879 = vst.msk [vmem:[%s3 + $0x2b4] sm:$0xf] %vm3705, %v3622
  %3880 = vst.msk [vmem:[%s3 + $0x2b8] sm:$0xf] %vm3705, %v3623
  %3881 = vst.msk [vmem:[%s3 + $0x2bc] sm:$0xf] %vm3705, %v3624
  %3882 = vst.msk [vmem:[%s3 + $0x2c0] sm:$0xf] %vm3705, %v3625
  %3883 = vst.msk [vmem:[%s3 + $0x2c4] sm:$0xf] %vm3705, %v3626
  %3884 = vst.msk [vmem:[%s3 + $0x2c8] sm:$0xf] %vm3705, %v3627
  %3885 = vst.msk [vmem:[%s3 + $0x2cc] sm:$0xf] %vm3705, %v3628
  %3886 = vst.msk [vmem:[%s3 + $0x2d0] sm:$0xf] %vm3705, %v3629
  %3887 = vst.msk [vmem:[%s3 + $0x2d4] sm:$0xf] %vm3705, %v3630
  %3888 = vst.msk [vmem:[%s3 + $0x2d8] sm:$0xf] %vm3705, %v3631
  %3889 = vst.msk [vmem:[%s3 + $0x2dc] sm:$0xf] %vm3705, %v3632
  %3890 = vst.msk [vmem:[%s3 + $0x2e0] sm:$0xf] %vm3705, %v3633
  %3891 = vst.msk [vmem:[%s3 + $0x2e4] sm:$0xf] %vm3705, %v3634
  %3892 = vst.msk [vmem:[%s3 + $0x2e8] sm:$0xf] %vm3705, %v3635
  %3893 = vst.msk [vmem:[%s3 + $0x2ec] sm:$0xf] %vm3705, %v3636
  %3894 = vst.msk [vmem:[%s3 + $0x2f0] sm:$0xf] %vm3705, %v3637
  %3895 = vst.msk [vmem:[%s3 + $0x2f4] sm:$0xf] %vm3705, %v3638
  %3896 = vst.msk [vmem:[%s3 + $0x2f8] sm:$0xf] %vm3705, %v3639
  %3897 = vst.msk [vmem:[%s3 + $0x2fc] sm:$0xf] %vm3705, %v3640
  %3898 = vst.msk [vmem:[%s3 + $0x300] sm:$0xf] %vm3705, %v3641
  %3899 = vst.msk [vmem:[%s3 + $0x304] sm:$0xf] %vm3705, %v3642
  %3900 = vst.msk [vmem:[%s3 + $0x308] sm:$0xf] %vm3705, %v3643
  %3901 = vst.msk [vmem:[%s3 + $0x30c] sm:$0xf] %vm3705, %v3644
  %3902 = vst.msk [vmem:[%s3 + $0x310] sm:$0xf] %vm3705, %v3645
  %3903 = vst.msk [vmem:[%s3 + $0x314] sm:$0xf] %vm3705, %v3646
  %3904 = vst.msk [vmem:[%s3 + $0x318] sm:$0xf] %vm3705, %v3647
  %3905 = vst.msk [vmem:[%s3 + $0x31c] sm:$0xf] %vm3705, %v3648
  %3906 = vst.msk [vmem:[%s3 + $0x320] sm:$0xf] %vm3705, %v3649
  %3907 = vst.msk [vmem:[%s3 + $0x324] sm:$0xf] %vm3705, %v3650
  %3908 = vst.msk [vmem:[%s3 + $0x328] sm:$0xf] %vm3705, %v3651
  %3909 = vst.msk [vmem:[%s3 + $0x32c] sm:$0xf] %vm3705, %v3652
  %3910 = vst.msk [vmem:[%s3 + $0x330] sm:$0xf] %vm3705, %v3653
  %3911 = vst.msk [vmem:[%s3 + $0x334] sm:$0xf] %vm3705, %v3654
  %3912 = vst.msk [vmem:[%s3 + $0x338] sm:$0xf] %vm3705, %v3655
  %3913 = vst.msk [vmem:[%s3 + $0x33c] sm:$0xf] %vm3705, %v3656
  %3914 = vst.msk [vmem:[%s3 + $0x340] sm:$0xf] %vm3705, %v3657
  %3915 = vst.msk [vmem:[%s3 + $0x344] sm:$0xf] %vm3705, %v3658
  %3916 = vst.msk [vmem:[%s3 + $0x348] sm:$0xf] %vm3705, %v3659
  %3917 = vst.msk [vmem:[%s3 + $0x34c] sm:$0xf] %vm3705, %v3660
  %3918 = vst.msk [vmem:[%s3 + $0x350] sm:$0xf] %vm3705, %v3661
  %3919 = vst.msk [vmem:[%s3 + $0x354] sm:$0xf] %vm3705, %v3662
  %3920 = vst.msk [vmem:[%s3 + $0x358] sm:$0xf] %vm3705, %v3663
  %3921 = vst.msk [vmem:[%s3 + $0x35c] sm:$0xf] %vm3705, %v3664
  %3922 = vst.msk [vmem:[%s3 + $0x360] sm:$0xf] %vm3705, %v3665
  %3923 = vst.msk [vmem:[%s3 + $0x364] sm:$0xf] %vm3705, %v3666
  %3924 = vst.msk [vmem:[%s3 + $0x368] sm:$0xf] %vm3705, %v3667
  %3925 = vst.msk [vmem:[%s3 + $0x36c] sm:$0xf] %vm3705, %v3668
  %3926 = vst.msk [vmem:[%s3 + $0x370] sm:$0xf] %vm3705, %v3669
  %3927 = vst.msk [vmem:[%s3 + $0x374] sm:$0xf] %vm3705, %v3670
  %3928 = vst.msk [vmem:[%s3 + $0x378] sm:$0xf] %vm3705, %v3671
  %3929 = vst.msk [vmem:[%s3 + $0x37c] sm:$0xf] %vm3705, %v3672
  %3930 = vst.msk [vmem:[%s3 + $0x380] sm:$0xf] %vm3705, %v3673
  %3931 = vst.msk [vmem:[%s3 + $0x384] sm:$0xf] %vm3705, %v3674
  %3932 = vst.msk [vmem:[%s3 + $0x388] sm:$0xf] %vm3705, %v3675
  %3933 = vst.msk [vmem:[%s3 + $0x38c] sm:$0xf] %vm3705, %v3676
  %3934 = vst.msk [vmem:[%s3 + $0x390] sm:$0xf] %vm3705, %v3677
  %3935 = vst.msk [vmem:[%s3 + $0x394] sm:$0xf] %vm3705, %v3678
  %3936 = vst.msk [vmem:[%s3 + $0x398] sm:$0xf] %vm3705, %v3679
  %3937 = vst.msk [vmem:[%s3 + $0x39c] sm:$0xf] %vm3705, %v3680
  %3938 = vst.msk [vmem:[%s3 + $0x3a0] sm:$0xf] %vm3705, %v3681
  %3939 = vst.msk [vmem:[%s3 + $0x3a4] sm:$0xf] %vm3705, %v3682
  %3940 = vst.msk [vmem:[%s3 + $0x3a8] sm:$0xf] %vm3705, %v3683
  %3941 = vst.msk [vmem:[%s3 + $0x3ac] sm:$0xf] %vm3705, %v3684
  %3942 = vst.msk [vmem:[%s3 + $0x3b0] sm:$0xf] %vm3705, %v3685
  %3943 = vst.msk [vmem:[%s3 + $0x3b4] sm:$0xf] %vm3705, %v3686
  %3944 = vst.msk [vmem:[%s3 + $0x3b8] sm:$0xf] %vm3705, %v3687
  %3945 = vst.msk [vmem:[%s3 + $0x3bc] sm:$0xf] %vm3705, %v3688
  %3946 = vst.msk [vmem:[%s3 + $0x3c0] sm:$0xf] %vm3705, %v3689
  %3947 = vst.msk [vmem:[%s3 + $0x3c4] sm:$0xf] %vm3705, %v3690
  %3948 = vst.msk [vmem:[%s3 + $0x3c8] sm:$0xf] %vm3705, %v3691
  %3949 = vst.msk [vmem:[%s3 + $0x3cc] sm:$0xf] %vm3705, %v3692
  %3950 = vst.msk [vmem:[%s3 + $0x3d0] sm:$0xf] %vm3705, %v3693
  %3951 = vst.msk [vmem:[%s3 + $0x3d4] sm:$0xf] %vm3705, %v3694
  %3952 = vst.msk [vmem:[%s3 + $0x3d8] sm:$0xf] %vm3705, %v3695
  %3953 = vst.msk [vmem:[%s3 + $0x3dc] sm:$0xf] %vm3705, %v3696
  %3954 = vst.msk [vmem:[%s3 + $0x3e0] sm:$0xf] %vm3705, %v3697
  %3955 = vst.msk [vmem:[%s3 + $0x3e4] sm:$0xf] %vm3705, %v3698
  %3956 = vst.msk [vmem:[%s3 + $0x3e8] sm:$0xf] %vm3705, %v3699
  %3957 = vst.msk [vmem:[%s3 + $0x3ec] sm:$0xf] %vm3705, %v3700
  %3958 = vst.msk [vmem:[%s3 + $0x3f0] sm:$0xf] %vm3705, %v3701
  %3959 = vst.msk [vmem:[%s3 + $0x3f4] sm:$0xf] %vm3705, %v3702
  %3960 = vst.msk [vmem:[%s3 + $0x3f8] sm:$0xf] %vm3705, %v3703
  %3961 = vst.msk [vmem:[%s3 + $0x3fc] sm:$0xf] %vm3705, %v3704
  // Predicated region
  $region14: #{_stem_and_pool.1} parent=0 // pred_check
    _
  $region15: #{_stem_and_pool.1} parent=0 // pred_check_branch
    %3963 = sbr.rel (0) target = $region17
  $region16: #{_stem_and_pool.1} parent=0 // pred_region
    _
  $region17: #{_stem_and_pool.1} parent=0 // pred_fallthru
    _
  // Predicated region
  $region18: #{_stem_and_pool.1} parent=0 // pred_check
    _
  $region19: #{_stem_and_pool.1} parent=0 // pred_check_branch
    %3965 = sbr.rel (0) target = $region21
  $region20: #{_stem_and_pool.1} parent=0 // pred_region
    _
  $region21: #{_stem_and_pool.1} parent=0 // pred_fallthru
    _

</llo_original>
